<compile_context>
chip_gen: v6e
topology: v6e:2x2x1
jax: 0.10.0
libtpu: 0.0.40
codegen_flags: <defaults>
</compile_context>

<pallas_src>
import functools
import math

import jax
import jax.numpy as jnp
from jax.experimental import pallas as pl
from jax.experimental.pallas import tpu as pltpu

# ---------------- small, module-consistent shapes ----------------
B = 2          # batch
NP = 32        # number of points Np
LT = 8         # text sequence length Lt
D = 48         # hidden dim (divisible by both head counts)
H_SQI = 12     # heads in SpatialQuestionIntegrator (module num_heads=12)
H_FUS = 8      # heads in SpatialAwareVisualFusion (hard-coded 8)
NC = 7         # number of visual components
H1 = (D + 3) // 2
EPS = 1e-5

VISUAL_COMPONENT_NAMES = ['Z_V_unique', 'Z_P_unique', 'Z_TV_synergy',
                          'Z_PV_synergy', 'Z_PT_synergy', 'Z_redundant', 'Z_higher']

_PACKED_ORDER = ('mats', 'wkv', 'wqkv', 'w1d', 'w1p', 'w2',
                 'vecd', 'bkv', 'bqkv', 'vech1', 'vecnc', 'mask_s', 'mask_f')


# ---------------- shared math ----------------
def _layernorm(x, g, b):
    mu = jnp.mean(x, axis=-1, keepdims=True)
    var = jnp.mean((x - mu) ** 2, axis=-1, keepdims=True)
    return (x - mu) * jax.lax.rsqrt(var + EPS) * g + b


def _gelu_exact(x):
    # nn.GELU default = exact erf formulation
    return 0.5 * x * (1.0 + jax.lax.erf(x / math.sqrt(2.0)))


# ---------------- fused Pallas kernel ----------------
def _make_kernel(bb):
    """Kernel processing `bb` batch elements per grid step (bb is a trace-time const)."""
    rows = bb * NP
    trows = bb * LT
    f32 = jnp.float32

    def kernel(z_ref, t_ref, pos_ref, comps_ref,
               mats_ref, wkv_ref, wqkv_ref, w1d_ref, w1p_ref, w2_ref,
               vecd_ref, bkv_ref, bqkv_ref, vech1_ref, vecnc_ref,
               mask_s_ref, mask_f_ref,
               out_ref, w_out_ref):

        def vd(i):  return vecd_ref[i:i + 1, :]      # [1, D]
        def vh(i):  return vech1_ref[i:i + 1, :]     # [1, H1]
        def vn(i):  return vecnc_ref[i:i + 1, :]     # [1, NC]
        def mat(i): return mats_ref[i]               # [D, D]

        def mha(q_all, k_all, v_all, n_q, n_k, num_heads, mask_ref, wo_i, bo_i):
            """Multi-head attention over bb folded batch elements.

            Per batch element only 4 well-shaped matmuls (no per-head loop):
              K_e = repeat_rows(k) * mask,  S = q @ K_e^T      (K_e dies here)
              den = exp(S) @ mask,          num = exp(S) @ V_e
            The host-built mask[h*n_k + j, d] selects head h's feature columns, so the
            per-head softmax normalization falls out of a single mask matmul.
            """
            scale = 1.0 / math.sqrt(D // num_heads)
            outs = []
            for b in range(bb):
                q = q_all[b * n_q:(b + 1) * n_q]                        # [n_q, D]
                k = k_all[b * n_k:(b + 1) * n_k]                        # [n_k, D]
                v = v_all[b * n_k:(b + 1) * n_k]
                mask = mask_ref[...]                                    # [H*n_k, D] (VMEM)
                ke = jnp.concatenate([k] * num_heads, axis=0) * mask    # [H*n_k, D]
                s = jnp.einsum('nd,md->nm', q, ke,
                               preferred_element_type=f32) * scale      # [n_q, H*n_k]
                s = s - jnp.max(s, axis=-1, keepdims=True)
                e = jnp.exp(s)                                          # K_e dead here
                den = jnp.dot(e, mask, preferred_element_type=f32)      # per-head sums
                ve = jnp.concatenate([v] * num_heads, axis=0) * mask    # built after K_e dies
                num = jnp.dot(e, ve, preferred_element_type=f32)        # [n_q, D]
                inv = pl.reciprocal(jnp.maximum(den, 1e-30), approx=True)  # clamp: no inf/NaN
                outs.append(num * inv)
            o = outs[0] if bb == 1 else jnp.concatenate(outs, axis=0)   # [bb*n_q, D]
            return jnp.dot(o, mat(wo_i), preferred_element_type=f32) + vd(bo_i)

        # ---------------- SpatialQuestionIntegrator ----------------
        z = z_ref[...].reshape(rows, D)
        t = t_ref[...].reshape(trows, D)
        qz = jnp.dot(z, mat(0), preferred_element_type=f32) + vd(0)
        # fused K/V projection: one lane-dense [D,2D] matmul, split with static lane slices
        kv = jnp.dot(t, wkv_ref[...], preferred_element_type=f32) + bkv_ref[...]   # [trows, 2D]
        kt = kv[:, :D]
        vt = kv[:, D:]
        attn = mha(qz, kt, vt, NP, LT, H_SQI, mask_s_ref, 1, 1)
        qc = z + attn                                  # mmcv MultiheadAttention residual
        gate_pre = (jnp.dot(z, mat(2), preferred_element_type=f32)
                    + jnp.dot(qc, mat(3), preferred_element_type=f32) + vd(2))
        gate = jax.nn.sigmoid(_layernorm(gate_pre, vd(3), vd(4)))
        qas = _layernorm(z + gate * qc, vd(5), vd(6))  # [rows, D]

        # ---------------- SpatialAwareVisualFusion ----------------
        pos = pos_ref[...].reshape(rows, 3)
        h = (jnp.dot(qas, w1d_ref[...], preferred_element_type=f32)
             + jnp.dot(pos, w1p_ref[...], preferred_element_type=f32) + vh(0))
        h = _gelu_exact(_layernorm(h, vh(1), vh(2)))   # Dropout is a no-op in eval
        logits = _layernorm(jnp.dot(h, w2_ref[...], preferred_element_type=f32) + vn(0),
                            vn(1), vn(2))
        logits = logits - jnp.max(logits, axis=-1, keepdims=True)
        ew = jnp.exp(logits)
        w = ew / jnp.sum(ew, axis=-1, keepdims=True)   # [rows, NC]; exact divide keeps
        w_out_ref[...] = w.reshape(bb, NP, NC)         # the returned weights bit-tight

        # fused[r, d] = sum_c w[r, c] * comp_c[r, d]
        # 7 broadcast-multiply-accumulates in the abundant VPU slack; one component is
        # resident at a time (comps laid out [NC, bb, Np, D] on the host).
        fused = w[:, 0:1] * comps_ref[0].reshape(rows, D)
        for c in range(1, NC):
            fused = fused + w[:, c:c + 1] * comps_ref[c].reshape(rows, D)

        # fused Q/K/V projection: one lane-dense [D,3D] matmul, static lane splits
        qkv = jnp.dot(fused, wqkv_ref[...], preferred_element_type=f32) + bqkv_ref[...]
        qf = qkv[:, :D]
        kf = qkv[:, D:2 * D]
        vf = qkv[:, 2 * D:]
        attn2 = mha(qf, kf, vf, NP, NP, H_FUS, mask_f_ref, 4, 7)
        out_ref[...] = _layernorm(attn2 + fused, vd(8), vd(9)).reshape(bb, NP, D)

    return kernel


# ---------------- pallas_call wrapper ----------------
def _const_spec(shape):
    n = len(shape)
    return pl.BlockSpec(shape, lambda b, _n=n: (0,) * _n)


def default_batch_block():
    """Fold the whole batch into one grid step on every generation.  The v7x two-core
    split (bb=1, grid=(2,)) only wins if per-core compute exceeds the per-core
    prologue/DMA + ~0.35us/step fixed cost, which an xprof trace must confirm — so
    default to the fold and keep batch_block as the measurement knob."""
    return B


@functools.partial(jax.jit, static_argnames=('batch_block',))
def pid_grounded_reasoning_forward(z_t_unique, text_feats, comps_stack, fp_xyz,
                                   packed, *, batch_block):
    """Full PIDGroundedReasoningModule.forward -> (full_visual_feat, component_weights)."""
    bb = batch_block
    assert B % bb == 0
    bmap3 = lambda b: (b, 0, 0)

    in_specs = ([pl.BlockSpec((bb, NP, D), bmap3),
                 pl.BlockSpec((bb, LT, D), bmap3),
                 pl.BlockSpec((bb, NP, 3), bmap3),
                 pl.BlockSpec((NC, bb, NP, D), lambda b: (0, b, 0, 0))]
                + [_const_spec(packed[k].shape) for k in _PACKED_ORDER])
    out_specs = [pl.BlockSpec((bb, NP, D), bmap3),
                 pl.BlockSpec((bb, NP, NC), bmap3)]

    return pl.pallas_call(
        _make_kernel(bb),
        out_shape=(jax.ShapeDtypeStruct((B, NP, D), jnp.float32),
                   jax.ShapeDtypeStruct((B, NP, NC), jnp.float32)),
        grid_spec=pltpu.PrefetchScalarGridSpec(
            num_scalar_prefetch=0, grid=(B // bb,),
            in_specs=in_specs, out_specs=out_specs),
        compiler_params=pltpu.CompilerParams(dimension_semantics=("parallel",)),
    )(z_t_unique, text_feats, fp_xyz, comps_stack,
      *[packed[k] for k in _PACKED_ORDER])


# ---------------- host-side parameter packing (layout plumbing, done once) ----------------
def pack_params(p):
    """Transpose / split / stack the PyTorch-layout params and precompute the constant
    head-selection masks so the kernel never builds constants on its critical path."""
    T = jnp.transpose   # [out, in] -> [in, out] so the kernel computes x @ W

    mats = jnp.stack([
        T(p['sqi_ipw'][:D]),           # 0: SQI W_q^T
        T(p['sqi_opw']),               # 1: SQI W_o^T
        T(p['sqi_gw'][:, :D]),         # 2: SQI gate (z part)^T
        T(p['sqi_gw'][:, D:]),         # 3: SQI gate (qc part)^T
        T(p['fus_opw']),               # 4: fusion W_o^T
    ], axis=0)                                                   # [5, D, D]

    wkv = T(p['sqi_ipw'][D:])          # [D, 2D]  (K cols 0..D-1, V cols D..2D-1)
    bkv = p['sqi_ipb'][:, D:]          # [1, 2D]
    wqkv = T(p['fus_ipw'])             # [D, 3D]  (Q | K | V column blocks)
    bqkv = p['fus_ipb']                # [1, 3D]

    vecd = jnp.stack([
        p['sqi_ipb'][0, :D],           # 0: SQI q bias
        p['sqi_opb'][0],               # 1: SQI out-proj bias
        p['sqi_gb'][0],                # 2: SQI gate bias
        p['sqi_glng'][0], p['sqi_glnb'][0],   # 3,4: SQI gate LN
        p['sqi_ng'][0],   p['sqi_nb'][0],     # 5,6: SQI final LN
        p['fus_opb'][0],               # 7: fusion out-proj bias
        p['fus_fng'][0],  p['fus_fnb'][0],    # 8,9: fusion final LN
    ], axis=0)                                                   # [10, D]

    vech1 = jnp.stack([p['fus_b1'][0], p['fus_ln1g'][0], p['fus_ln1b'][0]], axis=0)
    vecnc = jnp.stack([p['fus_b2'][0], p['fus_ln2g'][0], p['fus_ln2b'][0]], axis=0)

    def head_mask(num_heads, lk):
        # mask[h*lk + j, d] = 1 iff feature column d belongs to head h
        hd = D // num_heads
        r = jnp.arange(num_heads * lk)[:, None] // lk
        c = jnp.arange(D)[None, :] // hd
        return (r == c).astype(jnp.float32)

    return dict(mats=mats, wkv=wkv, wqkv=wqkv,
                w1d=T(p['fus_w1d']), w1p=T(p['fus_w1p']), w2=T(p['fus_w2']),
                vecd=vecd, bkv=bkv, bqkv=bqkv, vech1=vech1, vecnc=vecnc,
                mask_s=head_mask(H_SQI, LT), mask_f=head_mask(H_FUS, NP))


# ---------------- deterministic parameter init (PyTorch layout, feeds both paths) ---------
def init_params(key):
    keys = iter(jax.random.split(key, 16))

    def w(shape, scale=0.02):
        return (scale * jax.random.normal(next(keys), shape)).astype(jnp.float32)

    zeros = lambda s: jnp.zeros(s, jnp.float32)
    ones = lambda s: jnp.ones(s, jnp.float32)

    return {
        # SpatialQuestionIntegrator
        'sqi_ipw': w((3 * D, D)), 'sqi_ipb': zeros((1, 3 * D)),
        'sqi_opw': w((D, D)),     'sqi_opb': zeros((1, D)),
        'sqi_gw':  w((D, 2 * D)), 'sqi_gb':  zeros((1, D)),
        'sqi_glng': ones((1, D)), 'sqi_glnb': zeros((1, D)),
        'sqi_ng':   ones((1, D)), 'sqi_nb':   zeros((1, D)),
        # SpatialAwareVisualFusion
        'fus_w1d': w((H1, D)), 'fus_w1p': w((H1, 3)), 'fus_b1': zeros((1, H1)),
        'fus_ln1g': ones((1, H1)), 'fus_ln1b': zeros((1, H1)),
        'fus_w2': w((NC, H1)), 'fus_b2': zeros((1, NC)),
        'fus_ln2g': ones((1, NC)), 'fus_ln2b': zeros((1, NC)),
        'fus_ipw': w((3 * D, D)), 'fus_ipb': zeros((1, 3 * D)),
        'fus_opw': w((D, D)),     'fus_opb': zeros((1, D)),
        'fus_fng': ones((1, D)),  'fus_fnb': zeros((1, D)),
    }


# ---------------- plain-JAX reference (independent per-head implementation) ----------------
def _mha_ref(q_in, kv_in, ipw, ipb, opw, opb, num_heads):
    d = q_in.shape[-1]
    hd = d // num_heads
    q = q_in @ ipw[:d].T + ipb[:, :d]
    k = kv_in @ ipw[d:2 * d].T + ipb[:, d:2 * d]
    v = kv_in @ ipw[2 * d:].T + ipb[:, 2 * d:]
    scale = 1.0 / math.sqrt(hd)
    out = jnp.zeros((q_in.shape[0], d), jnp.float32)
    for h in range(num_heads):
        sl = slice(h * hd, (h + 1) * hd)
        s = (q[:, sl] @ k[:, sl].T) * scale
        s = s - jnp.max(s, axis=-1, keepdims=True)
        p = jnp.exp(s)
        p = p / jnp.sum(p, axis=-1, keepdims=True)
        out = out + (p @ v[:, sl]) @ opw[:, sl].T
    return out + opb


def _sqi_ref_one(z, t, p):
    attn = _mha_ref(z, t, p['sqi_ipw'], p['sqi_ipb'], p['sqi_opw'], p['sqi_opb'], H_SQI)
    qc = z + attn
    gw = p['sqi_gw']
    gate_pre = z @ gw[:, :D].T + qc @ gw[:, D:].T + p['sqi_gb']
    gate = jax.nn.sigmoid(_layernorm(gate_pre, p['sqi_glng'], p['sqi_glnb']))
    return _layernorm(z + gate * qc, p['sqi_ng'], p['sqi_nb'])


def _fusion_ref_one(qas, pos, comps, p):
    h = qas @ p['fus_w1d'].T + pos @ p['fus_w1p'].T + p['fus_b1']
    h = _gelu_exact(_layernorm(h, p['fus_ln1g'], p['fus_ln1b']))
    logits = _layernorm(h @ p['fus_w2'].T + p['fus_b2'], p['fus_ln2g'], p['fus_ln2b'])
    w = jax.nn.softmax(logits, axis=-1)
    fused = jnp.einsum('cnd,nc->nd', comps, w)
    attn = _mha_ref(fused, fused, p['fus_ipw'], p['fus_ipb'], p['fus_opw'], p['fus_opb'], H_FUS)
    return _layernorm(attn + fused, p['fus_fng'], p['fus_fnb']), w


def reference_forward(z, t, comps, pos, params):
    qas = jax.vmap(_sqi_ref_one, in_axes=(0, 0, None))(z, t, params)
    return jax.vmap(_fusion_ref_one, in_axes=(0, 0, 0, None))(qas, pos, comps, params)


# ---------------- main ----------------
if __name__ == "__main__":
    root = jax.random.PRNGKey(0)
    k_inputs, k_params = jax.random.split(root)
    ks = jax.random.split(k_inputs, NC + 3)

    # feat_dict['component_dict'] : all PID components present, [B, Np, D] each
    component_dict = {name: jax.random.normal(ks[i], (B, NP, D), jnp.float32)
                      for i, name in enumerate(VISUAL_COMPONENT_NAMES)}
    component_dict['Z_T_unique'] = jax.random.normal(ks[NC], (B, NP, D), jnp.float32)
    fp_xyz = jax.random.normal(ks[NC + 1], (B, NP, 3), jnp.float32)       # fp_xyz[-1]
    text_feats = jax.random.normal(ks[NC + 2], (B, LT, D), jnp.float32)   # text_dict['text_feats']
    # text_token_mask / text_global_token are fetched but unused by this forward.

    params = init_params(k_params)
    packed = pack_params(params)

    # kernel layout: visual components stacked leading -> [NC, B, Np, D] (MAC-form fusion)
    comps_stack = jnp.stack([component_dict[n] for n in VISUAL_COMPONENT_NAMES], axis=0)

    bb = default_batch_block()
    fused, weights = pid_grounded_reasoning_forward(
        component_dict['Z_T_unique'], text_feats, comps_stack, fp_xyz, packed,
        batch_block=bb)
    jax.block_until_ready((fused, weights))

    # reference uses the module's [B, NC, Np, D] stacking
    comps_ref = jnp.stack([component_dict[n] for n in VISUAL_COMPONENT_NAMES], axis=1)
    fused_ref, weights_ref = reference_forward(
        component_dict['Z_T_unique'], text_feats, comps_ref, fp_xyz, params)

    assert fused.shape == (B, NP, D) and weights.shape == (B, NP, NC)
    assert float(jnp.max(jnp.abs(fused - fused_ref))) < 1e-3
    assert float(jnp.max(jnp.abs(weights - weights_ref))) < 1e-3

    print("KERNEL_OK")
</pallas_src>

<mosaic_0001>
module attributes {stable_mosaic.version = 11 : i64} {
  func.func @kernel(%arg0: i32, %arg1: memref<2x32x48xf32, #tpu.memory_space<vmem>>, %arg2: memref<2x8x48xf32, #tpu.memory_space<vmem>>, %arg3: memref<2x32x3xf32, #tpu.memory_space<vmem>>, %arg4: memref<7x2x32x48xf32, #tpu.memory_space<vmem>>, %arg5: memref<5x48x48xf32, #tpu.memory_space<vmem>>, %arg6: memref<48x96xf32, #tpu.memory_space<vmem>>, %arg7: memref<48x144xf32, #tpu.memory_space<vmem>>, %arg8: memref<48x25xf32, #tpu.memory_space<vmem>>, %arg9: memref<3x25xf32, #tpu.memory_space<vmem>>, %arg10: memref<25x7xf32, #tpu.memory_space<vmem>>, %arg11: memref<10x48xf32, #tpu.memory_space<vmem>>, %arg12: memref<1x96xf32, #tpu.memory_space<vmem>>, %arg13: memref<1x144xf32, #tpu.memory_space<vmem>>, %arg14: memref<3x25xf32, #tpu.memory_space<vmem>>, %arg15: memref<3x7xf32, #tpu.memory_space<vmem>>, %arg16: memref<96x48xf32, #tpu.memory_space<vmem>>, %arg17: memref<256x48xf32, #tpu.memory_space<vmem>>, %arg18: memref<2x32x48xf32, #tpu.memory_space<vmem>>, %arg19: memref<2x32x7xf32, #tpu.memory_space<vmem>>) attributes {dimension_semantics = [#tpu.dimension_semantics<parallel>], iteration_bounds = array<i64: 1>, scalar_prefetch = 0 : i64, scratch_operands = 0 : i64, tpu.core_type = #tpu.core_type<tc>, window_params = [{transform_indices = @transform_0, window_bounds = array<i64: 2, 32, 48>}, {transform_indices = @transform_1, window_bounds = array<i64: 2, 8, 48>}, {transform_indices = @transform_2, window_bounds = array<i64: 2, 32, 3>}, {transform_indices = @transform_3, window_bounds = array<i64: 7, 2, 32, 48>}, {pipeline_mode = #tpu.pipeline_mode<synchronous>, transform_indices = @transform_4, window_bounds = array<i64: 5, 48, 48>}, {pipeline_mode = #tpu.pipeline_mode<synchronous>, transform_indices = @transform_5, window_bounds = array<i64: 48, 96>}, {pipeline_mode = #tpu.pipeline_mode<synchronous>, transform_indices = @transform_6, window_bounds = array<i64: 48, 144>}, {pipeline_mode = #tpu.pipeline_mode<synchronous>, transform_indices = @transform_7, window_bounds = array<i64: 48, 25>}, {pipeline_mode = #tpu.pipeline_mode<synchronous>, transform_indices = @transform_8, window_bounds = array<i64: 3, 25>}, {pipeline_mode = #tpu.pipeline_mode<synchronous>, transform_indices = @transform_9, window_bounds = array<i64: 25, 7>}, {pipeline_mode = #tpu.pipeline_mode<synchronous>, transform_indices = @transform_10, window_bounds = array<i64: 10, 48>}, {pipeline_mode = #tpu.pipeline_mode<synchronous>, transform_indices = @transform_11, window_bounds = array<i64: 1, 96>}, {pipeline_mode = #tpu.pipeline_mode<synchronous>, transform_indices = @transform_12, window_bounds = array<i64: 1, 144>}, {pipeline_mode = #tpu.pipeline_mode<synchronous>, transform_indices = @transform_13, window_bounds = array<i64: 3, 25>}, {pipeline_mode = #tpu.pipeline_mode<synchronous>, transform_indices = @transform_14, window_bounds = array<i64: 3, 7>}, {pipeline_mode = #tpu.pipeline_mode<synchronous>, transform_indices = @transform_15, window_bounds = array<i64: 96, 48>}, {pipeline_mode = #tpu.pipeline_mode<synchronous>, transform_indices = @transform_16, window_bounds = array<i64: 256, 48>}, {transform_indices = @transform_17, window_bounds = array<i64: 2, 32, 48>}, {transform_indices = @transform_18, window_bounds = array<i64: 2, 32, 7>}]} {
    %c0 = arith.constant 0 : index
    %c0_0 = arith.constant 0 : index
    %c0_1 = arith.constant 0 : index
    %0 = vector.load %arg1[%c0, %c0_0, %c0_1] : memref<2x32x48xf32, #tpu.memory_space<vmem>>, vector<2x32x48xf32>
    %1 = vector.shape_cast %0 : vector<2x32x48xf32> to vector<64x48xf32>
    %c0_2 = arith.constant 0 : index
    %c0_3 = arith.constant 0 : index
    %c0_4 = arith.constant 0 : index
    %2 = vector.load %arg2[%c0_2, %c0_3, %c0_4] : memref<2x8x48xf32, #tpu.memory_space<vmem>>, vector<2x8x48xf32>
    %3 = vector.shape_cast %2 : vector<2x8x48xf32> to vector<16x48xf32>
    %c0_5 = arith.constant 0 : index
    %c0_6 = arith.constant 0 : index
    %c0_7 = arith.constant 0 : index
    %4 = vector.load %arg5[%c0_5, %c0_6, %c0_7] : memref<5x48x48xf32, #tpu.memory_space<vmem>>, vector<1x48x48xf32>
    %5 = vector.shape_cast %4 : vector<1x48x48xf32> to vector<48x48xf32>
    %cst = arith.constant dense<0.000000e+00> : vector<64x48xf32>
    %6 = tpu.matmul %1, %5, %cst {dimension_numbers = #tpu.dot_dimension_numbers<[1], [0], [0], [1], [0, 0, 1, 1], [], []>} : vector<64x48xf32>, vector<48x48xf32>, vector<64x48xf32> -> vector<64x48xf32>
    %c0_8 = arith.constant 0 : index
    %c0_9 = arith.constant 0 : index
    %7 = vector.load %arg11[%c0_8, %c0_9] : memref<10x48xf32, #tpu.memory_space<vmem>>, vector<1x48xf32>
    %8 = vector.broadcast %7 : vector<1x48xf32> to vector<64x48xf32>
    %9 = arith.addf %6, %8 : vector<64x48xf32>
    %c0_10 = arith.constant 0 : index
    %c0_11 = arith.constant 0 : index
    %10 = vector.load %arg6[%c0_10, %c0_11] : memref<48x96xf32, #tpu.memory_space<vmem>>, vector<48x96xf32>
    %cst_12 = arith.constant dense<0.000000e+00> : vector<16x96xf32>
    %11 = tpu.matmul %3, %10, %cst_12 {dimension_numbers = #tpu.dot_dimension_numbers<[1], [0], [0], [1], [0, 0, 1, 1], [], []>} : vector<16x48xf32>, vector<48x96xf32>, vector<16x96xf32> -> vector<16x96xf32>
    %c0_13 = arith.constant 0 : index
    %c0_14 = arith.constant 0 : index
    %12 = vector.load %arg12[%c0_13, %c0_14] : memref<1x96xf32, #tpu.memory_space<vmem>>, vector<1x96xf32>
    %13 = vector.broadcast %12 : vector<1x96xf32> to vector<16x96xf32>
    %14 = arith.addf %11, %13 : vector<16x96xf32>
    %15 = vector.extract_strided_slice %14 {offsets = [0, 0], sizes = [16, 48], strides = [1, 1]} : vector<16x96xf32> to vector<16x48xf32>
    %16 = vector.extract_strided_slice %14 {offsets = [0, 48], sizes = [16, 48], strides = [1, 1]} : vector<16x96xf32> to vector<16x48xf32>
    %17 = vector.extract_strided_slice %9 {offsets = [0, 0], sizes = [32, 48], strides = [1, 1]} : vector<64x48xf32> to vector<32x48xf32>
    %18 = vector.extract_strided_slice %15 {offsets = [0, 0], sizes = [8, 48], strides = [1, 1]} : vector<16x48xf32> to vector<8x48xf32>
    %19 = vector.extract_strided_slice %16 {offsets = [0, 0], sizes = [8, 48], strides = [1, 1]} : vector<16x48xf32> to vector<8x48xf32>
    %c0_15 = arith.constant 0 : index
    %c0_16 = arith.constant 0 : index
    %20 = vector.load %arg16[%c0_15, %c0_16] : memref<96x48xf32, #tpu.memory_space<vmem>>, vector<96x48xf32>
    %21 = tpu.concatenate %18, %18, %18, %18, %18, %18, %18, %18, %18, %18, %18, %18 in 0 : vector<8x48xf32>, vector<8x48xf32>, vector<8x48xf32>, vector<8x48xf32>, vector<8x48xf32>, vector<8x48xf32>, vector<8x48xf32>, vector<8x48xf32>, vector<8x48xf32>, vector<8x48xf32>, vector<8x48xf32>, vector<8x48xf32> -> vector<96x48xf32>
    %22 = arith.mulf %21, %20 : vector<96x48xf32>
    "tpu.trace_start"() <{level = 10 : i32, message = "nd,md->nm"}> : () -> ()
    %cst_17 = arith.constant dense<0.000000e+00> : vector<32x96xf32>
    %23 = tpu.matmul %17, %22, %cst_17 {dimension_numbers = #tpu.dot_dimension_numbers<[1], [1], [0], [0], [0, 0, 1, 0], [], []>} : vector<32x48xf32>, vector<96x48xf32>, vector<32x96xf32> -> vector<32x96xf32>
    "tpu.trace_stop"() : () -> ()
    %cst_18 = arith.constant 5.000000e-01 : f32
    %24 = vector.broadcast %cst_18 : f32 to vector<32x96xf32>
    %25 = arith.mulf %23, %24 : vector<32x96xf32>
    %cst_19 = arith.constant dense<0xFF800000> : vector<32xf32>
    %26 = vector.multi_reduction <maximumf>, %25, %cst_19 [1] : vector<32x96xf32> to vector<32xf32>
    %27 = vector.shape_cast %26 : vector<32xf32> to vector<32x1xf32>
    %28 = vector.broadcast %27 : vector<32x1xf32> to vector<32x96xf32>
    %29 = arith.subf %25, %28 : vector<32x96xf32>
    %30 = math.exp %29 : vector<32x96xf32>
    %cst_20 = arith.constant dense<0.000000e+00> : vector<32x48xf32>
    %31 = tpu.matmul %30, %20, %cst_20 {dimension_numbers = #tpu.dot_dimension_numbers<[1], [0], [0], [1], [0, 0, 1, 1], [], []>} : vector<32x96xf32>, vector<96x48xf32>, vector<32x48xf32> -> vector<32x48xf32>
    %32 = tpu.concatenate %19, %19, %19, %19, %19, %19, %19, %19, %19, %19, %19, %19 in 0 : vector<8x48xf32>, vector<8x48xf32>, vector<8x48xf32>, vector<8x48xf32>, vector<8x48xf32>, vector<8x48xf32>, vector<8x48xf32>, vector<8x48xf32>, vector<8x48xf32>, vector<8x48xf32>, vector<8x48xf32>, vector<8x48xf32> -> vector<96x48xf32>
    %33 = arith.mulf %32, %20 : vector<96x48xf32>
    %cst_21 = arith.constant dense<0.000000e+00> : vector<32x48xf32>
    %34 = tpu.matmul %30, %33, %cst_21 {dimension_numbers = #tpu.dot_dimension_numbers<[1], [0], [0], [1], [0, 0, 1, 1], [], []>} : vector<32x96xf32>, vector<96x48xf32>, vector<32x48xf32> -> vector<32x48xf32>
    %cst_22 = arith.constant 1.000000e-30 : f32
    %35 = vector.broadcast %cst_22 : f32 to vector<32x48xf32>
    %36 = arith.maximumf %31, %35 : vector<32x48xf32>
    %37 = tpu.reciprocal %36 {approx = true} : vector<32x48xf32> -> vector<32x48xf32>
    %38 = arith.mulf %34, %37 : vector<32x48xf32>
    %39 = vector.extract_strided_slice %9 {offsets = [32, 0], sizes = [32, 48], strides = [1, 1]} : vector<64x48xf32> to vector<32x48xf32>
    %40 = vector.extract_strided_slice %15 {offsets = [8, 0], sizes = [8, 48], strides = [1, 1]} : vector<16x48xf32> to vector<8x48xf32>
    %41 = vector.extract_strided_slice %16 {offsets = [8, 0], sizes = [8, 48], strides = [1, 1]} : vector<16x48xf32> to vector<8x48xf32>
    %c0_23 = arith.constant 0 : index
    %c0_24 = arith.constant 0 : index
    %42 = vector.load %arg16[%c0_23, %c0_24] : memref<96x48xf32, #tpu.memory_space<vmem>>, vector<96x48xf32>
    %43 = tpu.concatenate %40, %40, %40, %40, %40, %40, %40, %40, %40, %40, %40, %40 in 0 : vector<8x48xf32>, vector<8x48xf32>, vector<8x48xf32>, vector<8x48xf32>, vector<8x48xf32>, vector<8x48xf32>, vector<8x48xf32>, vector<8x48xf32>, vector<8x48xf32>, vector<8x48xf32>, vector<8x48xf32>, vector<8x48xf32> -> vector<96x48xf32>
    %44 = arith.mulf %43, %42 : vector<96x48xf32>
    "tpu.trace_start"() <{level = 10 : i32, message = "nd,md->nm"}> : () -> ()
    %cst_25 = arith.constant dense<0.000000e+00> : vector<32x96xf32>
    %45 = tpu.matmul %39, %44, %cst_25 {dimension_numbers = #tpu.dot_dimension_numbers<[1], [1], [0], [0], [0, 0, 1, 0], [], []>} : vector<32x48xf32>, vector<96x48xf32>, vector<32x96xf32> -> vector<32x96xf32>
    "tpu.trace_stop"() : () -> ()
    %cst_26 = arith.constant 5.000000e-01 : f32
    %46 = vector.broadcast %cst_26 : f32 to vector<32x96xf32>
    %47 = arith.mulf %45, %46 : vector<32x96xf32>
    %cst_27 = arith.constant dense<0xFF800000> : vector<32xf32>
    %48 = vector.multi_reduction <maximumf>, %47, %cst_27 [1] : vector<32x96xf32> to vector<32xf32>
    %49 = vector.shape_cast %48 : vector<32xf32> to vector<32x1xf32>
    %50 = vector.broadcast %49 : vector<32x1xf32> to vector<32x96xf32>
    %51 = arith.subf %47, %50 : vector<32x96xf32>
    %52 = math.exp %51 : vector<32x96xf32>
    %cst_28 = arith.constant dense<0.000000e+00> : vector<32x48xf32>
    %53 = tpu.matmul %52, %42, %cst_28 {dimension_numbers = #tpu.dot_dimension_numbers<[1], [0], [0], [1], [0, 0, 1, 1], [], []>} : vector<32x96xf32>, vector<96x48xf32>, vector<32x48xf32> -> vector<32x48xf32>
    %54 = tpu.concatenate %41, %41, %41, %41, %41, %41, %41, %41, %41, %41, %41, %41 in 0 : vector<8x48xf32>, vector<8x48xf32>, vector<8x48xf32>, vector<8x48xf32>, vector<8x48xf32>, vector<8x48xf32>, vector<8x48xf32>, vector<8x48xf32>, vector<8x48xf32>, vector<8x48xf32>, vector<8x48xf32>, vector<8x48xf32> -> vector<96x48xf32>
    %55 = arith.mulf %54, %42 : vector<96x48xf32>
    %cst_29 = arith.constant dense<0.000000e+00> : vector<32x48xf32>
    %56 = tpu.matmul %52, %55, %cst_29 {dimension_numbers = #tpu.dot_dimension_numbers<[1], [0], [0], [1], [0, 0, 1, 1], [], []>} : vector<32x96xf32>, vector<96x48xf32>, vector<32x48xf32> -> vector<32x48xf32>
    %cst_30 = arith.constant 1.000000e-30 : f32
    %57 = vector.broadcast %cst_30 : f32 to vector<32x48xf32>
    %58 = arith.maximumf %53, %57 : vector<32x48xf32>
    %59 = tpu.reciprocal %58 {approx = true} : vector<32x48xf32> -> vector<32x48xf32>
    %60 = arith.mulf %56, %59 : vector<32x48xf32>
    %61 = tpu.concatenate %38, %60 in 0 : vector<32x48xf32>, vector<32x48xf32> -> vector<64x48xf32>
    %c1 = arith.constant 1 : index
    %c0_31 = arith.constant 0 : index
    %c0_32 = arith.constant 0 : index
    %62 = vector.load %arg5[%c1, %c0_31, %c0_32] : memref<5x48x48xf32, #tpu.memory_space<vmem>>, vector<1x48x48xf32>
    %63 = vector.shape_cast %62 : vector<1x48x48xf32> to vector<48x48xf32>
    %cst_33 = arith.constant dense<0.000000e+00> : vector<64x48xf32>
    %64 = tpu.matmul %61, %63, %cst_33 {dimension_numbers = #tpu.dot_dimension_numbers<[1], [0], [0], [1], [0, 0, 1, 1], [], []>} : vector<64x48xf32>, vector<48x48xf32>, vector<64x48xf32> -> vector<64x48xf32>
    %c1_34 = arith.constant 1 : index
    %c0_35 = arith.constant 0 : index
    %65 = vector.load %arg11[%c1_34, %c0_35] : memref<10x48xf32, #tpu.memory_space<vmem>>, vector<1x48xf32>
    %66 = vector.broadcast %65 : vector<1x48xf32> to vector<64x48xf32>
    %67 = arith.addf %64, %66 : vector<64x48xf32>
    %68 = arith.addf %1, %67 : vector<64x48xf32>
    %c2 = arith.constant 2 : index
    %c0_36 = arith.constant 0 : index
    %c0_37 = arith.constant 0 : index
    %69 = vector.load %arg5[%c2, %c0_36, %c0_37] : memref<5x48x48xf32, #tpu.memory_space<vmem>>, vector<1x48x48xf32>
    %70 = vector.shape_cast %69 : vector<1x48x48xf32> to vector<48x48xf32>
    %cst_38 = arith.constant dense<0.000000e+00> : vector<64x48xf32>
    %71 = tpu.matmul %1, %70, %cst_38 {dimension_numbers = #tpu.dot_dimension_numbers<[1], [0], [0], [1], [0, 0, 1, 1], [], []>} : vector<64x48xf32>, vector<48x48xf32>, vector<64x48xf32> -> vector<64x48xf32>
    %c3 = arith.constant 3 : index
    %c0_39 = arith.constant 0 : index
    %c0_40 = arith.constant 0 : index
    %72 = vector.load %arg5[%c3, %c0_39, %c0_40] : memref<5x48x48xf32, #tpu.memory_space<vmem>>, vector<1x48x48xf32>
    %73 = vector.shape_cast %72 : vector<1x48x48xf32> to vector<48x48xf32>
    %cst_41 = arith.constant dense<0.000000e+00> : vector<64x48xf32>
    %74 = tpu.matmul %68, %73, %cst_41 {dimension_numbers = #tpu.dot_dimension_numbers<[1], [0], [0], [1], [0, 0, 1, 1], [], []>} : vector<64x48xf32>, vector<48x48xf32>, vector<64x48xf32> -> vector<64x48xf32>
    %75 = arith.addf %71, %74 : vector<64x48xf32>
    %c2_42 = arith.constant 2 : index
    %c0_43 = arith.constant 0 : index
    %76 = vector.load %arg11[%c2_42, %c0_43] : memref<10x48xf32, #tpu.memory_space<vmem>>, vector<1x48xf32>
    %77 = vector.broadcast %76 : vector<1x48xf32> to vector<64x48xf32>
    %78 = arith.addf %75, %77 : vector<64x48xf32>
    %c3_44 = arith.constant 3 : index
    %c0_45 = arith.constant 0 : index
    %79 = vector.load %arg11[%c3_44, %c0_45] : memref<10x48xf32, #tpu.memory_space<vmem>>, vector<1x48xf32>
    %c4 = arith.constant 4 : index
    %c0_46 = arith.constant 0 : index
    %80 = vector.load %arg11[%c4, %c0_46] : memref<10x48xf32, #tpu.memory_space<vmem>>, vector<1x48xf32>
    %cst_47 = arith.constant dense<0.000000e+00> : vector<64xf32>
    %81 = vector.multi_reduction <add>, %78, %cst_47 [1] : vector<64x48xf32> to vector<64xf32>
    %82 = vector.shape_cast %81 : vector<64xf32> to vector<64x1xf32>
    %cst_48 = arith.constant 4.800000e+01 : f32
    %83 = vector.broadcast %cst_48 : f32 to vector<64x1xf32>
    %84 = arith.divf %82, %83 : vector<64x1xf32>
    %85 = vector.broadcast %84 : vector<64x1xf32> to vector<64x48xf32>
    %86 = arith.subf %78, %85 : vector<64x48xf32>
    %87 = arith.mulf %86, %86 : vector<64x48xf32>
    %cst_49 = arith.constant dense<0.000000e+00> : vector<64xf32>
    %88 = vector.multi_reduction <add>, %87, %cst_49 [1] : vector<64x48xf32> to vector<64xf32>
    %89 = vector.shape_cast %88 : vector<64xf32> to vector<64x1xf32>
    %cst_50 = arith.constant 4.800000e+01 : f32
    %90 = vector.broadcast %cst_50 : f32 to vector<64x1xf32>
    %91 = arith.divf %89, %90 : vector<64x1xf32>
    %92 = vector.broadcast %84 : vector<64x1xf32> to vector<64x48xf32>
    %93 = arith.subf %78, %92 : vector<64x48xf32>
    %cst_51 = arith.constant 9.99999974E-6 : f32
    %94 = vector.broadcast %cst_51 : f32 to vector<64x1xf32>
    %95 = arith.addf %91, %94 : vector<64x1xf32>
    %96 = math.rsqrt %95 : vector<64x1xf32>
    %97 = vector.broadcast %96 : vector<64x1xf32> to vector<64x48xf32>
    %98 = arith.mulf %93, %97 : vector<64x48xf32>
    %99 = vector.broadcast %79 : vector<1x48xf32> to vector<64x48xf32>
    %100 = arith.mulf %98, %99 : vector<64x48xf32>
    %101 = vector.broadcast %80 : vector<1x48xf32> to vector<64x48xf32>
    %102 = arith.addf %100, %101 : vector<64x48xf32>
    %103 = arith.negf %102 : vector<64x48xf32>
    %104 = math.exp %103 : vector<64x48xf32>
    %cst_52 = arith.constant 1.000000e+00 : f32
    %105 = vector.broadcast %cst_52 : f32 to vector<64x48xf32>
    %106 = arith.addf %105, %104 : vector<64x48xf32>
    %107 = arith.divf %105, %106 : vector<64x48xf32>
    %108 = arith.mulf %107, %68 : vector<64x48xf32>
    %109 = arith.addf %1, %108 : vector<64x48xf32>
    %c5 = arith.constant 5 : index
    %c0_53 = arith.constant 0 : index
    %110 = vector.load %arg11[%c5, %c0_53] : memref<10x48xf32, #tpu.memory_space<vmem>>, vector<1x48xf32>
    %c6 = arith.constant 6 : index
    %c0_54 = arith.constant 0 : index
    %111 = vector.load %arg11[%c6, %c0_54] : memref<10x48xf32, #tpu.memory_space<vmem>>, vector<1x48xf32>
    %cst_55 = arith.constant dense<0.000000e+00> : vector<64xf32>
    %112 = vector.multi_reduction <add>, %109, %cst_55 [1] : vector<64x48xf32> to vector<64xf32>
    %113 = vector.shape_cast %112 : vector<64xf32> to vector<64x1xf32>
    %cst_56 = arith.constant 4.800000e+01 : f32
    %114 = vector.broadcast %cst_56 : f32 to vector<64x1xf32>
    %115 = arith.divf %113, %114 : vector<64x1xf32>
    %116 = vector.broadcast %115 : vector<64x1xf32> to vector<64x48xf32>
    %117 = arith.subf %109, %116 : vector<64x48xf32>
    %118 = arith.mulf %117, %117 : vector<64x48xf32>
    %cst_57 = arith.constant dense<0.000000e+00> : vector<64xf32>
    %119 = vector.multi_reduction <add>, %118, %cst_57 [1] : vector<64x48xf32> to vector<64xf32>
    %120 = vector.shape_cast %119 : vector<64xf32> to vector<64x1xf32>
    %cst_58 = arith.constant 4.800000e+01 : f32
    %121 = vector.broadcast %cst_58 : f32 to vector<64x1xf32>
    %122 = arith.divf %120, %121 : vector<64x1xf32>
    %123 = vector.broadcast %115 : vector<64x1xf32> to vector<64x48xf32>
    %124 = arith.subf %109, %123 : vector<64x48xf32>
    %cst_59 = arith.constant 9.99999974E-6 : f32
    %125 = vector.broadcast %cst_59 : f32 to vector<64x1xf32>
    %126 = arith.addf %122, %125 : vector<64x1xf32>
    %127 = math.rsqrt %126 : vector<64x1xf32>
    %128 = vector.broadcast %127 : vector<64x1xf32> to vector<64x48xf32>
    %129 = arith.mulf %124, %128 : vector<64x48xf32>
    %130 = vector.broadcast %110 : vector<1x48xf32> to vector<64x48xf32>
    %131 = arith.mulf %129, %130 : vector<64x48xf32>
    %132 = vector.broadcast %111 : vector<1x48xf32> to vector<64x48xf32>
    %133 = arith.addf %131, %132 : vector<64x48xf32>
    %c0_60 = arith.constant 0 : index
    %c0_61 = arith.constant 0 : index
    %c0_62 = arith.constant 0 : index
    %134 = vector.load %arg3[%c0_60, %c0_61, %c0_62] : memref<2x32x3xf32, #tpu.memory_space<vmem>>, vector<2x32x3xf32>
    %135 = vector.shape_cast %134 : vector<2x32x3xf32> to vector<64x3xf32>
    %c0_63 = arith.constant 0 : index
    %c0_64 = arith.constant 0 : index
    %136 = vector.load %arg8[%c0_63, %c0_64] : memref<48x25xf32, #tpu.memory_space<vmem>>, vector<48x25xf32>
    %cst_65 = arith.constant dense<0.000000e+00> : vector<64x25xf32>
    %137 = tpu.matmul %133, %136, %cst_65 {dimension_numbers = #tpu.dot_dimension_numbers<[1], [0], [0], [1], [0, 0, 1, 1], [], []>} : vector<64x48xf32>, vector<48x25xf32>, vector<64x25xf32> -> vector<64x25xf32>
    %c0_66 = arith.constant 0 : index
    %c0_67 = arith.constant 0 : index
    %138 = vector.load %arg9[%c0_66, %c0_67] : memref<3x25xf32, #tpu.memory_space<vmem>>, vector<3x25xf32>
    %cst_68 = arith.constant dense<0.000000e+00> : vector<64x25xf32>
    %139 = tpu.matmul %135, %138, %cst_68 {dimension_numbers = #tpu.dot_dimension_numbers<[1], [0], [0], [1], [0, 0, 1, 1], [], []>} : vector<64x3xf32>, vector<3x25xf32>, vector<64x25xf32> -> vector<64x25xf32>
    %140 = arith.addf %137, %139 : vector<64x25xf32>
    %c0_69 = arith.constant 0 : index
    %c0_70 = arith.constant 0 : index
    %141 = vector.load %arg14[%c0_69, %c0_70] : memref<3x25xf32, #tpu.memory_space<vmem>>, vector<1x25xf32>
    %142 = vector.broadcast %141 : vector<1x25xf32> to vector<64x25xf32>
    %143 = arith.addf %140, %142 : vector<64x25xf32>
    %c1_71 = arith.constant 1 : index
    %c0_72 = arith.constant 0 : index
    %144 = vector.load %arg14[%c1_71, %c0_72] : memref<3x25xf32, #tpu.memory_space<vmem>>, vector<1x25xf32>
    %c2_73 = arith.constant 2 : index
    %c0_74 = arith.constant 0 : index
    %145 = vector.load %arg14[%c2_73, %c0_74] : memref<3x25xf32, #tpu.memory_space<vmem>>, vector<1x25xf32>
    %cst_75 = arith.constant dense<0.000000e+00> : vector<64xf32>
    %146 = vector.multi_reduction <add>, %143, %cst_75 [1] : vector<64x25xf32> to vector<64xf32>
    %147 = vector.shape_cast %146 : vector<64xf32> to vector<64x1xf32>
    %cst_76 = arith.constant 2.500000e+01 : f32
    %148 = vector.broadcast %cst_76 : f32 to vector<64x1xf32>
    %149 = arith.divf %147, %148 : vector<64x1xf32>
    %150 = vector.broadcast %149 : vector<64x1xf32> to vector<64x25xf32>
    %151 = arith.subf %143, %150 : vector<64x25xf32>
    %152 = arith.mulf %151, %151 : vector<64x25xf32>
    %cst_77 = arith.constant dense<0.000000e+00> : vector<64xf32>
    %153 = vector.multi_reduction <add>, %152, %cst_77 [1] : vector<64x25xf32> to vector<64xf32>
    %154 = vector.shape_cast %153 : vector<64xf32> to vector<64x1xf32>
    %cst_78 = arith.constant 2.500000e+01 : f32
    %155 = vector.broadcast %cst_78 : f32 to vector<64x1xf32>
    %156 = arith.divf %154, %155 : vector<64x1xf32>
    %157 = vector.broadcast %149 : vector<64x1xf32> to vector<64x25xf32>
    %158 = arith.subf %143, %157 : vector<64x25xf32>
    %cst_79 = arith.constant 9.99999974E-6 : f32
    %159 = vector.broadcast %cst_79 : f32 to vector<64x1xf32>
    %160 = arith.addf %156, %159 : vector<64x1xf32>
    %161 = math.rsqrt %160 : vector<64x1xf32>
    %162 = vector.broadcast %161 : vector<64x1xf32> to vector<64x25xf32>
    %163 = arith.mulf %158, %162 : vector<64x25xf32>
    %164 = vector.broadcast %144 : vector<1x25xf32> to vector<64x25xf32>
    %165 = arith.mulf %163, %164 : vector<64x25xf32>
    %166 = vector.broadcast %145 : vector<1x25xf32> to vector<64x25xf32>
    %167 = arith.addf %165, %166 : vector<64x25xf32>
    %cst_80 = arith.constant 5.000000e-01 : f32
    %168 = vector.broadcast %cst_80 : f32 to vector<64x25xf32>
    %169 = arith.mulf %168, %167 : vector<64x25xf32>
    %cst_81 = arith.constant 1.41421354 : f32
    %170 = vector.broadcast %cst_81 : f32 to vector<64x25xf32>
    %171 = arith.divf %167, %170 : vector<64x25xf32>
    %172 = math.erf %171 : vector<64x25xf32>
    %cst_82 = arith.constant 1.000000e+00 : f32
    %173 = vector.broadcast %cst_82 : f32 to vector<64x25xf32>
    %174 = arith.addf %173, %172 : vector<64x25xf32>
    %175 = arith.mulf %169, %174 : vector<64x25xf32>
    %c0_83 = arith.constant 0 : index
    %c0_84 = arith.constant 0 : index
    %176 = vector.load %arg10[%c0_83, %c0_84] : memref<25x7xf32, #tpu.memory_space<vmem>>, vector<25x7xf32>
    %cst_85 = arith.constant dense<0.000000e+00> : vector<64x7xf32>
    %177 = tpu.matmul %175, %176, %cst_85 {dimension_numbers = #tpu.dot_dimension_numbers<[1], [0], [0], [1], [0, 0, 1, 1], [], []>} : vector<64x25xf32>, vector<25x7xf32>, vector<64x7xf32> -> vector<64x7xf32>
    %c0_86 = arith.constant 0 : index
    %c0_87 = arith.constant 0 : index
    %178 = vector.load %arg15[%c0_86, %c0_87] : memref<3x7xf32, #tpu.memory_space<vmem>>, vector<1x7xf32>
    %179 = vector.broadcast %178 : vector<1x7xf32> to vector<64x7xf32>
    %180 = arith.addf %177, %179 : vector<64x7xf32>
    %c1_88 = arith.constant 1 : index
    %c0_89 = arith.constant 0 : index
    %181 = vector.load %arg15[%c1_88, %c0_89] : memref<3x7xf32, #tpu.memory_space<vmem>>, vector<1x7xf32>
    %c2_90 = arith.constant 2 : index
    %c0_91 = arith.constant 0 : index
    %182 = vector.load %arg15[%c2_90, %c0_91] : memref<3x7xf32, #tpu.memory_space<vmem>>, vector<1x7xf32>
    %cst_92 = arith.constant dense<0.000000e+00> : vector<64xf32>
    %183 = vector.multi_reduction <add>, %180, %cst_92 [1] : vector<64x7xf32> to vector<64xf32>
    %184 = vector.shape_cast %183 : vector<64xf32> to vector<64x1xf32>
    %cst_93 = arith.constant 7.000000e+00 : f32
    %185 = vector.broadcast %cst_93 : f32 to vector<64x1xf32>
    %186 = arith.divf %184, %185 : vector<64x1xf32>
    %187 = vector.broadcast %186 : vector<64x1xf32> to vector<64x7xf32>
    %188 = arith.subf %180, %187 : vector<64x7xf32>
    %189 = arith.mulf %188, %188 : vector<64x7xf32>
    %cst_94 = arith.constant dense<0.000000e+00> : vector<64xf32>
    %190 = vector.multi_reduction <add>, %189, %cst_94 [1] : vector<64x7xf32> to vector<64xf32>
    %191 = vector.shape_cast %190 : vector<64xf32> to vector<64x1xf32>
    %cst_95 = arith.constant 7.000000e+00 : f32
    %192 = vector.broadcast %cst_95 : f32 to vector<64x1xf32>
    %193 = arith.divf %191, %192 : vector<64x1xf32>
    %194 = vector.broadcast %186 : vector<64x1xf32> to vector<64x7xf32>
    %195 = arith.subf %180, %194 : vector<64x7xf32>
    %cst_96 = arith.constant 9.99999974E-6 : f32
    %196 = vector.broadcast %cst_96 : f32 to vector<64x1xf32>
    %197 = arith.addf %193, %196 : vector<64x1xf32>
    %198 = math.rsqrt %197 : vector<64x1xf32>
    %199 = vector.broadcast %198 : vector<64x1xf32> to vector<64x7xf32>
    %200 = arith.mulf %195, %199 : vector<64x7xf32>
    %201 = vector.broadcast %181 : vector<1x7xf32> to vector<64x7xf32>
    %202 = arith.mulf %200, %201 : vector<64x7xf32>
    %203 = vector.broadcast %182 : vector<1x7xf32> to vector<64x7xf32>
    %204 = arith.addf %202, %203 : vector<64x7xf32>
    %cst_97 = arith.constant dense<0xFF800000> : vector<64xf32>
    %205 = vector.multi_reduction <maximumf>, %204, %cst_97 [1] : vector<64x7xf32> to vector<64xf32>
    %206 = vector.shape_cast %205 : vector<64xf32> to vector<64x1xf32>
    %207 = vector.broadcast %206 : vector<64x1xf32> to vector<64x7xf32>
    %208 = arith.subf %204, %207 : vector<64x7xf32>
    %209 = math.exp %208 : vector<64x7xf32>
    %cst_98 = arith.constant dense<0.000000e+00> : vector<64xf32>
    %210 = vector.multi_reduction <add>, %209, %cst_98 [1] : vector<64x7xf32> to vector<64xf32>
    %211 = vector.shape_cast %210 : vector<64xf32> to vector<64x1xf32>
    %212 = vector.broadcast %211 : vector<64x1xf32> to vector<64x7xf32>
    %213 = arith.divf %209, %212 : vector<64x7xf32>
    %214 = vector.shape_cast %213 : vector<64x7xf32> to vector<2x32x7xf32>
    %c0_99 = arith.constant 0 : index
    %c0_100 = arith.constant 0 : index
    %c0_101 = arith.constant 0 : index
    %215 = vector.load %arg19[%c0_99, %c0_100, %c0_101] : memref<2x32x7xf32, #tpu.memory_space<vmem>>, vector<2x32x7xf32>
    tpu.vector_store %arg19[%c0_99, %c0_100, %c0_101], %214 {strides = array<i32>} : memref<2x32x7xf32, #tpu.memory_space<vmem>>, vector<2x32x7xf32>,
    %216 = vector.extract_strided_slice %213 {offsets = [0, 0], sizes = [64, 1], strides = [1, 1]} : vector<64x7xf32> to vector<64x1xf32>
    %c0_102 = arith.constant 0 : index
    %c0_103 = arith.constant 0 : index
    %c0_104 = arith.constant 0 : index
    %c0_105 = arith.constant 0 : index
    %217 = vector.load %arg4[%c0_102, %c0_103, %c0_104, %c0_105] : memref<7x2x32x48xf32, #tpu.memory_space<vmem>>, vector<1x2x32x48xf32>
    %218 = vector.shape_cast %217 : vector<1x2x32x48xf32> to vector<2x32x48xf32>
    %219 = vector.shape_cast %218 : vector<2x32x48xf32> to vector<64x48xf32>
    %220 = vector.broadcast %216 : vector<64x1xf32> to vector<64x48xf32>
    %221 = arith.mulf %220, %219 : vector<64x48xf32>
    %222 = vector.extract_strided_slice %213 {offsets = [0, 1], sizes = [64, 1], strides = [1, 1]} : vector<64x7xf32> to vector<64x1xf32>
    %c1_106 = arith.constant 1 : index
    %c0_107 = arith.constant 0 : index
    %c0_108 = arith.constant 0 : index
    %c0_109 = arith.constant 0 : index
    %223 = vector.load %arg4[%c1_106, %c0_107, %c0_108, %c0_109] : memref<7x2x32x48xf32, #tpu.memory_space<vmem>>, vector<1x2x32x48xf32>
    %224 = vector.shape_cast %223 : vector<1x2x32x48xf32> to vector<2x32x48xf32>
    %225 = vector.shape_cast %224 : vector<2x32x48xf32> to vector<64x48xf32>
    %226 = vector.broadcast %222 : vector<64x1xf32> to vector<64x48xf32>
    %227 = arith.mulf %226, %225 : vector<64x48xf32>
    %228 = arith.addf %221, %227 : vector<64x48xf32>
    %229 = vector.extract_strided_slice %213 {offsets = [0, 2], sizes = [64, 1], strides = [1, 1]} : vector<64x7xf32> to vector<64x1xf32>
    %c2_110 = arith.constant 2 : index
    %c0_111 = arith.constant 0 : index
    %c0_112 = arith.constant 0 : index
    %c0_113 = arith.constant 0 : index
    %230 = vector.load %arg4[%c2_110, %c0_111, %c0_112, %c0_113] : memref<7x2x32x48xf32, #tpu.memory_space<vmem>>, vector<1x2x32x48xf32>
    %231 = vector.shape_cast %230 : vector<1x2x32x48xf32> to vector<2x32x48xf32>
    %232 = vector.shape_cast %231 : vector<2x32x48xf32> to vector<64x48xf32>
    %233 = vector.broadcast %229 : vector<64x1xf32> to vector<64x48xf32>
    %234 = arith.mulf %233, %232 : vector<64x48xf32>
    %235 = arith.addf %228, %234 : vector<64x48xf32>
    %236 = vector.extract_strided_slice %213 {offsets = [0, 3], sizes = [64, 1], strides = [1, 1]} : vector<64x7xf32> to vector<64x1xf32>
    %c3_114 = arith.constant 3 : index
    %c0_115 = arith.constant 0 : index
    %c0_116 = arith.constant 0 : index
    %c0_117 = arith.constant 0 : index
    %237 = vector.load %arg4[%c3_114, %c0_115, %c0_116, %c0_117] : memref<7x2x32x48xf32, #tpu.memory_space<vmem>>, vector<1x2x32x48xf32>
    %238 = vector.shape_cast %237 : vector<1x2x32x48xf32> to vector<2x32x48xf32>
    %239 = vector.shape_cast %238 : vector<2x32x48xf32> to vector<64x48xf32>
    %240 = vector.broadcast %236 : vector<64x1xf32> to vector<64x48xf32>
    %241 = arith.mulf %240, %239 : vector<64x48xf32>
    %242 = arith.addf %235, %241 : vector<64x48xf32>
    %243 = vector.extract_strided_slice %213 {offsets = [0, 4], sizes = [64, 1], strides = [1, 1]} : vector<64x7xf32> to vector<64x1xf32>
    %c4_118 = arith.constant 4 : index
    %c0_119 = arith.constant 0 : index
    %c0_120 = arith.constant 0 : index
    %c0_121 = arith.constant 0 : index
    %244 = vector.load %arg4[%c4_118, %c0_119, %c0_120, %c0_121] : memref<7x2x32x48xf32, #tpu.memory_space<vmem>>, vector<1x2x32x48xf32>
    %245 = vector.shape_cast %244 : vector<1x2x32x48xf32> to vector<2x32x48xf32>
    %246 = vector.shape_cast %245 : vector<2x32x48xf32> to vector<64x48xf32>
    %247 = vector.broadcast %243 : vector<64x1xf32> to vector<64x48xf32>
    %248 = arith.mulf %247, %246 : vector<64x48xf32>
    %249 = arith.addf %242, %248 : vector<64x48xf32>
    %250 = vector.extract_strided_slice %213 {offsets = [0, 5], sizes = [64, 1], strides = [1, 1]} : vector<64x7xf32> to vector<64x1xf32>
    %c5_122 = arith.constant 5 : index
    %c0_123 = arith.constant 0 : index
    %c0_124 = arith.constant 0 : index
    %c0_125 = arith.constant 0 : index
    %251 = vector.load %arg4[%c5_122, %c0_123, %c0_124, %c0_125] : memref<7x2x32x48xf32, #tpu.memory_space<vmem>>, vector<1x2x32x48xf32>
    %252 = vector.shape_cast %251 : vector<1x2x32x48xf32> to vector<2x32x48xf32>
    %253 = vector.shape_cast %252 : vector<2x32x48xf32> to vector<64x48xf32>
    %254 = vector.broadcast %250 : vector<64x1xf32> to vector<64x48xf32>
    %255 = arith.mulf %254, %253 : vector<64x48xf32>
    %256 = arith.addf %249, %255 : vector<64x48xf32>
    %257 = vector.extract_strided_slice %213 {offsets = [0, 6], sizes = [64, 1], strides = [1, 1]} : vector<64x7xf32> to vector<64x1xf32>
    %c6_126 = arith.constant 6 : index
    %c0_127 = arith.constant 0 : index
    %c0_128 = arith.constant 0 : index
    %c0_129 = arith.constant 0 : index
    %258 = vector.load %arg4[%c6_126, %c0_127, %c0_128, %c0_129] : memref<7x2x32x48xf32, #tpu.memory_space<vmem>>, vector<1x2x32x48xf32>
    %259 = vector.shape_cast %258 : vector<1x2x32x48xf32> to vector<2x32x48xf32>
    %260 = vector.shape_cast %259 : vector<2x32x48xf32> to vector<64x48xf32>
    %261 = vector.broadcast %257 : vector<64x1xf32> to vector<64x48xf32>
    %262 = arith.mulf %261, %260 : vector<64x48xf32>
    %263 = arith.addf %256, %262 : vector<64x48xf32>
    %c0_130 = arith.constant 0 : index
    %c0_131 = arith.constant 0 : index
    %264 = vector.load %arg7[%c0_130, %c0_131] : memref<48x144xf32, #tpu.memory_space<vmem>>, vector<48x144xf32>
    %cst_132 = arith.constant dense<0.000000e+00> : vector<64x144xf32>
    %265 = tpu.matmul %263, %264, %cst_132 {dimension_numbers = #tpu.dot_dimension_numbers<[1], [0], [0], [1], [0, 0, 1, 1], [], []>} : vector<64x48xf32>, vector<48x144xf32>, vector<64x144xf32> -> vector<64x144xf32>
    %c0_133 = arith.constant 0 : index
    %c0_134 = arith.constant 0 : index
    %266 = vector.load %arg13[%c0_133, %c0_134] : memref<1x144xf32, #tpu.memory_space<vmem>>, vector<1x144xf32>
    %267 = vector.broadcast %266 : vector<1x144xf32> to vector<64x144xf32>
    %268 = arith.addf %265, %267 : vector<64x144xf32>
    %269 = vector.extract_strided_slice %268 {offsets = [0, 0], sizes = [64, 48], strides = [1, 1]} : vector<64x144xf32> to vector<64x48xf32>
    %270 = vector.extract_strided_slice %268 {offsets = [0, 48], sizes = [64, 48], strides = [1, 1]} : vector<64x144xf32> to vector<64x48xf32>
    %271 = vector.extract_strided_slice %268 {offsets = [0, 96], sizes = [64, 48], strides = [1, 1]} : vector<64x144xf32> to vector<64x48xf32>
    %272 = vector.extract_strided_slice %269 {offsets = [0, 0], sizes = [32, 48], strides = [1, 1]} : vector<64x48xf32> to vector<32x48xf32>
    %273 = vector.extract_strided_slice %270 {offsets = [0, 0], sizes = [32, 48], strides = [1, 1]} : vector<64x48xf32> to vector<32x48xf32>
    %274 = vector.extract_strided_slice %271 {offsets = [0, 0], sizes = [32, 48], strides = [1, 1]} : vector<64x48xf32> to vector<32x48xf32>
    %c0_135 = arith.constant 0 : index
    %c0_136 = arith.constant 0 : index
    %275 = vector.load %arg17[%c0_135, %c0_136] : memref<256x48xf32, #tpu.memory_space<vmem>>, vector<256x48xf32>
    %276 = tpu.concatenate %273, %273, %273, %273, %273, %273, %273, %273 in 0 : vector<32x48xf32>, vector<32x48xf32>, vector<32x48xf32>, vector<32x48xf32>, vector<32x48xf32>, vector<32x48xf32>, vector<32x48xf32>, vector<32x48xf32> -> vector<256x48xf32>
    %277 = arith.mulf %276, %275 : vector<256x48xf32>
    "tpu.trace_start"() <{level = 10 : i32, message = "nd,md->nm"}> : () -> ()
    %cst_137 = arith.constant dense<0.000000e+00> : vector<32x256xf32>
    %278 = tpu.matmul %272, %277, %cst_137 {dimension_numbers = #tpu.dot_dimension_numbers<[1], [1], [0], [0], [0, 0, 1, 0], [], []>} : vector<32x48xf32>, vector<256x48xf32>, vector<32x256xf32> -> vector<32x256xf32>
    "tpu.trace_stop"() : () -> ()
    %cst_138 = arith.constant 0.408248305 : f32
    %279 = vector.broadcast %cst_138 : f32 to vector<32x256xf32>
    %280 = arith.mulf %278, %279 : vector<32x256xf32>
    %cst_139 = arith.constant dense<0xFF800000> : vector<32xf32>
    %281 = vector.multi_reduction <maximumf>, %280, %cst_139 [1] : vector<32x256xf32> to vector<32xf32>
    %282 = vector.shape_cast %281 : vector<32xf32> to vector<32x1xf32>
    %283 = vector.broadcast %282 : vector<32x1xf32> to vector<32x256xf32>
    %284 = arith.subf %280, %283 : vector<32x256xf32>
    %285 = math.exp %284 : vector<32x256xf32>
    %cst_140 = arith.constant dense<0.000000e+00> : vector<32x48xf32>
    %286 = tpu.matmul %285, %275, %cst_140 {dimension_numbers = #tpu.dot_dimension_numbers<[1], [0], [0], [1], [0, 0, 1, 1], [], []>} : vector<32x256xf32>, vector<256x48xf32>, vector<32x48xf32> -> vector<32x48xf32>
    %287 = tpu.concatenate %274, %274, %274, %274, %274, %274, %274, %274 in 0 : vector<32x48xf32>, vector<32x48xf32>, vector<32x48xf32>, vector<32x48xf32>, vector<32x48xf32>, vector<32x48xf32>, vector<32x48xf32>, vector<32x48xf32> -> vector<256x48xf32>
    %288 = arith.mulf %287, %275 : vector<256x48xf32>
    %cst_141 = arith.constant dense<0.000000e+00> : vector<32x48xf32>
    %289 = tpu.matmul %285, %288, %cst_141 {dimension_numbers = #tpu.dot_dimension_numbers<[1], [0], [0], [1], [0, 0, 1, 1], [], []>} : vector<32x256xf32>, vector<256x48xf32>, vector<32x48xf32> -> vector<32x48xf32>
    %cst_142 = arith.constant 1.000000e-30 : f32
    %290 = vector.broadcast %cst_142 : f32 to vector<32x48xf32>
    %291 = arith.maximumf %286, %290 : vector<32x48xf32>
    %292 = tpu.reciprocal %291 {approx = true} : vector<32x48xf32> -> vector<32x48xf32>
    %293 = arith.mulf %289, %292 : vector<32x48xf32>
    %294 = vector.extract_strided_slice %269 {offsets = [32, 0], sizes = [32, 48], strides = [1, 1]} : vector<64x48xf32> to vector<32x48xf32>
    %295 = vector.extract_strided_slice %270 {offsets = [32, 0], sizes = [32, 48], strides = [1, 1]} : vector<64x48xf32> to vector<32x48xf32>
    %296 = vector.extract_strided_slice %271 {offsets = [32, 0], sizes = [32, 48], strides = [1, 1]} : vector<64x48xf32> to vector<32x48xf32>
    %c0_143 = arith.constant 0 : index
    %c0_144 = arith.constant 0 : index
    %297 = vector.load %arg17[%c0_143, %c0_144] : memref<256x48xf32, #tpu.memory_space<vmem>>, vector<256x48xf32>
    %298 = tpu.concatenate %295, %295, %295, %295, %295, %295, %295, %295 in 0 : vector<32x48xf32>, vector<32x48xf32>, vector<32x48xf32>, vector<32x48xf32>, vector<32x48xf32>, vector<32x48xf32>, vector<32x48xf32>, vector<32x48xf32> -> vector<256x48xf32>
    %299 = arith.mulf %298, %297 : vector<256x48xf32>
    "tpu.trace_start"() <{level = 10 : i32, message = "nd,md->nm"}> : () -> ()
    %cst_145 = arith.constant dense<0.000000e+00> : vector<32x256xf32>
    %300 = tpu.matmul %294, %299, %cst_145 {dimension_numbers = #tpu.dot_dimension_numbers<[1], [1], [0], [0], [0, 0, 1, 0], [], []>} : vector<32x48xf32>, vector<256x48xf32>, vector<32x256xf32> -> vector<32x256xf32>
    "tpu.trace_stop"() : () -> ()
    %cst_146 = arith.constant 0.408248305 : f32
    %301 = vector.broadcast %cst_146 : f32 to vector<32x256xf32>
    %302 = arith.mulf %300, %301 : vector<32x256xf32>
    %cst_147 = arith.constant dense<0xFF800000> : vector<32xf32>
    %303 = vector.multi_reduction <maximumf>, %302, %cst_147 [1] : vector<32x256xf32> to vector<32xf32>
    %304 = vector.shape_cast %303 : vector<32xf32> to vector<32x1xf32>
    %305 = vector.broadcast %304 : vector<32x1xf32> to vector<32x256xf32>
    %306 = arith.subf %302, %305 : vector<32x256xf32>
    %307 = math.exp %306 : vector<32x256xf32>
    %cst_148 = arith.constant dense<0.000000e+00> : vector<32x48xf32>
    %308 = tpu.matmul %307, %297, %cst_148 {dimension_numbers = #tpu.dot_dimension_numbers<[1], [0], [0], [1], [0, 0, 1, 1], [], []>} : vector<32x256xf32>, vector<256x48xf32>, vector<32x48xf32> -> vector<32x48xf32>
    %309 = tpu.concatenate %296, %296, %296, %296, %296, %296, %296, %296 in 0 : vector<32x48xf32>, vector<32x48xf32>, vector<32x48xf32>, vector<32x48xf32>, vector<32x48xf32>, vector<32x48xf32>, vector<32x48xf32>, vector<32x48xf32> -> vector<256x48xf32>
    %310 = arith.mulf %309, %297 : vector<256x48xf32>
    %cst_149 = arith.constant dense<0.000000e+00> : vector<32x48xf32>
    %311 = tpu.matmul %307, %310, %cst_149 {dimension_numbers = #tpu.dot_dimension_numbers<[1], [0], [0], [1], [0, 0, 1, 1], [], []>} : vector<32x256xf32>, vector<256x48xf32>, vector<32x48xf32> -> vector<32x48xf32>
    %cst_150 = arith.constant 1.000000e-30 : f32
    %312 = vector.broadcast %cst_150 : f32 to vector<32x48xf32>
    %313 = arith.maximumf %308, %312 : vector<32x48xf32>
    %314 = tpu.reciprocal %313 {approx = true} : vector<32x48xf32> -> vector<32x48xf32>
    %315 = arith.mulf %311, %314 : vector<32x48xf32>
    %316 = tpu.concatenate %293, %315 in 0 : vector<32x48xf32>, vector<32x48xf32> -> vector<64x48xf32>
    %c4_151 = arith.constant 4 : index
    %c0_152 = arith.constant 0 : index
    %c0_153 = arith.constant 0 : index
    %317 = vector.load %arg5[%c4_151, %c0_152, %c0_153] : memref<5x48x48xf32, #tpu.memory_space<vmem>>, vector<1x48x48xf32>
    %318 = vector.shape_cast %317 : vector<1x48x48xf32> to vector<48x48xf32>
    %cst_154 = arith.constant dense<0.000000e+00> : vector<64x48xf32>
    %319 = tpu.matmul %316, %318, %cst_154 {dimension_numbers = #tpu.dot_dimension_numbers<[1], [0], [0], [1], [0, 0, 1, 1], [], []>} : vector<64x48xf32>, vector<48x48xf32>, vector<64x48xf32> -> vector<64x48xf32>
    %c7 = arith.constant 7 : index
    %c0_155 = arith.constant 0 : index
    %320 = vector.load %arg11[%c7, %c0_155] : memref<10x48xf32, #tpu.memory_space<vmem>>, vector<1x48xf32>
    %321 = vector.broadcast %320 : vector<1x48xf32> to vector<64x48xf32>
    %322 = arith.addf %319, %321 : vector<64x48xf32>
    %323 = arith.addf %322, %263 : vector<64x48xf32>
    %c8 = arith.constant 8 : index
    %c0_156 = arith.constant 0 : index
    %324 = vector.load %arg11[%c8, %c0_156] : memref<10x48xf32, #tpu.memory_space<vmem>>, vector<1x48xf32>
    %c9 = arith.constant 9 : index
    %c0_157 = arith.constant 0 : index
    %325 = vector.load %arg11[%c9, %c0_157] : memref<10x48xf32, #tpu.memory_space<vmem>>, vector<1x48xf32>
    %cst_158 = arith.constant dense<0.000000e+00> : vector<64xf32>
    %326 = vector.multi_reduction <add>, %323, %cst_158 [1] : vector<64x48xf32> to vector<64xf32>
    %327 = vector.shape_cast %326 : vector<64xf32> to vector<64x1xf32>
    %cst_159 = arith.constant 4.800000e+01 : f32
    %328 = vector.broadcast %cst_159 : f32 to vector<64x1xf32>
    %329 = arith.divf %327, %328 : vector<64x1xf32>
    %330 = vector.broadcast %329 : vector<64x1xf32> to vector<64x48xf32>
    %331 = arith.subf %323, %330 : vector<64x48xf32>
    %332 = arith.mulf %331, %331 : vector<64x48xf32>
    %cst_160 = arith.constant dense<0.000000e+00> : vector<64xf32>
    %333 = vector.multi_reduction <add>, %332, %cst_160 [1] : vector<64x48xf32> to vector<64xf32>
    %334 = vector.shape_cast %333 : vector<64xf32> to vector<64x1xf32>
    %cst_161 = arith.constant 4.800000e+01 : f32
    %335 = vector.broadcast %cst_161 : f32 to vector<64x1xf32>
    %336 = arith.divf %334, %335 : vector<64x1xf32>
    %337 = vector.broadcast %329 : vector<64x1xf32> to vector<64x48xf32>
    %338 = arith.subf %323, %337 : vector<64x48xf32>
    %cst_162 = arith.constant 9.99999974E-6 : f32
    %339 = vector.broadcast %cst_162 : f32 to vector<64x1xf32>
    %340 = arith.addf %336, %339 : vector<64x1xf32>
    %341 = math.rsqrt %340 : vector<64x1xf32>
    %342 = vector.broadcast %341 : vector<64x1xf32> to vector<64x48xf32>
    %343 = arith.mulf %338, %342 : vector<64x48xf32>
    %344 = vector.broadcast %324 : vector<1x48xf32> to vector<64x48xf32>
    %345 = arith.mulf %343, %344 : vector<64x48xf32>
    %346 = vector.broadcast %325 : vector<1x48xf32> to vector<64x48xf32>
    %347 = arith.addf %345, %346 : vector<64x48xf32>
    %348 = vector.shape_cast %347 : vector<64x48xf32> to vector<2x32x48xf32>
    %c0_163 = arith.constant 0 : index
    %c0_164 = arith.constant 0 : index
    %c0_165 = arith.constant 0 : index
    %349 = vector.load %arg18[%c0_163, %c0_164, %c0_165] : memref<2x32x48xf32, #tpu.memory_space<vmem>>, vector<2x32x48xf32>
    tpu.vector_store %arg18[%c0_163, %c0_164, %c0_165], %348 {strides = array<i32>} : memref<2x32x48xf32, #tpu.memory_space<vmem>>, vector<2x32x48xf32>,
    return
  }
  func.func @transform_0(%arg0: i32) -> (i32, i32, i32) {
    %c0_i32 = arith.constant 0 : i32
    %c0_i32_0 = arith.constant 0 : i32
    %c0_i32_1 = arith.constant 0 : i32
    return %arg0, %c0_i32, %c0_i32_0 : i32, i32, i32
  }
  func.func @transform_1(%arg0: i32) -> (i32, i32, i32) {
    %c0_i32 = arith.constant 0 : i32
    %c0_i32_0 = arith.constant 0 : i32
    %c0_i32_1 = arith.constant 0 : i32
    return %arg0, %c0_i32, %c0_i32_0 : i32, i32, i32
  }
  func.func @transform_2(%arg0: i32) -> (i32, i32, i32) {
    %c0_i32 = arith.constant 0 : i32
    %c0_i32_0 = arith.constant 0 : i32
    %c0_i32_1 = arith.constant 0 : i32
    return %arg0, %c0_i32, %c0_i32_0 : i32, i32, i32
  }
  func.func @transform_3(%arg0: i32) -> (i32, i32, i32, i32) {
    %c0_i32 = arith.constant 0 : i32
    %c0_i32_0 = arith.constant 0 : i32
    %c0_i32_1 = arith.constant 0 : i32
    %c0_i32_2 = arith.constant 0 : i32
    return %c0_i32, %arg0, %c0_i32_0, %c0_i32_1 : i32, i32, i32, i32
  }
  func.func @transform_4(%arg0: i32) -> (i32, i32, i32) {
    %c0_i32 = arith.constant 0 : i32
    %c0_i32_0 = arith.constant 0 : i32
    %c0_i32_1 = arith.constant 0 : i32
    %c0_i32_2 = arith.constant 0 : i32
    return %c0_i32, %c0_i32_0, %c0_i32_1 : i32, i32, i32
  }
  func.func @transform_5(%arg0: i32) -> (i32, i32) {
    %c0_i32 = arith.constant 0 : i32
    %c0_i32_0 = arith.constant 0 : i32
    %c0_i32_1 = arith.constant 0 : i32
    return %c0_i32, %c0_i32_0 : i32, i32
  }
  func.func @transform_6(%arg0: i32) -> (i32, i32) {
    %c0_i32 = arith.constant 0 : i32
    %c0_i32_0 = arith.constant 0 : i32
    %c0_i32_1 = arith.constant 0 : i32
    return %c0_i32, %c0_i32_0 : i32, i32
  }
  func.func @transform_7(%arg0: i32) -> (i32, i32) {
    %c0_i32 = arith.constant 0 : i32
    %c0_i32_0 = arith.constant 0 : i32
    %c0_i32_1 = arith.constant 0 : i32
    return %c0_i32, %c0_i32_0 : i32, i32
  }
  func.func @transform_8(%arg0: i32) -> (i32, i32) {
    %c0_i32 = arith.constant 0 : i32
    %c0_i32_0 = arith.constant 0 : i32
    %c0_i32_1 = arith.constant 0 : i32
    return %c0_i32, %c0_i32_0 : i32, i32
  }
  func.func @transform_9(%arg0: i32) -> (i32, i32) {
    %c0_i32 = arith.constant 0 : i32
    %c0_i32_0 = arith.constant 0 : i32
    %c0_i32_1 = arith.constant 0 : i32
    return %c0_i32, %c0_i32_0 : i32, i32
  }
  func.func @transform_10(%arg0: i32) -> (i32, i32) {
    %c0_i32 = arith.constant 0 : i32
    %c0_i32_0 = arith.constant 0 : i32
    %c0_i32_1 = arith.constant 0 : i32
    return %c0_i32, %c0_i32_0 : i32, i32
  }
  func.func @transform_11(%arg0: i32) -> (i32, i32) {
    %c0_i32 = arith.constant 0 : i32
    %c0_i32_0 = arith.constant 0 : i32
    %c0_i32_1 = arith.constant 0 : i32
    return %c0_i32, %c0_i32_0 : i32, i32
  }
  func.func @transform_12(%arg0: i32) -> (i32, i32) {
    %c0_i32 = arith.constant 0 : i32
    %c0_i32_0 = arith.constant 0 : i32
    %c0_i32_1 = arith.constant 0 : i32
    return %c0_i32, %c0_i32_0 : i32, i32
  }
  func.func @transform_13(%arg0: i32) -> (i32, i32) {
    %c0_i32 = arith.constant 0 : i32
    %c0_i32_0 = arith.constant 0 : i32
    %c0_i32_1 = arith.constant 0 : i32
    return %c0_i32, %c0_i32_0 : i32, i32
  }
  func.func @transform_14(%arg0: i32) -> (i32, i32) {
    %c0_i32 = arith.constant 0 : i32
    %c0_i32_0 = arith.constant 0 : i32
    %c0_i32_1 = arith.constant 0 : i32
    return %c0_i32, %c0_i32_0 : i32, i32
  }
  func.func @transform_15(%arg0: i32) -> (i32, i32) {
    %c0_i32 = arith.constant 0 : i32
    %c0_i32_0 = arith.constant 0 : i32
    %c0_i32_1 = arith.constant 0 : i32
    return %c0_i32, %c0_i32_0 : i32, i32
  }
  func.func @transform_16(%arg0: i32) -> (i32, i32) {
    %c0_i32 = arith.constant 0 : i32
    %c0_i32_0 = arith.constant 0 : i32
    %c0_i32_1 = arith.constant 0 : i32
    return %c0_i32, %c0_i32_0 : i32, i32
  }
  func.func @transform_17(%arg0: i32) -> (i32, i32, i32) {
    %c0_i32 = arith.constant 0 : i32
    %c0_i32_0 = arith.constant 0 : i32
    %c0_i32_1 = arith.constant 0 : i32
    return %arg0, %c0_i32, %c0_i32_0 : i32, i32, i32
  }
  func.func @transform_18(%arg0: i32) -> (i32, i32, i32) {
    %c0_i32 = arith.constant 0 : i32
    %c0_i32_0 = arith.constant 0 : i32
    %c0_i32_1 = arith.constant 0 : i32
    return %arg0, %c0_i32, %c0_i32_0 : i32, i32, i32
  }
}

</mosaic_0001>

<llo_original>
// kernel: pid_grounded_reasoning_forward.1
$region0: #{pid_grounded_reasoning_forward.1}
  #allocation0 [shape = 'u32[]', space=smem, size = 0x4, offset = 0x4, fixed_abs, tag = 'smem constant byte address 0x4 - core index']
  #allocation1 [shape = 'u32[144,128]{1,0:T(1,128)}', space=vmem, size = 0x12000, scoped, tag = 'internal scratch']
  %s0 = inlined_call_operand.hbm [shape: f32[2,32,48], index: 0, kind: input, shape index: {}]
  %s1 = inlined_call_operand.hbm [shape: f32[2,8,48], index: 1, kind: input, shape index: {}]
  %s2 = inlined_call_operand.vmem [shape: f32[2,32,3], index: 2, kind: input, shape index: {}]
  %s3 = inlined_call_operand.vmem [shape: f32[7,2,32,48], index: 3, kind: input, shape index: {}]
  %s4 = inlined_call_operand.vmem [shape: f32[5,48,48], index: 4, kind: input, shape index: {}]
  %s5 = inlined_call_operand.hbm [shape: f32[48,96], index: 5, kind: input, shape index: {}]
  %s6 = inlined_call_operand.hbm [shape: f32[48,144], index: 6, kind: input, shape index: {}]
  %s7 = inlined_call_operand.vmem [shape: f32[48,25], index: 7, kind: input, shape index: {}]
  %s8 = inlined_call_operand.vmem [shape: f32[3,25], index: 8, kind: input, shape index: {}]
  %s9 = inlined_call_operand.vmem [shape: f32[25,7], index: 9, kind: input, shape index: {}]
  %s10 = inlined_call_operand.hbm [shape: f32[10,48], index: 10, kind: input, shape index: {}]
  %s11 = inlined_call_operand.vmem [shape: f32[1,96], index: 11, kind: input, shape index: {}]
  %s12 = inlined_call_operand.hbm [shape: f32[1,144], index: 12, kind: input, shape index: {}]
  %s13 = inlined_call_operand.hbm [shape: f32[3,25], index: 13, kind: input, shape index: {}]
  %s14 = inlined_call_operand.hbm [shape: f32[3,7], index: 14, kind: input, shape index: {}]
  %s15 = inlined_call_operand.vmem [shape: f32[96,48], index: 15, kind: input, shape index: {}]
  %s16 = inlined_call_operand.vmem [shape: f32[256,48], index: 16, kind: input, shape index: {}]
  %s17 = inlined_call_operand.hbm [shape: f32[2,32,48], index: 17, kind: output, shape index: {0}]
  %s18 = inlined_call_operand.vmem [shape: f32[2,32,7], index: 18, kind: output, shape index: {1}]
  %19 = xla_tuple %s17, %s18
  %s20 = sld [smem:[#allocation0]]
  $region118: #{pid_grounded_reasoning_forward.1} parent=0
    _
  %s22 = ssub.s32 1, %s20
  %s23 = scalar_select 0, %s22, %s20
  $region1: #{pid_grounded_reasoning_forward.1} parent=0
    #allocation2 [shape = 'u8[32768]{0}', space=vmem, size = 0x8000, scoped, tag = 'input window, operand 0, single buffered']
    #allocation3 [shape = 's32[1]{0}', space=sflag, size = 0x4, scoped, tag = 'scoped memory for pid_grounded_reasoning_forward.1']
    #allocation4 [shape = 's32[1]{0}', space=sflag, size = 0x4, scoped, tag = 'scoped memory for pid_grounded_reasoning_forward.1']
    #allocation5 [shape = 'u8[8192]{0}', space=vmem, size = 0x2000, scoped, tag = 'input window, operand 1, single buffered']
    #allocation6 [shape = 's32[1]{0}', space=sflag, size = 0x4, scoped, tag = 'scoped memory for pid_grounded_reasoning_forward.1']
    #allocation7 [shape = 'u8[24576]{0}', space=vmem, size = 0x6000, scoped, tag = 'input window, operand 5, single buffered']
    #allocation8 [shape = 'u8[49152]{0}', space=vmem, size = 0xc000, scoped, tag = 'input window, operand 6, single buffered']
    #allocation9 [shape = 's32[1]{0}', space=sflag, size = 0x4, scoped, tag = 'scoped memory for pid_grounded_reasoning_forward.1']
    #allocation10 [shape = 'u8[8192]{0}', space=vmem, size = 0x2000, scoped, tag = 'input window, operand 10, single buffered']
    #allocation11 [shape = 'u8[1024]{0}', space=vmem, size = 0x400, scoped, tag = 'input window, operand 12, single buffered']
    #allocation12 [shape = 's32[1]{0}', space=sflag, size = 0x4, scoped, tag = 'scoped memory for pid_grounded_reasoning_forward.1']
    #allocation13 [shape = 'u8[2048]{0}', space=vmem, size = 0x800, scoped, tag = 'input window, operand 13, single buffered']
    #allocation14 [shape = 'u8[2048]{0}', space=vmem, size = 0x800, scoped, tag = 'input window, operand 14, single buffered']
    #allocation15 [shape = 's32[1]{0}', space=sflag, size = 0x4, scoped, tag = 'scoped memory for pid_grounded_reasoning_forward.1']
    #allocation16 [shape = 'u8[32768]{0}', space=vmem, size = 0x8000, scoped, tag = 'output window, operand 0, single buffered']
    %24 = vsyncpa [#allocation3], 0
    %25 = vsyncpa [#allocation6], 0
    %26 = vsyncpa [#allocation9], 0
    %27 = vsyncpa [#allocation12], 0
    %28 = vsyncpa [#allocation15], 0
    %29 = vsyncpa [#allocation4], 0
    // Predicated region
    $region2: #{pid_grounded_reasoning_forward.1} parent=1 // pred_check
      _
    $region3: #{pid_grounded_reasoning_forward.1} parent=1 // pred_check_branch
      %31 = sbr.rel (0) target = $region5
    $region4: #{pid_grounded_reasoning_forward.1} parent=1 // pred_region
      %s33 = ssub.s32 1024, 1024
      %34 = vsyncadd [#allocation3], %s33
      %s35 = sshll.u32 [#allocation2], 4
      %s36 = int_to_ptr.vmem [resolvable:$true] %s35
      %41 = dma.hbm_to_vmem [thread:$0]  %s0, 1024, %s36, [#allocation3], 128, 128, 8
    $region5: #{pid_grounded_reasoning_forward.1} parent=1 // pred_fallthru
      _
    // Predicated region
    $region6: #{pid_grounded_reasoning_forward.1} parent=1 // pred_check
      _
    $region7: #{pid_grounded_reasoning_forward.1} parent=1 // pred_check_branch
      %43 = sbr.rel (0) target = $region9
    $region8: #{pid_grounded_reasoning_forward.1} parent=1 // pred_region
      %s45 = ssub.s32 256, 256
      %46 = vsyncadd [#allocation6], %s45
      %s47 = sshll.u32 [#allocation5], 4
      %s48 = int_to_ptr.vmem [resolvable:$true] %s47
      %53 = dma.hbm_to_vmem [thread:$0]  %s1, 256, %s48, [#allocation6], 128, 128, 8
    $region9: #{pid_grounded_reasoning_forward.1} parent=1 // pred_fallthru
      _
    // Predicated region
    $region10: #{pid_grounded_reasoning_forward.1} parent=1 // pred_check
      _
    $region11: #{pid_grounded_reasoning_forward.1} parent=1 // pred_check_branch
      %55 = sbr.rel (0) target = $region13
    $region12: #{pid_grounded_reasoning_forward.1} parent=1 // pred_region
      _
    $region13: #{pid_grounded_reasoning_forward.1} parent=1 // pred_fallthru
      _
    // Predicated region
    $region14: #{pid_grounded_reasoning_forward.1} parent=1 // pred_check
      _
    $region15: #{pid_grounded_reasoning_forward.1} parent=1 // pred_check_branch
      %57 = sbr.rel (0) target = $region17
    $region16: #{pid_grounded_reasoning_forward.1} parent=1 // pred_region
      _
    $region17: #{pid_grounded_reasoning_forward.1} parent=1 // pred_fallthru
      _
    // Predicated region
    $region18: #{pid_grounded_reasoning_forward.1} parent=1 // pred_check
      _
    $region19: #{pid_grounded_reasoning_forward.1} parent=1 // pred_check_branch
      %59 = sbr.rel (0) target = $region21
    $region20: #{pid_grounded_reasoning_forward.1} parent=1 // pred_region
      _
    $region21: #{pid_grounded_reasoning_forward.1} parent=1 // pred_fallthru
      _
    // Predicated region
    $region22: #{pid_grounded_reasoning_forward.1} parent=1 // pred_check
      _
    $region23: #{pid_grounded_reasoning_forward.1} parent=1 // pred_check_branch
      %61 = sbr.rel (0) target = $region25
    $region24: #{pid_grounded_reasoning_forward.1} parent=1 // pred_region
      %s63 = ssub.s32 768, 768
      %64 = vsyncadd [#allocation6], %s63
      %s65 = sshll.u32 [#allocation7], 4
      %s66 = int_to_ptr.vmem [resolvable:$true] %s65
      %71 = dma.hbm_to_vmem [thread:$0]  %s5, 768, %s66, [#allocation6], 128, 128, 8
    $region25: #{pid_grounded_reasoning_forward.1} parent=1 // pred_fallthru
      _
    // Predicated region
    $region26: #{pid_grounded_reasoning_forward.1} parent=1 // pred_check
      _
    $region27: #{pid_grounded_reasoning_forward.1} parent=1 // pred_check_branch
      %73 = sbr.rel (0) target = $region29
    $region28: #{pid_grounded_reasoning_forward.1} parent=1 // pred_region
      %s75 = ssub.s32 1536, 1536
      %76 = vsyncadd [#allocation9], %s75
      %s77 = sshll.u32 [#allocation8], 4
      %s78 = int_to_ptr.vmem [resolvable:$true] %s77
      %83 = dma.hbm_to_vmem [thread:$0]  %s6, 1536, %s78, [#allocation9], 256, 256, 16
    $region29: #{pid_grounded_reasoning_forward.1} parent=1 // pred_fallthru
      _
    // Predicated region
    $region30: #{pid_grounded_reasoning_forward.1} parent=1 // pred_check
      _
    $region31: #{pid_grounded_reasoning_forward.1} parent=1 // pred_check_branch
      %85 = sbr.rel (0) target = $region33
    $region32: #{pid_grounded_reasoning_forward.1} parent=1 // pred_region
      _
    $region33: #{pid_grounded_reasoning_forward.1} parent=1 // pred_fallthru
      _
    // Predicated region
    $region34: #{pid_grounded_reasoning_forward.1} parent=1 // pred_check
      _
    $region35: #{pid_grounded_reasoning_forward.1} parent=1 // pred_check_branch
      %87 = sbr.rel (0) target = $region37
    $region36: #{pid_grounded_reasoning_forward.1} parent=1 // pred_region
      _
    $region37: #{pid_grounded_reasoning_forward.1} parent=1 // pred_fallthru
      _
    // Predicated region
    $region38: #{pid_grounded_reasoning_forward.1} parent=1 // pred_check
      _
    $region39: #{pid_grounded_reasoning_forward.1} parent=1 // pred_check_branch
      %89 = sbr.rel (0) target = $region41
    $region40: #{pid_grounded_reasoning_forward.1} parent=1 // pred_region
      _
    $region41: #{pid_grounded_reasoning_forward.1} parent=1 // pred_fallthru
      _
    // Predicated region
    $region42: #{pid_grounded_reasoning_forward.1} parent=1 // pred_check
      _
    $region43: #{pid_grounded_reasoning_forward.1} parent=1 // pred_check_branch
      %91 = sbr.rel (0) target = $region45
    $region44: #{pid_grounded_reasoning_forward.1} parent=1 // pred_region
      %s93 = ssub.s32 256, 256
      %94 = vsyncadd [#allocation9], %s93
      %s95 = sshll.u32 [#allocation10], 4
      %s96 = int_to_ptr.vmem [resolvable:$true] %s95
      %101 = dma.hbm_to_vmem [thread:$0]  %s10, 256, %s96, [#allocation9], 128, 128, 8
    $region45: #{pid_grounded_reasoning_forward.1} parent=1 // pred_fallthru
      _
    // Predicated region
    $region46: #{pid_grounded_reasoning_forward.1} parent=1 // pred_check
      _
    $region47: #{pid_grounded_reasoning_forward.1} parent=1 // pred_check_branch
      %103 = sbr.rel (0) target = $region49
    $region48: #{pid_grounded_reasoning_forward.1} parent=1 // pred_region
      _
    $region49: #{pid_grounded_reasoning_forward.1} parent=1 // pred_fallthru
      _
    // Predicated region
    $region50: #{pid_grounded_reasoning_forward.1} parent=1 // pred_check
      _
    $region51: #{pid_grounded_reasoning_forward.1} parent=1 // pred_check_branch
      %105 = sbr.rel (0) target = $region53
    $region52: #{pid_grounded_reasoning_forward.1} parent=1 // pred_region
      %s107 = ssub.s32 32, 32
      %108 = vsyncadd [#allocation12], %s107
      %s110 = sshll.u32 [#allocation11], 4
      %s111 = int_to_ptr.vmem [resolvable:$true] %s110
      %113 = dma.hbm_to_vmem [thread:$0]  %s12, 32, %s111, [#allocation12]
    $region53: #{pid_grounded_reasoning_forward.1} parent=1 // pred_fallthru
      _
    // Predicated region
    $region54: #{pid_grounded_reasoning_forward.1} parent=1 // pred_check
      _
    $region55: #{pid_grounded_reasoning_forward.1} parent=1 // pred_check_branch
      %115 = sbr.rel (0) target = $region57
    $region56: #{pid_grounded_reasoning_forward.1} parent=1 // pred_region
      %s117 = ssub.s32 64, 64
      %118 = vsyncadd [#allocation12], %s117
      %s120 = sshll.u32 [#allocation13], 4
      %s121 = int_to_ptr.vmem [resolvable:$true] %s120
      %123 = dma.hbm_to_vmem [thread:$0]  %s13, 64, %s121, [#allocation12]
    $region57: #{pid_grounded_reasoning_forward.1} parent=1 // pred_fallthru
      _
    // Predicated region
    $region58: #{pid_grounded_reasoning_forward.1} parent=1 // pred_check
      _
    $region59: #{pid_grounded_reasoning_forward.1} parent=1 // pred_check_branch
      %125 = sbr.rel (0) target = $region61
    $region60: #{pid_grounded_reasoning_forward.1} parent=1 // pred_region
      %s127 = ssub.s32 64, 64
      %128 = vsyncadd [#allocation15], %s127
      %s130 = sshll.u32 [#allocation14], 4
      %s131 = int_to_ptr.vmem [resolvable:$true] %s130
      %133 = dma.hbm_to_vmem [thread:$0]  %s14, 64, %s131, [#allocation15]
    $region61: #{pid_grounded_reasoning_forward.1} parent=1 // pred_fallthru
      _
    // Predicated region
    $region62: #{pid_grounded_reasoning_forward.1} parent=1 // pred_check
      _
    $region63: #{pid_grounded_reasoning_forward.1} parent=1 // pred_check_branch
      %135 = sbr.rel (0) target = $region65
    $region64: #{pid_grounded_reasoning_forward.1} parent=1 // pred_region
      _
    $region65: #{pid_grounded_reasoning_forward.1} parent=1 // pred_fallthru
      _
    // Predicated region
    $region66: #{pid_grounded_reasoning_forward.1} parent=1 // pred_check
      _
    $region67: #{pid_grounded_reasoning_forward.1} parent=1 // pred_check_branch
      %137 = sbr.rel (0) target = $region69
    $region68: #{pid_grounded_reasoning_forward.1} parent=1 // pred_region
      _
    $region69: #{pid_grounded_reasoning_forward.1} parent=1 // pred_fallthru
      _
    // Predicated region
    $region70: #{pid_grounded_reasoning_forward.1} parent=1 // pred_check
      _
    $region71: #{pid_grounded_reasoning_forward.1} parent=1 // pred_check_branch
      %139 = sbr.rel (0) target = $region73
    $region72: #{pid_grounded_reasoning_forward.1} parent=1 // pred_region
      %140 = dma.done [#allocation3], 1024
    $region73: #{pid_grounded_reasoning_forward.1} parent=1 // pred_fallthru
      _
    // Predicated region
    $region74: #{pid_grounded_reasoning_forward.1} parent=1 // pred_check
      _
    $region75: #{pid_grounded_reasoning_forward.1} parent=1 // pred_check_branch
      %142 = sbr.rel (0) target = $region77
    $region76: #{pid_grounded_reasoning_forward.1} parent=1 // pred_region
      %143 = dma.done [#allocation6], 256
    $region77: #{pid_grounded_reasoning_forward.1} parent=1 // pred_fallthru
      _
    // Predicated region
    $region78: #{pid_grounded_reasoning_forward.1} parent=1 // pred_check
      _
    $region79: #{pid_grounded_reasoning_forward.1} parent=1 // pred_check_branch
      %145 = sbr.rel (0) target = $region81
    $region80: #{pid_grounded_reasoning_forward.1} parent=1 // pred_region
      %146 = dma.done [#allocation6], 768
    $region81: #{pid_grounded_reasoning_forward.1} parent=1 // pred_fallthru
      _
    // Predicated region
    $region82: #{pid_grounded_reasoning_forward.1} parent=1 // pred_check
      _
    $region83: #{pid_grounded_reasoning_forward.1} parent=1 // pred_check_branch
      %148 = sbr.rel (0) target = $region85
    $region84: #{pid_grounded_reasoning_forward.1} parent=1 // pred_region
      %149 = dma.done [#allocation9], 1536
    $region85: #{pid_grounded_reasoning_forward.1} parent=1 // pred_fallthru
      _
    // Predicated region
    $region86: #{pid_grounded_reasoning_forward.1} parent=1 // pred_check
      _
    $region87: #{pid_grounded_reasoning_forward.1} parent=1 // pred_check_branch
      %151 = sbr.rel (0) target = $region89
    $region88: #{pid_grounded_reasoning_forward.1} parent=1 // pred_region
      %152 = dma.done [#allocation9], 256
    $region89: #{pid_grounded_reasoning_forward.1} parent=1 // pred_fallthru
      _
    // Predicated region
    $region90: #{pid_grounded_reasoning_forward.1} parent=1 // pred_check
      _
    $region91: #{pid_grounded_reasoning_forward.1} parent=1 // pred_check_branch
      %154 = sbr.rel (0) target = $region93
    $region92: #{pid_grounded_reasoning_forward.1} parent=1 // pred_region
      %155 = dma.done [#allocation12], 32
    $region93: #{pid_grounded_reasoning_forward.1} parent=1 // pred_fallthru
      _
    // Predicated region
    $region94: #{pid_grounded_reasoning_forward.1} parent=1 // pred_check
      _
    $region95: #{pid_grounded_reasoning_forward.1} parent=1 // pred_check_branch
      %157 = sbr.rel (0) target = $region97
    $region96: #{pid_grounded_reasoning_forward.1} parent=1 // pred_region
      %158 = dma.done [#allocation12], 64
    $region97: #{pid_grounded_reasoning_forward.1} parent=1 // pred_fallthru
      _
    // Predicated region
    $region98: #{pid_grounded_reasoning_forward.1} parent=1 // pred_check
      _
    $region99: #{pid_grounded_reasoning_forward.1} parent=1 // pred_check_branch
      %160 = sbr.rel (0) target = $region101
    $region100: #{pid_grounded_reasoning_forward.1} parent=1 // pred_region
      %161 = dma.done [#allocation15], 64
    $region101: #{pid_grounded_reasoning_forward.1} parent=1 // pred_fallthru
      _
    %v162 = vld [vmem:[#allocation2] sm:$0xff]
    %v163 = vld [vmem:[#allocation2 + $0x8] sm:$0xff]
    %v164 = vld [vmem:[#allocation2 + $0x10] sm:$0xff]
    %v165 = vld [vmem:[#allocation2 + $0x18] sm:$0xff]
    %v166 = vld [vmem:[#allocation2 + $0x20] sm:$0xff]
    %v167 = vld [vmem:[#allocation2 + $0x28] sm:$0xff]
    %v168 = vld [vmem:[#allocation2 + $0x30] sm:$0xff]
    %v169 = vld [vmem:[#allocation2 + $0x38] sm:$0xff]
    %v170 = vld [vmem:[#allocation5] sm:$0xff]
    %v171 = vld [vmem:[#allocation5 + $0x8] sm:$0xff]
    %v172 = vld [vmem:[%s4] sm:$0xff]
    %v173 = vld [vmem:[%s4 + $0x8] sm:$0xff]
    %v174 = vld [vmem:[%s4 + $0x10] sm:$0xff]
    %v175 = vld [vmem:[%s4 + $0x18] sm:$0xff]
    %v176 = vld [vmem:[%s4 + $0x20] sm:$0xff]
    %v177 = vld [vmem:[%s4 + $0x28] sm:$0xff]
    %v178 = vld [vmem:[#allocation10] sm:$0x1]
    %v179 = vlaneseq
    %v180 = vshrl.u32 %v179, 7
    %v181 = vsub.s32 0, %v180
    %v182 = vrot.slane %v178, %v181
    %vm183 = vcmask 392192
    %v185 = vsel %vm183, %v162, 0
    %v188 = vsel %vm183, %v163, 0
    %v191 = vsel %vm183, %v164, 0
    %v194 = vsel %vm183, %v165, 0
    %v197 = vsel %vm183, %v166, 0
    %v200 = vsel %vm183, %v167, 0
    %v203 = vsel %vm183, %v168, 0
    %v206 = vsel %vm183, %v169, 0
    %208 = vmatprep.subr.mxu0 0.0
    %209 = vmatpush1.msra.mxu0 0.0
    %210 = vmatprep.subr.mxu0 0.0
    %211 = vmatpush1.msra.mxu0 0.0
    %212 = vmatprep.subr.mxu0 0.0
    %213 = vmatpush1.msra.mxu0 0.0
    %214 = vmatprep.subr.mxu0 0.0
    %215 = vmatpush1.msra.mxu0 0.0
    %216 = vmatprep.subr.mxu0 0.0
    %217 = vmatpush1.msra.mxu0 0.0
    %218 = vmatprep.subr.mxu0 0.0
    %219 = vmatpush1.msra.mxu0 0.0
    %220 = vmatprep.subr.mxu0 0.0
    %221 = vmatpush1.msra.mxu0 0.0
    %222 = vmatprep.subr.mxu0 0.0
    %223 = vmatpush1.msra.mxu0 0.0
    %224 = vmatprep.subr.mxu0 0.0
    %225 = vmatpush1.msra.mxu0 0.0
    %226 = vmatprep.subr.mxu0 0.0
    %227 = vmatpush1.msra.mxu0 0.0
    %228 = vmatprep.subr.mxu0 0.0
    %229 = vmatpush1.msra.mxu0 %v177
    %230 = vmatprep.subr.mxu0 0.0
    %231 = vmatpush1.msra.mxu0 %v176
    %232 = vmatprep.subr.mxu0 0.0
    %233 = vmatpush1.msra.mxu0 %v175
    %234 = vmatprep.subr.mxu0 0.0
    %235 = vmatpush1.msra.mxu0 %v174
    %236 = vmatprep.subr.mxu0 0.0
    %237 = vmatpush1.msra.mxu0 %v173
    %238 = vmatprep.subr.mxu0 0.0
    %239 = vmatpush1.msra.mxu0 %v172
    %240 = vmatprep.subr.mxu0 0.0
    %241 = vmatpush2.msra.mxu0 0.0
    %242 = vmatprep.subr.mxu0 0.0
    %243 = vmatpush2.msra.mxu0 0.0
    %244 = vmatprep.subr.mxu0 0.0
    %245 = vmatpush2.msra.mxu0 0.0
    %246 = vmatprep.subr.mxu0 0.0
    %247 = vmatpush2.msra.mxu0 0.0
    %248 = vmatprep.subr.mxu0 0.0
    %249 = vmatpush2.msra.mxu0 0.0
    %250 = vmatprep.subr.mxu0 0.0
    %251 = vmatpush2.msra.mxu0 0.0
    %252 = vmatprep.subr.mxu0 0.0
    %253 = vmatpush2.msra.mxu0 0.0
    %254 = vmatprep.subr.mxu0 0.0
    %255 = vmatpush2.msra.mxu0 0.0
    %256 = vmatprep.subr.mxu0 0.0
    %257 = vmatpush2.msra.mxu0 0.0
    %258 = vmatprep.subr.mxu0 0.0
    %259 = vmatpush2.msra.mxu0 0.0
    %260 = vmatprep.subr.mxu0 0.0
    %261 = vmatpush2.msra.mxu0 0.0
    %262 = vmatprep.subr.mxu0 0.0
    %263 = vmatpush2.msra.mxu0 0.0
    %264 = vmatprep.subr.mxu0 0.0
    %265 = vmatpush2.msra.mxu0 0.0
    %266 = vmatprep.subr.mxu0 0.0
    %267 = vmatpush2.msra.mxu0 0.0
    %268 = vmatprep.subr.mxu0 0.0
    %269 = vmatpush2.msra.mxu0 0.0
    %270 = vmatprep.subr.mxu0 0.0
    %271 = vmatpush2.msra.mxu0 0.0
    %272 = vmatprep.mubr.f32.mxu0 0.0
    %273 = vmatmul.mubr.f32.gmra.mxu0 %v185
    %v274 = vpop.f32.mrf.mxu0
    %v275 = vadd.f32 %v182, %v274
    %v276 = vpop.f32.mrf.mxu0
    %277 = vmatprep.mubr.f32.mxu0 0.0
    %278 = vmatmul.mubr.f32.gmra.mxu0 %v188
    %v279 = vpop.f32.mrf.mxu0
    %v280 = vadd.f32 %v182, %v279
    %v281 = vpop.f32.mrf.mxu0
    %282 = vmatprep.mubr.f32.mxu0 0.0
    %283 = vmatmul.mubr.f32.gmra.mxu0 %v191
    %v284 = vpop.f32.mrf.mxu0
    %v285 = vadd.f32 %v182, %v284
    %v286 = vpop.f32.mrf.mxu0
    %287 = vmatprep.mubr.f32.mxu0 0.0
    %288 = vmatmul.mubr.f32.gmra.mxu0 %v194
    %v289 = vpop.f32.mrf.mxu0
    %v290 = vadd.f32 %v182, %v289
    %v291 = vpop.f32.mrf.mxu0
    %292 = vmatprep.mubr.f32.mxu0 0.0
    %293 = vmatmul.mubr.f32.gmra.mxu0 %v197
    %v294 = vpop.f32.mrf.mxu0
    %v295 = vadd.f32 %v182, %v294
    %v296 = vpop.f32.mrf.mxu0
    %297 = vmatprep.mubr.f32.mxu0 0.0
    %298 = vmatmul.mubr.f32.gmra.mxu0 %v200
    %v299 = vpop.f32.mrf.mxu0
    %v300 = vadd.f32 %v182, %v299
    %v301 = vpop.f32.mrf.mxu0
    %302 = vmatprep.mubr.f32.mxu0 0.0
    %303 = vmatmul.mubr.f32.gmra.mxu0 %v203
    %v304 = vpop.f32.mrf.mxu0
    %v305 = vadd.f32 %v182, %v304
    %v306 = vpop.f32.mrf.mxu0
    %307 = vmatprep.mubr.f32.mxu0 0.0
    %308 = vmatmul.mubr.f32.gmra.mxu0 %v206
    %v309 = vpop.f32.mrf.mxu0
    %v310 = vadd.f32 %v182, %v309
    %v311 = vpop.f32.mrf.mxu0
    %312 = vdwg.mxu0
    %v313 = vld [vmem:[#allocation7] sm:$0xff]
    %v314 = vld [vmem:[#allocation7 + $0x8] sm:$0xff]
    %v315 = vld [vmem:[#allocation7 + $0x10] sm:$0xff]
    %v316 = vld [vmem:[#allocation7 + $0x18] sm:$0xff]
    %v317 = vld [vmem:[#allocation7 + $0x20] sm:$0xff]
    %v318 = vld [vmem:[#allocation7 + $0x28] sm:$0xff]
    %v319 = vld [vmem:[%s11] sm:$0x1]
    %v321 = vlaneseq
    %v322 = vshrl.u32 %v321, 7
    %v323 = vsub.s32 0, %v322
    %v324 = vrot.slane %v319, %v323
    %v327 = vsel %vm183, %v170, 0
    %v330 = vsel %vm183, %v171, 0
    %332 = vmatprep.subr.mxu0 0.0
    %333 = vmatpush1.msra.mxu0 0.0
    %334 = vmatprep.subr.mxu0 0.0
    %335 = vmatpush1.msra.mxu0 0.0
    %336 = vmatprep.subr.mxu0 0.0
    %337 = vmatpush1.msra.mxu0 0.0
    %338 = vmatprep.subr.mxu0 0.0
    %339 = vmatpush1.msra.mxu0 0.0
    %340 = vmatprep.subr.mxu0 0.0
    %341 = vmatpush1.msra.mxu0 0.0
    %342 = vmatprep.subr.mxu0 0.0
    %343 = vmatpush1.msra.mxu0 0.0
    %344 = vmatprep.subr.mxu0 0.0
    %345 = vmatpush1.msra.mxu0 0.0
    %346 = vmatprep.subr.mxu0 0.0
    %347 = vmatpush1.msra.mxu0 0.0
    %348 = vmatprep.subr.mxu0 0.0
    %349 = vmatpush1.msra.mxu0 0.0
    %350 = vmatprep.subr.mxu0 0.0
    %351 = vmatpush1.msra.mxu0 0.0
    %352 = vmatprep.subr.mxu0 0.0
    %353 = vmatpush1.msra.mxu0 %v318
    %354 = vmatprep.subr.mxu0 0.0
    %355 = vmatpush1.msra.mxu0 %v317
    %356 = vmatprep.subr.mxu0 0.0
    %357 = vmatpush1.msra.mxu0 %v316
    %358 = vmatprep.subr.mxu0 0.0
    %359 = vmatpush1.msra.mxu0 %v315
    %360 = vmatprep.subr.mxu0 0.0
    %361 = vmatpush1.msra.mxu0 %v314
    %362 = vmatprep.subr.mxu0 0.0
    %363 = vmatpush1.msra.mxu0 %v313
    %364 = vmatprep.subr.mxu0 0.0
    %365 = vmatpush2.msra.mxu0 0.0
    %366 = vmatprep.subr.mxu0 0.0
    %367 = vmatpush2.msra.mxu0 0.0
    %368 = vmatprep.subr.mxu0 0.0
    %369 = vmatpush2.msra.mxu0 0.0
    %370 = vmatprep.subr.mxu0 0.0
    %371 = vmatpush2.msra.mxu0 0.0
    %372 = vmatprep.subr.mxu0 0.0
    %373 = vmatpush2.msra.mxu0 0.0
    %374 = vmatprep.subr.mxu0 0.0
    %375 = vmatpush2.msra.mxu0 0.0
    %376 = vmatprep.subr.mxu0 0.0
    %377 = vmatpush2.msra.mxu0 0.0
    %378 = vmatprep.subr.mxu0 0.0
    %379 = vmatpush2.msra.mxu0 0.0
    %380 = vmatprep.subr.mxu0 0.0
    %381 = vmatpush2.msra.mxu0 0.0
    %382 = vmatprep.subr.mxu0 0.0
    %383 = vmatpush2.msra.mxu0 0.0
    %384 = vmatprep.subr.mxu0 0.0
    %385 = vmatpush2.msra.mxu0 0.0
    %386 = vmatprep.subr.mxu0 0.0
    %387 = vmatpush2.msra.mxu0 0.0
    %388 = vmatprep.subr.mxu0 0.0
    %389 = vmatpush2.msra.mxu0 0.0
    %390 = vmatprep.subr.mxu0 0.0
    %391 = vmatpush2.msra.mxu0 0.0
    %392 = vmatprep.subr.mxu0 0.0
    %393 = vmatpush2.msra.mxu0 0.0
    %394 = vmatprep.subr.mxu0 0.0
    %395 = vmatpush2.msra.mxu0 0.0
    %396 = vmatprep.mubr.f32.mxu0 0.0
    %397 = vmatmul.mubr.f32.gmra.mxu0 %v327
    %v398 = vpop.f32.mrf.mxu0
    %v399 = vadd.f32 %v324, %v398
    %v400 = vpop.f32.mrf.mxu0
    %401 = vmatprep.mubr.f32.mxu0 0.0
    %402 = vmatmul.mubr.f32.gmra.mxu0 %v330
    %v403 = vpop.f32.mrf.mxu0
    %v404 = vadd.f32 %v324, %v403
    %v405 = vpop.f32.mrf.mxu0
    %406 = vdwg.mxu0
    %v407 = vld [vmem:[%s15] sm:$0xff]
    %v408 = vld [vmem:[%s15 + $0x8] sm:$0xff]
    %v409 = vld [vmem:[%s15 + $0x10] sm:$0xff]
    %v410 = vld [vmem:[%s15 + $0x18] sm:$0xff]
    %v411 = vld [vmem:[%s15 + $0x20] sm:$0xff]
    %v412 = vld [vmem:[%s15 + $0x28] sm:$0xff]
    %v413 = vld [vmem:[%s15 + $0x30] sm:$0xff]
    %v414 = vld [vmem:[%s15 + $0x38] sm:$0xff]
    %v415 = vld [vmem:[%s15 + $0x40] sm:$0xff]
    %v416 = vld [vmem:[%s15 + $0x48] sm:$0xff]
    %v417 = vld [vmem:[%s15 + $0x50] sm:$0xff]
    %v418 = vld [vmem:[%s15 + $0x58] sm:$0xff]
    %v419 = vmul.f32 %v399, %v407
    %v420 = vmul.f32 %v399, %v408
    %v421 = vmul.f32 %v399, %v409
    %v422 = vmul.f32 %v399, %v410
    %v423 = vmul.f32 %v399, %v411
    %v424 = vmul.f32 %v399, %v412
    %v425 = vmul.f32 %v399, %v413
    %v426 = vmul.f32 %v399, %v414
    %v427 = vmul.f32 %v399, %v415
    %v428 = vmul.f32 %v399, %v416
    %v429 = vmul.f32 %v399, %v417
    %v430 = vmul.f32 %v399, %v418
    %v432 = vsel %vm183, %v275, 0
    %v435 = vsel %vm183, %v280, 0
    %v438 = vsel %vm183, %v285, 0
    %v441 = vsel %vm183, %v290, 0
    %v444 = vsel %vm183, %v419, 0
    %v447 = vsel %vm183, %v420, 0
    %v450 = vsel %vm183, %v421, 0
    %v453 = vsel %vm183, %v422, 0
    %v456 = vsel %vm183, %v423, 0
    %v459 = vsel %vm183, %v424, 0
    %v462 = vsel %vm183, %v425, 0
    %v465 = vsel %vm183, %v426, 0
    %v468 = vsel %vm183, %v427, 0
    %v471 = vsel %vm183, %v428, 0
    %v474 = vsel %vm183, %v429, 0
    %v477 = vsel %vm183, %v430, 0
    %479 = vmatprep.subr.mxu0 0.0
    %480 = vmatpush1.xpose.msra.mxu0 0.0
    %481 = vmatprep.subr.mxu0 0.0
    %482 = vmatpush1.xpose.msra.mxu0 0.0
    %483 = vmatprep.subr.mxu0 0.0
    %484 = vmatpush1.xpose.msra.mxu0 0.0
    %485 = vmatprep.subr.mxu0 0.0
    %486 = vmatpush1.xpose.msra.mxu0 0.0
    %487 = vmatprep.subr.mxu0 0.0
    %488 = vmatpush1.xpose.msra.mxu0 %v477
    %489 = vmatprep.subr.mxu0 0.0
    %490 = vmatpush1.xpose.msra.mxu0 %v474
    %491 = vmatprep.subr.mxu0 0.0
    %492 = vmatpush1.xpose.msra.mxu0 %v471
    %493 = vmatprep.subr.mxu0 0.0
    %494 = vmatpush1.xpose.msra.mxu0 %v468
    %495 = vmatprep.subr.mxu0 0.0
    %496 = vmatpush1.xpose.msra.mxu0 %v465
    %497 = vmatprep.subr.mxu0 0.0
    %498 = vmatpush1.xpose.msra.mxu0 %v462
    %499 = vmatprep.subr.mxu0 0.0
    %500 = vmatpush1.xpose.msra.mxu0 %v459
    %501 = vmatprep.subr.mxu0 0.0
    %502 = vmatpush1.xpose.msra.mxu0 %v456
    %503 = vmatprep.subr.mxu0 0.0
    %504 = vmatpush1.xpose.msra.mxu0 %v453
    %505 = vmatprep.subr.mxu0 0.0
    %506 = vmatpush1.xpose.msra.mxu0 %v450
    %507 = vmatprep.subr.mxu0 0.0
    %508 = vmatpush1.xpose.msra.mxu0 %v447
    %509 = vmatprep.subr.mxu0 0.0
    %510 = vmatpush1.xpose.msra.mxu0 %v444
    %511 = vmatprep.subr.mxu0 0.0
    %512 = vmatpush2.xpose.msra.mxu0 0.0
    %513 = vmatprep.subr.mxu0 0.0
    %514 = vmatpush2.xpose.msra.mxu0 0.0
    %515 = vmatprep.subr.mxu0 0.0
    %516 = vmatpush2.xpose.msra.mxu0 0.0
    %517 = vmatprep.subr.mxu0 0.0
    %518 = vmatpush2.xpose.msra.mxu0 0.0
    %519 = vmatprep.subr.mxu0 0.0
    %520 = vmatpush2.xpose.msra.mxu0 0.0
    %521 = vmatprep.subr.mxu0 0.0
    %522 = vmatpush2.xpose.msra.mxu0 0.0
    %523 = vmatprep.subr.mxu0 0.0
    %524 = vmatpush2.xpose.msra.mxu0 0.0
    %525 = vmatprep.subr.mxu0 0.0
    %526 = vmatpush2.xpose.msra.mxu0 0.0
    %527 = vmatprep.subr.mxu0 0.0
    %528 = vmatpush2.xpose.msra.mxu0 0.0
    %529 = vmatprep.subr.mxu0 0.0
    %530 = vmatpush2.xpose.msra.mxu0 0.0
    %531 = vmatprep.subr.mxu0 0.0
    %532 = vmatpush2.xpose.msra.mxu0 0.0
    %533 = vmatprep.subr.mxu0 0.0
    %534 = vmatpush2.xpose.msra.mxu0 0.0
    %535 = vmatprep.subr.mxu0 0.0
    %536 = vmatpush2.xpose.msra.mxu0 0.0
    %537 = vmatprep.subr.mxu0 0.0
    %538 = vmatpush2.xpose.msra.mxu0 0.0
    %539 = vmatprep.subr.mxu0 0.0
    %540 = vmatpush2.xpose.msra.mxu0 0.0
    %541 = vmatprep.subr.mxu0 0.0
    %542 = vmatpush2.xpose.msra.mxu0 0.0
    %543 = vmatprep.mubr.f32.mxu0 0.0
    %544 = vmatmul.mubr.f32.gmra.mxu0 %v432
    %v545 = vpop.f32.mrf.mxu0
    %v546 = vadd.f32 0.0, %v545
    %v547 = vpop.f32.mrf.mxu0
    %548 = vmatprep.mubr.f32.mxu0 0.0
    %549 = vmatmul.mubr.f32.gmra.mxu0 %v435
    %v550 = vpop.f32.mrf.mxu0
    %v551 = vadd.f32 0.0, %v550
    %v552 = vpop.f32.mrf.mxu0
    %553 = vmatprep.mubr.f32.mxu0 0.0
    %554 = vmatmul.mubr.f32.gmra.mxu0 %v438
    %v555 = vpop.f32.mrf.mxu0
    %v556 = vadd.f32 0.0, %v555
    %v557 = vpop.f32.mrf.mxu0
    %558 = vmatprep.mubr.f32.mxu0 0.0
    %559 = vmatmul.mubr.f32.gmra.mxu0 %v441
    %v560 = vpop.f32.mrf.mxu0
    %v561 = vadd.f32 0.0, %v560
    %v562 = vpop.f32.mrf.mxu0
    %563 = vdwg.mxu0
    %v564 = vmul.f32 %v546, 0.5
    %v565 = vmul.f32 %v551, 0.5
    %v566 = vmul.f32 %v556, 0.5
    %v567 = vmul.f32 %v561, 0.5
    %vm568 = vcmask 785408
    %v569 = vsel %vm568, %v564, -inf
    %570 = vmax.xlane.f32.xlu0 %v569
    %v571 = vpop.xlane.xlu0 %570
    %v572 = vsel %vm568, %v565, -inf
    %573 = vmax.xlane.f32.xlu0 %v572
    %v574 = vpop.xlane.xlu0 %573
    %v575 = vsel %vm568, %v566, -inf
    %576 = vmax.xlane.f32.xlu0 %v575
    %v577 = vpop.xlane.xlu0 %576
    %v578 = vsel %vm568, %v567, -inf
    %579 = vmax.xlane.f32.xlu0 %v578
    %v580 = vpop.xlane.xlu0 %579
    %v581 = vsub.f32 %v564, %v571
    %v582 = vsub.f32 %v565, %v574
    %v583 = vsub.f32 %v566, %v577
    %v584 = vsub.f32 %v567, %v580
    %v585 = vmul.f32 %v581, 1.442695
    %v586 = vpow.pop %v585
    %v587 = vmul.f32 %v582, 1.442695
    %v588 = vpow.pop %v587
    %v589 = vmul.f32 %v583, 1.442695
    %v590 = vpow.pop %v589
    %v591 = vmul.f32 %v584, 1.442695
    %v592 = vpow.pop %v591
    %v594 = vsel %vm568, %v586, 0
    %v597 = vsel %vm568, %v588, 0
    %v600 = vsel %vm568, %v590, 0
    %v603 = vsel %vm568, %v592, 0
    %605 = vmatprep.subr.mxu0 0.0
    %606 = vmatpush1.msra.mxu0 0.0
    %607 = vmatprep.subr.mxu0 0.0
    %608 = vmatpush1.msra.mxu0 0.0
    %609 = vmatprep.subr.mxu0 0.0
    %610 = vmatpush1.msra.mxu0 0.0
    %611 = vmatprep.subr.mxu0 0.0
    %612 = vmatpush1.msra.mxu0 0.0
    %613 = vmatprep.subr.mxu0 0.0
    %614 = vmatpush1.msra.mxu0 %v418
    %615 = vmatprep.subr.mxu0 0.0
    %616 = vmatpush1.msra.mxu0 %v417
    %617 = vmatprep.subr.mxu0 0.0
    %618 = vmatpush1.msra.mxu0 %v416
    %619 = vmatprep.subr.mxu0 0.0
    %620 = vmatpush1.msra.mxu0 %v415
    %621 = vmatprep.subr.mxu0 0.0
    %622 = vmatpush1.msra.mxu0 %v414
    %623 = vmatprep.subr.mxu0 0.0
    %624 = vmatpush1.msra.mxu0 %v413
    %625 = vmatprep.subr.mxu0 0.0
    %626 = vmatpush1.msra.mxu0 %v412
    %627 = vmatprep.subr.mxu0 0.0
    %628 = vmatpush1.msra.mxu0 %v411
    %629 = vmatprep.subr.mxu0 0.0
    %630 = vmatpush1.msra.mxu0 %v410
    %631 = vmatprep.subr.mxu0 0.0
    %632 = vmatpush1.msra.mxu0 %v409
    %633 = vmatprep.subr.mxu0 0.0
    %634 = vmatpush1.msra.mxu0 %v408
    %635 = vmatprep.subr.mxu0 0.0
    %636 = vmatpush1.msra.mxu0 %v407
    %637 = vmatprep.subr.mxu0 0.0
    %638 = vmatpush2.msra.mxu0 0.0
    %639 = vmatprep.subr.mxu0 0.0
    %640 = vmatpush2.msra.mxu0 0.0
    %641 = vmatprep.subr.mxu0 0.0
    %642 = vmatpush2.msra.mxu0 0.0
    %643 = vmatprep.subr.mxu0 0.0
    %644 = vmatpush2.msra.mxu0 0.0
    %645 = vmatprep.subr.mxu0 0.0
    %646 = vmatpush2.msra.mxu0 0.0
    %647 = vmatprep.subr.mxu0 0.0
    %648 = vmatpush2.msra.mxu0 0.0
    %649 = vmatprep.subr.mxu0 0.0
    %650 = vmatpush2.msra.mxu0 0.0
    %651 = vmatprep.subr.mxu0 0.0
    %652 = vmatpush2.msra.mxu0 0.0
    %653 = vmatprep.subr.mxu0 0.0
    %654 = vmatpush2.msra.mxu0 0.0
    %655 = vmatprep.subr.mxu0 0.0
    %656 = vmatpush2.msra.mxu0 0.0
    %657 = vmatprep.subr.mxu0 0.0
    %658 = vmatpush2.msra.mxu0 0.0
    %659 = vmatprep.subr.mxu0 0.0
    %660 = vmatpush2.msra.mxu0 0.0
    %661 = vmatprep.subr.mxu0 0.0
    %662 = vmatpush2.msra.mxu0 0.0
    %663 = vmatprep.subr.mxu0 0.0
    %664 = vmatpush2.msra.mxu0 0.0
    %665 = vmatprep.subr.mxu0 0.0
    %666 = vmatpush2.msra.mxu0 0.0
    %667 = vmatprep.subr.mxu0 0.0
    %668 = vmatpush2.msra.mxu0 0.0
    %669 = vmatprep.mubr.f32.mxu0 0.0
    %670 = vmatmul.mubr.f32.gmra.mxu0 %v594
    %v671 = vpop.f32.mrf.mxu0
    %v672 = vadd.f32 0.0, %v671
    %v673 = vpop.f32.mrf.mxu0
    %674 = vmatprep.mubr.f32.mxu0 0.0
    %675 = vmatmul.mubr.f32.gmra.mxu0 %v597
    %v676 = vpop.f32.mrf.mxu0
    %v677 = vadd.f32 0.0, %v676
    %v678 = vpop.f32.mrf.mxu0
    %679 = vmatprep.mubr.f32.mxu0 0.0
    %680 = vmatmul.mubr.f32.gmra.mxu0 %v600
    %v681 = vpop.f32.mrf.mxu0
    %v682 = vadd.f32 0.0, %v681
    %v683 = vpop.f32.mrf.mxu0
    %684 = vmatprep.mubr.f32.mxu0 0.0
    %685 = vmatmul.mubr.f32.gmra.mxu0 %v603
    %v686 = vpop.f32.mrf.mxu0
    %v687 = vadd.f32 0.0, %v686
    %v688 = vpop.f32.mrf.mxu0
    %689 = vdwg.mxu0
    %702 = vrot.lane.b32.xlu0 %v407, 48
    %v703 = vpop.permute.xlu0 %702
    %704 = vrot.lane.b32.xlu0 %v408, 48
    %v705 = vpop.permute.xlu0 %704
    %706 = vrot.lane.b32.xlu0 %v409, 48
    %v707 = vpop.permute.xlu0 %706
    %708 = vrot.lane.b32.xlu0 %v410, 48
    %v709 = vpop.permute.xlu0 %708
    %710 = vrot.lane.b32.xlu0 %v411, 48
    %v711 = vpop.permute.xlu0 %710
    %712 = vrot.lane.b32.xlu0 %v412, 48
    %v713 = vpop.permute.xlu0 %712
    %714 = vrot.lane.b32.xlu0 %v413, 48
    %v715 = vpop.permute.xlu0 %714
    %716 = vrot.lane.b32.xlu0 %v414, 48
    %v717 = vpop.permute.xlu0 %716
    %718 = vrot.lane.b32.xlu0 %v415, 48
    %v719 = vpop.permute.xlu0 %718
    %720 = vrot.lane.b32.xlu0 %v416, 48
    %v721 = vpop.permute.xlu0 %720
    %722 = vrot.lane.b32.xlu0 %v417, 48
    %v723 = vpop.permute.xlu0 %722
    %724 = vrot.lane.b32.xlu0 %v418, 48
    %v725 = vpop.permute.xlu0 %724
    %v738 = vmul.f32 %v399, %v703
    %v739 = vmul.f32 %v399, %v705
    %v740 = vmul.f32 %v399, %v707
    %v741 = vmul.f32 %v399, %v709
    %v742 = vmul.f32 %v399, %v711
    %v743 = vmul.f32 %v399, %v713
    %v744 = vmul.f32 %v399, %v715
    %v745 = vmul.f32 %v399, %v717
    %v746 = vmul.f32 %v399, %v719
    %v747 = vmul.f32 %v399, %v721
    %v748 = vmul.f32 %v399, %v723
    %v749 = vmul.f32 %v399, %v725
    %762 = vrot.lane.b32.xlu0 %v738, 80
    %v763 = vpop.permute.xlu0 %762
    %764 = vrot.lane.b32.xlu0 %v739, 80
    %v765 = vpop.permute.xlu0 %764
    %766 = vrot.lane.b32.xlu0 %v740, 80
    %v767 = vpop.permute.xlu0 %766
    %768 = vrot.lane.b32.xlu0 %v741, 80
    %v769 = vpop.permute.xlu0 %768
    %770 = vrot.lane.b32.xlu0 %v742, 80
    %v771 = vpop.permute.xlu0 %770
    %772 = vrot.lane.b32.xlu0 %v743, 80
    %v773 = vpop.permute.xlu0 %772
    %774 = vrot.lane.b32.xlu0 %v744, 80
    %v775 = vpop.permute.xlu0 %774
    %776 = vrot.lane.b32.xlu0 %v745, 80
    %v777 = vpop.permute.xlu0 %776
    %778 = vrot.lane.b32.xlu0 %v746, 80
    %v779 = vpop.permute.xlu0 %778
    %780 = vrot.lane.b32.xlu0 %v747, 80
    %v781 = vpop.permute.xlu0 %780
    %782 = vrot.lane.b32.xlu0 %v748, 80
    %v783 = vpop.permute.xlu0 %782
    %784 = vrot.lane.b32.xlu0 %v749, 80
    %v785 = vpop.permute.xlu0 %784
    %798 = vmatprep.subr.mxu0 0.0
    %799 = vmatpush1.msra.mxu0 0.0
    %800 = vmatprep.subr.mxu0 0.0
    %801 = vmatpush1.msra.mxu0 0.0
    %802 = vmatprep.subr.mxu0 0.0
    %803 = vmatpush1.msra.mxu0 0.0
    %804 = vmatprep.subr.mxu0 0.0
    %805 = vmatpush1.msra.mxu0 0.0
    %806 = vmatprep.subr.mxu0 0.0
    %807 = vmatpush1.msra.mxu0 %v785
    %808 = vmatprep.subr.mxu0 0.0
    %809 = vmatpush1.msra.mxu0 %v783
    %810 = vmatprep.subr.mxu0 0.0
    %811 = vmatpush1.msra.mxu0 %v781
    %812 = vmatprep.subr.mxu0 0.0
    %813 = vmatpush1.msra.mxu0 %v779
    %814 = vmatprep.subr.mxu0 0.0
    %815 = vmatpush1.msra.mxu0 %v777
    %816 = vmatprep.subr.mxu0 0.0
    %817 = vmatpush1.msra.mxu0 %v775
    %818 = vmatprep.subr.mxu0 0.0
    %819 = vmatpush1.msra.mxu0 %v773
    %820 = vmatprep.subr.mxu0 0.0
    %821 = vmatpush1.msra.mxu0 %v771
    %822 = vmatprep.subr.mxu0 0.0
    %823 = vmatpush1.msra.mxu0 %v769
    %824 = vmatprep.subr.mxu0 0.0
    %825 = vmatpush1.msra.mxu0 %v767
    %826 = vmatprep.subr.mxu0 0.0
    %827 = vmatpush1.msra.mxu0 %v765
    %828 = vmatprep.subr.mxu0 0.0
    %829 = vmatpush1.msra.mxu0 %v763
    %830 = vmatprep.subr.mxu0 0.0
    %831 = vmatpush2.msra.mxu0 0.0
    %832 = vmatprep.subr.mxu0 0.0
    %833 = vmatpush2.msra.mxu0 0.0
    %834 = vmatprep.subr.mxu0 0.0
    %835 = vmatpush2.msra.mxu0 0.0
    %836 = vmatprep.subr.mxu0 0.0
    %837 = vmatpush2.msra.mxu0 0.0
    %838 = vmatprep.subr.mxu0 0.0
    %839 = vmatpush2.msra.mxu0 0.0
    %840 = vmatprep.subr.mxu0 0.0
    %841 = vmatpush2.msra.mxu0 0.0
    %842 = vmatprep.subr.mxu0 0.0
    %843 = vmatpush2.msra.mxu0 0.0
    %844 = vmatprep.subr.mxu0 0.0
    %845 = vmatpush2.msra.mxu0 0.0
    %846 = vmatprep.subr.mxu0 0.0
    %847 = vmatpush2.msra.mxu0 0.0
    %848 = vmatprep.subr.mxu0 0.0
    %849 = vmatpush2.msra.mxu0 0.0
    %850 = vmatprep.subr.mxu0 0.0
    %851 = vmatpush2.msra.mxu0 0.0
    %852 = vmatprep.subr.mxu0 0.0
    %853 = vmatpush2.msra.mxu0 0.0
    %854 = vmatprep.subr.mxu0 0.0
    %855 = vmatpush2.msra.mxu0 0.0
    %856 = vmatprep.subr.mxu0 0.0
    %857 = vmatpush2.msra.mxu0 0.0
    %858 = vmatprep.subr.mxu0 0.0
    %859 = vmatpush2.msra.mxu0 0.0
    %860 = vmatprep.subr.mxu0 0.0
    %861 = vmatpush2.msra.mxu0 0.0
    %862 = vmatprep.mubr.f32.mxu0 0.0
    %863 = vmatmul.mubr.f32.gmra.mxu0 %v594
    %v864 = vpop.f32.mrf.mxu0
    %v865 = vadd.f32 0.0, %v864
    %v866 = vpop.f32.mrf.mxu0
    %867 = vmatprep.mubr.f32.mxu0 0.0
    %868 = vmatmul.mubr.f32.gmra.mxu0 %v597
    %v869 = vpop.f32.mrf.mxu0
    %v870 = vadd.f32 0.0, %v869
    %v871 = vpop.f32.mrf.mxu0
    %872 = vmatprep.mubr.f32.mxu0 0.0
    %873 = vmatmul.mubr.f32.gmra.mxu0 %v600
    %v874 = vpop.f32.mrf.mxu0
    %v875 = vadd.f32 0.0, %v874
    %v876 = vpop.f32.mrf.mxu0
    %877 = vmatprep.mubr.f32.mxu0 0.0
    %878 = vmatmul.mubr.f32.gmra.mxu0 %v603
    %v879 = vpop.f32.mrf.mxu0
    %v880 = vadd.f32 0.0, %v879
    %v881 = vpop.f32.mrf.mxu0
    %882 = vdwg.mxu0
    %v883 = vmax.f32 %v672, 1e-30
    %v884 = vmax.f32 %v677, 1e-30
    %v885 = vmax.f32 %v682, 1e-30
    %v886 = vmax.f32 %v687, 1e-30
    %v887 = vrcp.pop %v883
    %v888 = vrcp.pop %v884
    %v889 = vrcp.pop %v885
    %v890 = vrcp.pop %v886
    %v891 = vmul.f32 %v865, %v887
    %v892 = vmul.f32 %v870, %v888
    %v893 = vmul.f32 %v875, %v889
    %v894 = vmul.f32 %v880, %v890
    %v895 = vld [vmem:[%s15] sm:$0xff]
    %v896 = vld [vmem:[%s15 + $0x8] sm:$0xff]
    %v897 = vld [vmem:[%s15 + $0x10] sm:$0xff]
    %v898 = vld [vmem:[%s15 + $0x18] sm:$0xff]
    %v899 = vld [vmem:[%s15 + $0x20] sm:$0xff]
    %v900 = vld [vmem:[%s15 + $0x28] sm:$0xff]
    %v901 = vld [vmem:[%s15 + $0x30] sm:$0xff]
    %v902 = vld [vmem:[%s15 + $0x38] sm:$0xff]
    %v903 = vld [vmem:[%s15 + $0x40] sm:$0xff]
    %v904 = vld [vmem:[%s15 + $0x48] sm:$0xff]
    %v905 = vld [vmem:[%s15 + $0x50] sm:$0xff]
    %v906 = vld [vmem:[%s15 + $0x58] sm:$0xff]
    %v907 = vmul.f32 %v404, %v895
    %v908 = vmul.f32 %v404, %v896
    %v909 = vmul.f32 %v404, %v897
    %v910 = vmul.f32 %v404, %v898
    %v911 = vmul.f32 %v404, %v899
    %v912 = vmul.f32 %v404, %v900
    %v913 = vmul.f32 %v404, %v901
    %v914 = vmul.f32 %v404, %v902
    %v915 = vmul.f32 %v404, %v903
    %v916 = vmul.f32 %v404, %v904
    %v917 = vmul.f32 %v404, %v905
    %v918 = vmul.f32 %v404, %v906
    %v920 = vsel %vm183, %v295, 0
    %v923 = vsel %vm183, %v300, 0
    %v926 = vsel %vm183, %v305, 0
    %v929 = vsel %vm183, %v310, 0
    %v932 = vsel %vm183, %v907, 0
    %v935 = vsel %vm183, %v908, 0
    %v938 = vsel %vm183, %v909, 0
    %v941 = vsel %vm183, %v910, 0
    %v944 = vsel %vm183, %v911, 0
    %v947 = vsel %vm183, %v912, 0
    %v950 = vsel %vm183, %v913, 0
    %v953 = vsel %vm183, %v914, 0
    %v956 = vsel %vm183, %v915, 0
    %v959 = vsel %vm183, %v916, 0
    %v962 = vsel %vm183, %v917, 0
    %v965 = vsel %vm183, %v918, 0
    %967 = vmatprep.subr.mxu0 0.0
    %968 = vmatpush1.xpose.msra.mxu0 0.0
    %969 = vmatprep.subr.mxu0 0.0
    %970 = vmatpush1.xpose.msra.mxu0 0.0
    %971 = vmatprep.subr.mxu0 0.0
    %972 = vmatpush1.xpose.msra.mxu0 0.0
    %973 = vmatprep.subr.mxu0 0.0
    %974 = vmatpush1.xpose.msra.mxu0 0.0
    %975 = vmatprep.subr.mxu0 0.0
    %976 = vmatpush1.xpose.msra.mxu0 %v965
    %977 = vmatprep.subr.mxu0 0.0
    %978 = vmatpush1.xpose.msra.mxu0 %v962
    %979 = vmatprep.subr.mxu0 0.0
    %980 = vmatpush1.xpose.msra.mxu0 %v959
    %981 = vmatprep.subr.mxu0 0.0
    %982 = vmatpush1.xpose.msra.mxu0 %v956
    %983 = vmatprep.subr.mxu0 0.0
    %984 = vmatpush1.xpose.msra.mxu0 %v953
    %985 = vmatprep.subr.mxu0 0.0
    %986 = vmatpush1.xpose.msra.mxu0 %v950
    %987 = vmatprep.subr.mxu0 0.0
    %988 = vmatpush1.xpose.msra.mxu0 %v947
    %989 = vmatprep.subr.mxu0 0.0
    %990 = vmatpush1.xpose.msra.mxu0 %v944
    %991 = vmatprep.subr.mxu0 0.0
    %992 = vmatpush1.xpose.msra.mxu0 %v941
    %993 = vmatprep.subr.mxu0 0.0
    %994 = vmatpush1.xpose.msra.mxu0 %v938
    %995 = vmatprep.subr.mxu0 0.0
    %996 = vmatpush1.xpose.msra.mxu0 %v935
    %997 = vmatprep.subr.mxu0 0.0
    %998 = vmatpush1.xpose.msra.mxu0 %v932
    %999 = vmatprep.subr.mxu0 0.0
    %1000 = vmatpush2.xpose.msra.mxu0 0.0
    %1001 = vmatprep.subr.mxu0 0.0
    %1002 = vmatpush2.xpose.msra.mxu0 0.0
    %1003 = vmatprep.subr.mxu0 0.0
    %1004 = vmatpush2.xpose.msra.mxu0 0.0
    %1005 = vmatprep.subr.mxu0 0.0
    %1006 = vmatpush2.xpose.msra.mxu0 0.0
    %1007 = vmatprep.subr.mxu0 0.0
    %1008 = vmatpush2.xpose.msra.mxu0 0.0
    %1009 = vmatprep.subr.mxu0 0.0
    %1010 = vmatpush2.xpose.msra.mxu0 0.0
    %1011 = vmatprep.subr.mxu0 0.0
    %1012 = vmatpush2.xpose.msra.mxu0 0.0
    %1013 = vmatprep.subr.mxu0 0.0
    %1014 = vmatpush2.xpose.msra.mxu0 0.0
    %1015 = vmatprep.subr.mxu0 0.0
    %1016 = vmatpush2.xpose.msra.mxu0 0.0
    %1017 = vmatprep.subr.mxu0 0.0
    %1018 = vmatpush2.xpose.msra.mxu0 0.0
    %1019 = vmatprep.subr.mxu0 0.0
    %1020 = vmatpush2.xpose.msra.mxu0 0.0
    %1021 = vmatprep.subr.mxu0 0.0
    %1022 = vmatpush2.xpose.msra.mxu0 0.0
    %1023 = vmatprep.subr.mxu0 0.0
    %1024 = vmatpush2.xpose.msra.mxu0 0.0
    %1025 = vmatprep.subr.mxu0 0.0
    %1026 = vmatpush2.xpose.msra.mxu0 0.0
    %1027 = vmatprep.subr.mxu0 0.0
    %1028 = vmatpush2.xpose.msra.mxu0 0.0
    %1029 = vmatprep.subr.mxu0 0.0
    %1030 = vmatpush2.xpose.msra.mxu0 0.0
    %1031 = vmatprep.mubr.f32.mxu0 0.0
    %1032 = vmatmul.mubr.f32.gmra.mxu0 %v920
    %v1033 = vpop.f32.mrf.mxu0
    %v1034 = vadd.f32 0.0, %v1033
    %v1035 = vpop.f32.mrf.mxu0
    %1036 = vmatprep.mubr.f32.mxu0 0.0
    %1037 = vmatmul.mubr.f32.gmra.mxu0 %v923
    %v1038 = vpop.f32.mrf.mxu0
    %v1039 = vadd.f32 0.0, %v1038
    %v1040 = vpop.f32.mrf.mxu0
    %1041 = vmatprep.mubr.f32.mxu0 0.0
    %1042 = vmatmul.mubr.f32.gmra.mxu0 %v926
    %v1043 = vpop.f32.mrf.mxu0
    %v1044 = vadd.f32 0.0, %v1043
    %v1045 = vpop.f32.mrf.mxu0
    %1046 = vmatprep.mubr.f32.mxu0 0.0
    %1047 = vmatmul.mubr.f32.gmra.mxu0 %v929
    %v1048 = vpop.f32.mrf.mxu0
    %v1049 = vadd.f32 0.0, %v1048
    %v1050 = vpop.f32.mrf.mxu0
    %1051 = vdwg.mxu0
    %v1052 = vmul.f32 %v1034, 0.5
    %v1053 = vmul.f32 %v1039, 0.5
    %v1054 = vmul.f32 %v1044, 0.5
    %v1055 = vmul.f32 %v1049, 0.5
    %v1056 = vsel %vm568, %v1052, -inf
    %1057 = vmax.xlane.f32.xlu0 %v1056
    %v1058 = vpop.xlane.xlu0 %1057
    %v1059 = vsel %vm568, %v1053, -inf
    %1060 = vmax.xlane.f32.xlu0 %v1059
    %v1061 = vpop.xlane.xlu0 %1060
    %v1062 = vsel %vm568, %v1054, -inf
    %1063 = vmax.xlane.f32.xlu0 %v1062
    %v1064 = vpop.xlane.xlu0 %1063
    %v1065 = vsel %vm568, %v1055, -inf
    %1066 = vmax.xlane.f32.xlu0 %v1065
    %v1067 = vpop.xlane.xlu0 %1066
    %v1068 = vsub.f32 %v1052, %v1058
    %v1069 = vsub.f32 %v1053, %v1061
    %v1070 = vsub.f32 %v1054, %v1064
    %v1071 = vsub.f32 %v1055, %v1067
    %v1072 = vmul.f32 %v1068, 1.442695
    %v1073 = vpow.pop %v1072
    %v1074 = vmul.f32 %v1069, 1.442695
    %v1075 = vpow.pop %v1074
    %v1076 = vmul.f32 %v1070, 1.442695
    %v1077 = vpow.pop %v1076
    %v1078 = vmul.f32 %v1071, 1.442695
    %v1079 = vpow.pop %v1078
    %v1081 = vsel %vm568, %v1073, 0
    %v1084 = vsel %vm568, %v1075, 0
    %v1087 = vsel %vm568, %v1077, 0
    %v1090 = vsel %vm568, %v1079, 0
    %1092 = vmatprep.subr.mxu0 0.0
    %1093 = vmatpush1.msra.mxu0 0.0
    %1094 = vmatprep.subr.mxu0 0.0
    %1095 = vmatpush1.msra.mxu0 0.0
    %1096 = vmatprep.subr.mxu0 0.0
    %1097 = vmatpush1.msra.mxu0 0.0
    %1098 = vmatprep.subr.mxu0 0.0
    %1099 = vmatpush1.msra.mxu0 0.0
    %1100 = vmatprep.subr.mxu0 0.0
    %1101 = vmatpush1.msra.mxu0 %v906
    %1102 = vmatprep.subr.mxu0 0.0
    %1103 = vmatpush1.msra.mxu0 %v905
    %1104 = vmatprep.subr.mxu0 0.0
    %1105 = vmatpush1.msra.mxu0 %v904
    %1106 = vmatprep.subr.mxu0 0.0
    %1107 = vmatpush1.msra.mxu0 %v903
    %1108 = vmatprep.subr.mxu0 0.0
    %1109 = vmatpush1.msra.mxu0 %v902
    %1110 = vmatprep.subr.mxu0 0.0
    %1111 = vmatpush1.msra.mxu0 %v901
    %1112 = vmatprep.subr.mxu0 0.0
    %1113 = vmatpush1.msra.mxu0 %v900
    %1114 = vmatprep.subr.mxu0 0.0
    %1115 = vmatpush1.msra.mxu0 %v899
    %1116 = vmatprep.subr.mxu0 0.0
    %1117 = vmatpush1.msra.mxu0 %v898
    %1118 = vmatprep.subr.mxu0 0.0
    %1119 = vmatpush1.msra.mxu0 %v897
    %1120 = vmatprep.subr.mxu0 0.0
    %1121 = vmatpush1.msra.mxu0 %v896
    %1122 = vmatprep.subr.mxu0 0.0
    %1123 = vmatpush1.msra.mxu0 %v895
    %1124 = vmatprep.subr.mxu0 0.0
    %1125 = vmatpush2.msra.mxu0 0.0
    %1126 = vmatprep.subr.mxu0 0.0
    %1127 = vmatpush2.msra.mxu0 0.0
    %1128 = vmatprep.subr.mxu0 0.0
    %1129 = vmatpush2.msra.mxu0 0.0
    %1130 = vmatprep.subr.mxu0 0.0
    %1131 = vmatpush2.msra.mxu0 0.0
    %1132 = vmatprep.subr.mxu0 0.0
    %1133 = vmatpush2.msra.mxu0 0.0
    %1134 = vmatprep.subr.mxu0 0.0
    %1135 = vmatpush2.msra.mxu0 0.0
    %1136 = vmatprep.subr.mxu0 0.0
    %1137 = vmatpush2.msra.mxu0 0.0
    %1138 = vmatprep.subr.mxu0 0.0
    %1139 = vmatpush2.msra.mxu0 0.0
    %1140 = vmatprep.subr.mxu0 0.0
    %1141 = vmatpush2.msra.mxu0 0.0
    %1142 = vmatprep.subr.mxu0 0.0
    %1143 = vmatpush2.msra.mxu0 0.0
    %1144 = vmatprep.subr.mxu0 0.0
    %1145 = vmatpush2.msra.mxu0 0.0
    %1146 = vmatprep.subr.mxu0 0.0
    %1147 = vmatpush2.msra.mxu0 0.0
    %1148 = vmatprep.subr.mxu0 0.0
    %1149 = vmatpush2.msra.mxu0 0.0
    %1150 = vmatprep.subr.mxu0 0.0
    %1151 = vmatpush2.msra.mxu0 0.0
    %1152 = vmatprep.subr.mxu0 0.0
    %1153 = vmatpush2.msra.mxu0 0.0
    %1154 = vmatprep.subr.mxu0 0.0
    %1155 = vmatpush2.msra.mxu0 0.0
    %1156 = vmatprep.mubr.f32.mxu0 0.0
    %1157 = vmatmul.mubr.f32.gmra.mxu0 %v1081
    %v1158 = vpop.f32.mrf.mxu0
    %v1159 = vadd.f32 0.0, %v1158
    %v1160 = vpop.f32.mrf.mxu0
    %1161 = vmatprep.mubr.f32.mxu0 0.0
    %1162 = vmatmul.mubr.f32.gmra.mxu0 %v1084
    %v1163 = vpop.f32.mrf.mxu0
    %v1164 = vadd.f32 0.0, %v1163
    %v1165 = vpop.f32.mrf.mxu0
    %1166 = vmatprep.mubr.f32.mxu0 0.0
    %1167 = vmatmul.mubr.f32.gmra.mxu0 %v1087
    %v1168 = vpop.f32.mrf.mxu0
    %v1169 = vadd.f32 0.0, %v1168
    %v1170 = vpop.f32.mrf.mxu0
    %1171 = vmatprep.mubr.f32.mxu0 0.0
    %1172 = vmatmul.mubr.f32.gmra.mxu0 %v1090
    %v1173 = vpop.f32.mrf.mxu0
    %v1174 = vadd.f32 0.0, %v1173
    %v1175 = vpop.f32.mrf.mxu0
    %1176 = vdwg.mxu0
    %1189 = vrot.lane.b32.xlu0 %v895, 48
    %v1190 = vpop.permute.xlu0 %1189
    %1191 = vrot.lane.b32.xlu0 %v896, 48
    %v1192 = vpop.permute.xlu0 %1191
    %1193 = vrot.lane.b32.xlu0 %v897, 48
    %v1194 = vpop.permute.xlu0 %1193
    %1195 = vrot.lane.b32.xlu0 %v898, 48
    %v1196 = vpop.permute.xlu0 %1195
    %1197 = vrot.lane.b32.xlu0 %v899, 48
    %v1198 = vpop.permute.xlu0 %1197
    %1199 = vrot.lane.b32.xlu0 %v900, 48
    %v1200 = vpop.permute.xlu0 %1199
    %1201 = vrot.lane.b32.xlu0 %v901, 48
    %v1202 = vpop.permute.xlu0 %1201
    %1203 = vrot.lane.b32.xlu0 %v902, 48
    %v1204 = vpop.permute.xlu0 %1203
    %1205 = vrot.lane.b32.xlu0 %v903, 48
    %v1206 = vpop.permute.xlu0 %1205
    %1207 = vrot.lane.b32.xlu0 %v904, 48
    %v1208 = vpop.permute.xlu0 %1207
    %1209 = vrot.lane.b32.xlu0 %v905, 48
    %v1210 = vpop.permute.xlu0 %1209
    %1211 = vrot.lane.b32.xlu0 %v906, 48
    %v1212 = vpop.permute.xlu0 %1211
    %v1225 = vmul.f32 %v404, %v1190
    %v1226 = vmul.f32 %v404, %v1192
    %v1227 = vmul.f32 %v404, %v1194
    %v1228 = vmul.f32 %v404, %v1196
    %v1229 = vmul.f32 %v404, %v1198
    %v1230 = vmul.f32 %v404, %v1200
    %v1231 = vmul.f32 %v404, %v1202
    %v1232 = vmul.f32 %v404, %v1204
    %v1233 = vmul.f32 %v404, %v1206
    %v1234 = vmul.f32 %v404, %v1208
    %v1235 = vmul.f32 %v404, %v1210
    %v1236 = vmul.f32 %v404, %v1212
    %1249 = vrot.lane.b32.xlu0 %v1225, 80
    %v1250 = vpop.permute.xlu0 %1249
    %1251 = vrot.lane.b32.xlu0 %v1226, 80
    %v1252 = vpop.permute.xlu0 %1251
    %1253 = vrot.lane.b32.xlu0 %v1227, 80
    %v1254 = vpop.permute.xlu0 %1253
    %1255 = vrot.lane.b32.xlu0 %v1228, 80
    %v1256 = vpop.permute.xlu0 %1255
    %1257 = vrot.lane.b32.xlu0 %v1229, 80
    %v1258 = vpop.permute.xlu0 %1257
    %1259 = vrot.lane.b32.xlu0 %v1230, 80
    %v1260 = vpop.permute.xlu0 %1259
    %1261 = vrot.lane.b32.xlu0 %v1231, 80
    %v1262 = vpop.permute.xlu0 %1261
    %1263 = vrot.lane.b32.xlu0 %v1232, 80
    %v1264 = vpop.permute.xlu0 %1263
    %1265 = vrot.lane.b32.xlu0 %v1233, 80
    %v1266 = vpop.permute.xlu0 %1265
    %1267 = vrot.lane.b32.xlu0 %v1234, 80
    %v1268 = vpop.permute.xlu0 %1267
    %1269 = vrot.lane.b32.xlu0 %v1235, 80
    %v1270 = vpop.permute.xlu0 %1269
    %1271 = vrot.lane.b32.xlu0 %v1236, 80
    %v1272 = vpop.permute.xlu0 %1271
    %1285 = vmatprep.subr.mxu0 0.0
    %1286 = vmatpush1.msra.mxu0 0.0
    %1287 = vmatprep.subr.mxu0 0.0
    %1288 = vmatpush1.msra.mxu0 0.0
    %1289 = vmatprep.subr.mxu0 0.0
    %1290 = vmatpush1.msra.mxu0 0.0
    %1291 = vmatprep.subr.mxu0 0.0
    %1292 = vmatpush1.msra.mxu0 0.0
    %1293 = vmatprep.subr.mxu0 0.0
    %1294 = vmatpush1.msra.mxu0 %v1272
    %1295 = vmatprep.subr.mxu0 0.0
    %1296 = vmatpush1.msra.mxu0 %v1270
    %1297 = vmatprep.subr.mxu0 0.0
    %1298 = vmatpush1.msra.mxu0 %v1268
    %1299 = vmatprep.subr.mxu0 0.0
    %1300 = vmatpush1.msra.mxu0 %v1266
    %1301 = vmatprep.subr.mxu0 0.0
    %1302 = vmatpush1.msra.mxu0 %v1264
    %1303 = vmatprep.subr.mxu0 0.0
    %1304 = vmatpush1.msra.mxu0 %v1262
    %1305 = vmatprep.subr.mxu0 0.0
    %1306 = vmatpush1.msra.mxu0 %v1260
    %1307 = vmatprep.subr.mxu0 0.0
    %1308 = vmatpush1.msra.mxu0 %v1258
    %1309 = vmatprep.subr.mxu0 0.0
    %1310 = vmatpush1.msra.mxu0 %v1256
    %1311 = vmatprep.subr.mxu0 0.0
    %1312 = vmatpush1.msra.mxu0 %v1254
    %1313 = vmatprep.subr.mxu0 0.0
    %1314 = vmatpush1.msra.mxu0 %v1252
    %1315 = vmatprep.subr.mxu0 0.0
    %1316 = vmatpush1.msra.mxu0 %v1250
    %1317 = vmatprep.subr.mxu0 0.0
    %1318 = vmatpush2.msra.mxu0 0.0
    %1319 = vmatprep.subr.mxu0 0.0
    %1320 = vmatpush2.msra.mxu0 0.0
    %1321 = vmatprep.subr.mxu0 0.0
    %1322 = vmatpush2.msra.mxu0 0.0
    %1323 = vmatprep.subr.mxu0 0.0
    %1324 = vmatpush2.msra.mxu0 0.0
    %1325 = vmatprep.subr.mxu0 0.0
    %1326 = vmatpush2.msra.mxu0 0.0
    %1327 = vmatprep.subr.mxu0 0.0
    %1328 = vmatpush2.msra.mxu0 0.0
    %1329 = vmatprep.subr.mxu0 0.0
    %1330 = vmatpush2.msra.mxu0 0.0
    %1331 = vmatprep.subr.mxu0 0.0
    %1332 = vmatpush2.msra.mxu0 0.0
    %1333 = vmatprep.subr.mxu0 0.0
    %1334 = vmatpush2.msra.mxu0 0.0
    %1335 = vmatprep.subr.mxu0 0.0
    %1336 = vmatpush2.msra.mxu0 0.0
    %1337 = vmatprep.subr.mxu0 0.0
    %1338 = vmatpush2.msra.mxu0 0.0
    %1339 = vmatprep.subr.mxu0 0.0
    %1340 = vmatpush2.msra.mxu0 0.0
    %1341 = vmatprep.subr.mxu0 0.0
    %1342 = vmatpush2.msra.mxu0 0.0
    %1343 = vmatprep.subr.mxu0 0.0
    %1344 = vmatpush2.msra.mxu0 0.0
    %1345 = vmatprep.subr.mxu0 0.0
    %1346 = vmatpush2.msra.mxu0 0.0
    %1347 = vmatprep.subr.mxu0 0.0
    %1348 = vmatpush2.msra.mxu0 0.0
    %1349 = vmatprep.mubr.f32.mxu0 0.0
    %1350 = vmatmul.mubr.f32.gmra.mxu0 %v1081
    %v1351 = vpop.f32.mrf.mxu0
    %v1352 = vadd.f32 0.0, %v1351
    %v1353 = vpop.f32.mrf.mxu0
    %1354 = vmatprep.mubr.f32.mxu0 0.0
    %1355 = vmatmul.mubr.f32.gmra.mxu0 %v1084
    %v1356 = vpop.f32.mrf.mxu0
    %v1357 = vadd.f32 0.0, %v1356
    %v1358 = vpop.f32.mrf.mxu0
    %1359 = vmatprep.mubr.f32.mxu0 0.0
    %1360 = vmatmul.mubr.f32.gmra.mxu0 %v1087
    %v1361 = vpop.f32.mrf.mxu0
    %v1362 = vadd.f32 0.0, %v1361
    %v1363 = vpop.f32.mrf.mxu0
    %1364 = vmatprep.mubr.f32.mxu0 0.0
    %1365 = vmatmul.mubr.f32.gmra.mxu0 %v1090
    %v1366 = vpop.f32.mrf.mxu0
    %v1367 = vadd.f32 0.0, %v1366
    %v1368 = vpop.f32.mrf.mxu0
    %1369 = vdwg.mxu0
    %v1370 = vmax.f32 %v1159, 1e-30
    %v1371 = vmax.f32 %v1164, 1e-30
    %v1372 = vmax.f32 %v1169, 1e-30
    %v1373 = vmax.f32 %v1174, 1e-30
    %v1374 = vrcp.pop %v1370
    %v1375 = vrcp.pop %v1371
    %v1376 = vrcp.pop %v1372
    %v1377 = vrcp.pop %v1373
    %v1378 = vmul.f32 %v1352, %v1374
    %v1379 = vmul.f32 %v1357, %v1375
    %v1380 = vmul.f32 %v1362, %v1376
    %v1381 = vmul.f32 %v1367, %v1377
    %s1382 = scalar_lea.vmem %s4, 48
    %v1383 = vld [vmem:[%s1382] sm:$0xff]
    %v1384 = vld [vmem:[%s1382 + $0x8] sm:$0xff]
    %v1385 = vld [vmem:[%s1382 + $0x10] sm:$0xff]
    %v1386 = vld [vmem:[%s1382 + $0x18] sm:$0xff]
    %v1387 = vld [vmem:[%s1382 + $0x20] sm:$0xff]
    %v1388 = vld [vmem:[%s1382 + $0x28] sm:$0xff]
    %v1389 = vld [vmem:[#allocation10 + $0x1] sm:$0x1]
    %v1390 = vlaneseq
    %v1391 = vshrl.u32 %v1390, 7
    %v1392 = vsub.s32 0, %v1391
    %v1393 = vrot.slane %v1389, %v1392
    %v1395 = vsel %vm183, %v891, 0
    %v1398 = vsel %vm183, %v892, 0
    %v1401 = vsel %vm183, %v893, 0
    %v1404 = vsel %vm183, %v894, 0
    %v1407 = vsel %vm183, %v1378, 0
    %v1410 = vsel %vm183, %v1379, 0
    %v1413 = vsel %vm183, %v1380, 0
    %v1416 = vsel %vm183, %v1381, 0
    %1418 = vmatprep.subr.mxu0 0.0
    %1419 = vmatpush1.msra.mxu0 0.0
    %1420 = vmatprep.subr.mxu0 0.0
    %1421 = vmatpush1.msra.mxu0 0.0
    %1422 = vmatprep.subr.mxu0 0.0
    %1423 = vmatpush1.msra.mxu0 0.0
    %1424 = vmatprep.subr.mxu0 0.0
    %1425 = vmatpush1.msra.mxu0 0.0
    %1426 = vmatprep.subr.mxu0 0.0
    %1427 = vmatpush1.msra.mxu0 0.0
    %1428 = vmatprep.subr.mxu0 0.0
    %1429 = vmatpush1.msra.mxu0 0.0
    %1430 = vmatprep.subr.mxu0 0.0
    %1431 = vmatpush1.msra.mxu0 0.0
    %1432 = vmatprep.subr.mxu0 0.0
    %1433 = vmatpush1.msra.mxu0 0.0
    %1434 = vmatprep.subr.mxu0 0.0
    %1435 = vmatpush1.msra.mxu0 0.0
    %1436 = vmatprep.subr.mxu0 0.0
    %1437 = vmatpush1.msra.mxu0 0.0
    %1438 = vmatprep.subr.mxu0 0.0
    %1439 = vmatpush1.msra.mxu0 %v1388
    %1440 = vmatprep.subr.mxu0 0.0
    %1441 = vmatpush1.msra.mxu0 %v1387
    %1442 = vmatprep.subr.mxu0 0.0
    %1443 = vmatpush1.msra.mxu0 %v1386
    %1444 = vmatprep.subr.mxu0 0.0
    %1445 = vmatpush1.msra.mxu0 %v1385
    %1446 = vmatprep.subr.mxu0 0.0
    %1447 = vmatpush1.msra.mxu0 %v1384
    %1448 = vmatprep.subr.mxu0 0.0
    %1449 = vmatpush1.msra.mxu0 %v1383
    %1450 = vmatprep.subr.mxu0 0.0
    %1451 = vmatpush2.msra.mxu0 0.0
    %1452 = vmatprep.subr.mxu0 0.0
    %1453 = vmatpush2.msra.mxu0 0.0
    %1454 = vmatprep.subr.mxu0 0.0
    %1455 = vmatpush2.msra.mxu0 0.0
    %1456 = vmatprep.subr.mxu0 0.0
    %1457 = vmatpush2.msra.mxu0 0.0
    %1458 = vmatprep.subr.mxu0 0.0
    %1459 = vmatpush2.msra.mxu0 0.0
    %1460 = vmatprep.subr.mxu0 0.0
    %1461 = vmatpush2.msra.mxu0 0.0
    %1462 = vmatprep.subr.mxu0 0.0
    %1463 = vmatpush2.msra.mxu0 0.0
    %1464 = vmatprep.subr.mxu0 0.0
    %1465 = vmatpush2.msra.mxu0 0.0
    %1466 = vmatprep.subr.mxu0 0.0
    %1467 = vmatpush2.msra.mxu0 0.0
    %1468 = vmatprep.subr.mxu0 0.0
    %1469 = vmatpush2.msra.mxu0 0.0
    %1470 = vmatprep.subr.mxu0 0.0
    %1471 = vmatpush2.msra.mxu0 0.0
    %1472 = vmatprep.subr.mxu0 0.0
    %1473 = vmatpush2.msra.mxu0 0.0
    %1474 = vmatprep.subr.mxu0 0.0
    %1475 = vmatpush2.msra.mxu0 0.0
    %1476 = vmatprep.subr.mxu0 0.0
    %1477 = vmatpush2.msra.mxu0 0.0
    %1478 = vmatprep.subr.mxu0 0.0
    %1479 = vmatpush2.msra.mxu0 0.0
    %1480 = vmatprep.subr.mxu0 0.0
    %1481 = vmatpush2.msra.mxu0 0.0
    %1482 = vmatprep.mubr.f32.mxu0 0.0
    %1483 = vmatmul.mubr.f32.gmra.mxu0 %v1395
    %v1484 = vpop.f32.mrf.mxu0
    %v1485 = vadd.f32 %v1393, %v1484
    %v1486 = vpop.f32.mrf.mxu0
    %1487 = vmatprep.mubr.f32.mxu0 0.0
    %1488 = vmatmul.mubr.f32.gmra.mxu0 %v1398
    %v1489 = vpop.f32.mrf.mxu0
    %v1490 = vadd.f32 %v1393, %v1489
    %v1491 = vpop.f32.mrf.mxu0
    %1492 = vmatprep.mubr.f32.mxu0 0.0
    %1493 = vmatmul.mubr.f32.gmra.mxu0 %v1401
    %v1494 = vpop.f32.mrf.mxu0
    %v1495 = vadd.f32 %v1393, %v1494
    %v1496 = vpop.f32.mrf.mxu0
    %1497 = vmatprep.mubr.f32.mxu0 0.0
    %1498 = vmatmul.mubr.f32.gmra.mxu0 %v1404
    %v1499 = vpop.f32.mrf.mxu0
    %v1500 = vadd.f32 %v1393, %v1499
    %v1501 = vpop.f32.mrf.mxu0
    %1502 = vmatprep.mubr.f32.mxu0 0.0
    %1503 = vmatmul.mubr.f32.gmra.mxu0 %v1407
    %v1504 = vpop.f32.mrf.mxu0
    %v1505 = vadd.f32 %v1393, %v1504
    %v1506 = vpop.f32.mrf.mxu0
    %1507 = vmatprep.mubr.f32.mxu0 0.0
    %1508 = vmatmul.mubr.f32.gmra.mxu0 %v1410
    %v1509 = vpop.f32.mrf.mxu0
    %v1510 = vadd.f32 %v1393, %v1509
    %v1511 = vpop.f32.mrf.mxu0
    %1512 = vmatprep.mubr.f32.mxu0 0.0
    %1513 = vmatmul.mubr.f32.gmra.mxu0 %v1413
    %v1514 = vpop.f32.mrf.mxu0
    %v1515 = vadd.f32 %v1393, %v1514
    %v1516 = vpop.f32.mrf.mxu0
    %1517 = vmatprep.mubr.f32.mxu0 0.0
    %1518 = vmatmul.mubr.f32.gmra.mxu0 %v1416
    %v1519 = vpop.f32.mrf.mxu0
    %v1520 = vadd.f32 %v1393, %v1519
    %v1521 = vpop.f32.mrf.mxu0
    %1522 = vdwg.mxu0
    %v1523 = vadd.f32 %v162, %v1485
    %v1524 = vadd.f32 %v163, %v1490
    %v1525 = vadd.f32 %v164, %v1495
    %v1526 = vadd.f32 %v165, %v1500
    %v1527 = vadd.f32 %v166, %v1505
    %v1528 = vadd.f32 %v167, %v1510
    %v1529 = vadd.f32 %v168, %v1515
    %v1530 = vadd.f32 %v169, %v1520
    %s1531 = scalar_lea.vmem %s4, 96
    %v1532 = vld [vmem:[%s1531] sm:$0xff]
    %v1533 = vld [vmem:[%s1531 + $0x8] sm:$0xff]
    %v1534 = vld [vmem:[%s1531 + $0x10] sm:$0xff]
    %v1535 = vld [vmem:[%s1531 + $0x18] sm:$0xff]
    %v1536 = vld [vmem:[%s1531 + $0x20] sm:$0xff]
    %v1537 = vld [vmem:[%s1531 + $0x28] sm:$0xff]
    %s1538 = scalar_lea.vmem %s4, 144
    %v1539 = vld [vmem:[%s1538] sm:$0xff]
    %v1540 = vld [vmem:[%s1538 + $0x8] sm:$0xff]
    %v1541 = vld [vmem:[%s1538 + $0x10] sm:$0xff]
    %v1542 = vld [vmem:[%s1538 + $0x18] sm:$0xff]
    %v1543 = vld [vmem:[%s1538 + $0x20] sm:$0xff]
    %v1544 = vld [vmem:[%s1538 + $0x28] sm:$0xff]
    %v1546 = vsel %vm183, %v1523, 0
    %v1549 = vsel %vm183, %v1524, 0
    %v1552 = vsel %vm183, %v1525, 0
    %v1555 = vsel %vm183, %v1526, 0
    %v1558 = vsel %vm183, %v1527, 0
    %v1561 = vsel %vm183, %v1528, 0
    %v1564 = vsel %vm183, %v1529, 0
    %v1567 = vsel %vm183, %v1530, 0
    %1569 = vmatprep.subr.mxu0 0.0
    %1570 = vmatpush1.msra.mxu0 0.0
    %1571 = vmatprep.subr.mxu0 0.0
    %1572 = vmatpush1.msra.mxu0 0.0
    %1573 = vmatprep.subr.mxu0 0.0
    %1574 = vmatpush1.msra.mxu0 0.0
    %1575 = vmatprep.subr.mxu0 0.0
    %1576 = vmatpush1.msra.mxu0 0.0
    %1577 = vmatprep.subr.mxu0 0.0
    %1578 = vmatpush1.msra.mxu0 0.0
    %1579 = vmatprep.subr.mxu0 0.0
    %1580 = vmatpush1.msra.mxu0 0.0
    %1581 = vmatprep.subr.mxu0 0.0
    %1582 = vmatpush1.msra.mxu0 0.0
    %1583 = vmatprep.subr.mxu0 0.0
    %1584 = vmatpush1.msra.mxu0 0.0
    %1585 = vmatprep.subr.mxu0 0.0
    %1586 = vmatpush1.msra.mxu0 0.0
    %1587 = vmatprep.subr.mxu0 0.0
    %1588 = vmatpush1.msra.mxu0 0.0
    %1589 = vmatprep.subr.mxu0 0.0
    %1590 = vmatpush1.msra.mxu0 %v1544
    %1591 = vmatprep.subr.mxu0 0.0
    %1592 = vmatpush1.msra.mxu0 %v1543
    %1593 = vmatprep.subr.mxu0 0.0
    %1594 = vmatpush1.msra.mxu0 %v1542
    %1595 = vmatprep.subr.mxu0 0.0
    %1596 = vmatpush1.msra.mxu0 %v1541
    %1597 = vmatprep.subr.mxu0 0.0
    %1598 = vmatpush1.msra.mxu0 %v1540
    %1599 = vmatprep.subr.mxu0 0.0
    %1600 = vmatpush1.msra.mxu0 %v1539
    %1601 = vmatprep.subr.mxu0 0.0
    %1602 = vmatpush2.msra.mxu0 0.0
    %1603 = vmatprep.subr.mxu0 0.0
    %1604 = vmatpush2.msra.mxu0 0.0
    %1605 = vmatprep.subr.mxu0 0.0
    %1606 = vmatpush2.msra.mxu0 0.0
    %1607 = vmatprep.subr.mxu0 0.0
    %1608 = vmatpush2.msra.mxu0 0.0
    %1609 = vmatprep.subr.mxu0 0.0
    %1610 = vmatpush2.msra.mxu0 0.0
    %1611 = vmatprep.subr.mxu0 0.0
    %1612 = vmatpush2.msra.mxu0 0.0
    %1613 = vmatprep.subr.mxu0 0.0
    %1614 = vmatpush2.msra.mxu0 0.0
    %1615 = vmatprep.subr.mxu0 0.0
    %1616 = vmatpush2.msra.mxu0 0.0
    %1617 = vmatprep.subr.mxu0 0.0
    %1618 = vmatpush2.msra.mxu0 0.0
    %1619 = vmatprep.subr.mxu0 0.0
    %1620 = vmatpush2.msra.mxu0 0.0
    %1621 = vmatprep.subr.mxu0 0.0
    %1622 = vmatpush2.msra.mxu0 0.0
    %1623 = vmatprep.subr.mxu0 0.0
    %1624 = vmatpush2.msra.mxu0 0.0
    %1625 = vmatprep.subr.mxu0 0.0
    %1626 = vmatpush2.msra.mxu0 0.0
    %1627 = vmatprep.subr.mxu0 0.0
    %1628 = vmatpush2.msra.mxu0 0.0
    %1629 = vmatprep.subr.mxu0 0.0
    %1630 = vmatpush2.msra.mxu0 0.0
    %1631 = vmatprep.subr.mxu0 0.0
    %1632 = vmatpush2.msra.mxu0 0.0
    %1633 = vmatprep.mubr.f32.mxu0 0.0
    %1634 = vmatmul.mubr.f32.gmra.mxu0 %v1546
    %v1635 = vpop.f32.mrf.mxu0
    %v1636 = vadd.f32 0.0, %v1635
    %v1637 = vpop.f32.mrf.mxu0
    %1638 = vmatprep.mubr.f32.mxu0 0.0
    %1639 = vmatmul.mubr.f32.gmra.mxu0 %v1549
    %v1640 = vpop.f32.mrf.mxu0
    %v1641 = vadd.f32 0.0, %v1640
    %v1642 = vpop.f32.mrf.mxu0
    %1643 = vmatprep.mubr.f32.mxu0 0.0
    %1644 = vmatmul.mubr.f32.gmra.mxu0 %v1552
    %v1645 = vpop.f32.mrf.mxu0
    %v1646 = vadd.f32 0.0, %v1645
    %v1647 = vpop.f32.mrf.mxu0
    %1648 = vmatprep.mubr.f32.mxu0 0.0
    %1649 = vmatmul.mubr.f32.gmra.mxu0 %v1555
    %v1650 = vpop.f32.mrf.mxu0
    %v1651 = vadd.f32 0.0, %v1650
    %v1652 = vpop.f32.mrf.mxu0
    %1653 = vmatprep.mubr.f32.mxu0 0.0
    %1654 = vmatmul.mubr.f32.gmra.mxu0 %v1558
    %v1655 = vpop.f32.mrf.mxu0
    %v1656 = vadd.f32 0.0, %v1655
    %v1657 = vpop.f32.mrf.mxu0
    %1658 = vmatprep.mubr.f32.mxu0 0.0
    %1659 = vmatmul.mubr.f32.gmra.mxu0 %v1561
    %v1660 = vpop.f32.mrf.mxu0
    %v1661 = vadd.f32 0.0, %v1660
    %v1662 = vpop.f32.mrf.mxu0
    %1663 = vmatprep.mubr.f32.mxu0 0.0
    %1664 = vmatmul.mubr.f32.gmra.mxu0 %v1564
    %v1665 = vpop.f32.mrf.mxu0
    %v1666 = vadd.f32 0.0, %v1665
    %v1667 = vpop.f32.mrf.mxu0
    %1668 = vmatprep.mubr.f32.mxu0 0.0
    %1669 = vmatmul.mubr.f32.gmra.mxu0 %v1567
    %v1670 = vpop.f32.mrf.mxu0
    %v1671 = vadd.f32 0.0, %v1670
    %v1672 = vpop.f32.mrf.mxu0
    %1673 = vdwg.mxu0
    %1674 = vmatprep.subr.mxu0 0.0
    %1675 = vmatpush1.msra.mxu0 0.0
    %1676 = vmatprep.subr.mxu0 0.0
    %1677 = vmatpush1.msra.mxu0 0.0
    %1678 = vmatprep.subr.mxu0 0.0
    %1679 = vmatpush1.msra.mxu0 0.0
    %1680 = vmatprep.subr.mxu0 0.0
    %1681 = vmatpush1.msra.mxu0 0.0
    %1682 = vmatprep.subr.mxu0 0.0
    %1683 = vmatpush1.msra.mxu0 0.0
    %1684 = vmatprep.subr.mxu0 0.0
    %1685 = vmatpush1.msra.mxu0 0.0
    %1686 = vmatprep.subr.mxu0 0.0
    %1687 = vmatpush1.msra.mxu0 0.0
    %1688 = vmatprep.subr.mxu0 0.0
    %1689 = vmatpush1.msra.mxu0 0.0
    %1690 = vmatprep.subr.mxu0 0.0
    %1691 = vmatpush1.msra.mxu0 0.0
    %1692 = vmatprep.subr.mxu0 0.0
    %1693 = vmatpush1.msra.mxu0 0.0
    %1694 = vmatprep.subr.mxu0 0.0
    %1695 = vmatpush1.msra.mxu0 %v1537
    %1696 = vmatprep.subr.mxu0 0.0
    %1697 = vmatpush1.msra.mxu0 %v1536
    %1698 = vmatprep.subr.mxu0 0.0
    %1699 = vmatpush1.msra.mxu0 %v1535
    %1700 = vmatprep.subr.mxu0 0.0
    %1701 = vmatpush1.msra.mxu0 %v1534
    %1702 = vmatprep.subr.mxu0 0.0
    %1703 = vmatpush1.msra.mxu0 %v1533
    %1704 = vmatprep.subr.mxu0 0.0
    %1705 = vmatpush1.msra.mxu0 %v1532
    %1706 = vmatprep.subr.mxu0 0.0
    %1707 = vmatpush2.msra.mxu0 0.0
    %1708 = vmatprep.subr.mxu0 0.0
    %1709 = vmatpush2.msra.mxu0 0.0
    %1710 = vmatprep.subr.mxu0 0.0
    %1711 = vmatpush2.msra.mxu0 0.0
    %1712 = vmatprep.subr.mxu0 0.0
    %1713 = vmatpush2.msra.mxu0 0.0
    %1714 = vmatprep.subr.mxu0 0.0
    %1715 = vmatpush2.msra.mxu0 0.0
    %1716 = vmatprep.subr.mxu0 0.0
    %1717 = vmatpush2.msra.mxu0 0.0
    %1718 = vmatprep.subr.mxu0 0.0
    %1719 = vmatpush2.msra.mxu0 0.0
    %1720 = vmatprep.subr.mxu0 0.0
    %1721 = vmatpush2.msra.mxu0 0.0
    %1722 = vmatprep.subr.mxu0 0.0
    %1723 = vmatpush2.msra.mxu0 0.0
    %1724 = vmatprep.subr.mxu0 0.0
    %1725 = vmatpush2.msra.mxu0 0.0
    %1726 = vmatprep.subr.mxu0 0.0
    %1727 = vmatpush2.msra.mxu0 0.0
    %1728 = vmatprep.subr.mxu0 0.0
    %1729 = vmatpush2.msra.mxu0 0.0
    %1730 = vmatprep.subr.mxu0 0.0
    %1731 = vmatpush2.msra.mxu0 0.0
    %1732 = vmatprep.subr.mxu0 0.0
    %1733 = vmatpush2.msra.mxu0 0.0
    %1734 = vmatprep.subr.mxu0 0.0
    %1735 = vmatpush2.msra.mxu0 0.0
    %1736 = vmatprep.subr.mxu0 0.0
    %1737 = vmatpush2.msra.mxu0 0.0
    %1738 = vmatprep.mubr.f32.mxu0 0.0
    %1739 = vmatmul.mubr.f32.gmra.mxu0 %v185
    %v1740 = vpop.f32.mrf.mxu0
    %v1741 = vadd.f32 %v1636, %v1740
    %v1742 = vpop.f32.mrf.mxu0
    %1743 = vmatprep.mubr.f32.mxu0 0.0
    %1744 = vmatmul.mubr.f32.gmra.mxu0 %v188
    %v1745 = vpop.f32.mrf.mxu0
    %v1746 = vadd.f32 %v1641, %v1745
    %v1747 = vpop.f32.mrf.mxu0
    %1748 = vmatprep.mubr.f32.mxu0 0.0
    %1749 = vmatmul.mubr.f32.gmra.mxu0 %v191
    %v1750 = vpop.f32.mrf.mxu0
    %v1751 = vadd.f32 %v1646, %v1750
    %v1752 = vpop.f32.mrf.mxu0
    %1753 = vmatprep.mubr.f32.mxu0 0.0
    %1754 = vmatmul.mubr.f32.gmra.mxu0 %v194
    %v1755 = vpop.f32.mrf.mxu0
    %v1756 = vadd.f32 %v1651, %v1755
    %v1757 = vpop.f32.mrf.mxu0
    %1758 = vmatprep.mubr.f32.mxu0 0.0
    %1759 = vmatmul.mubr.f32.gmra.mxu0 %v197
    %v1760 = vpop.f32.mrf.mxu0
    %v1761 = vadd.f32 %v1656, %v1760
    %v1762 = vpop.f32.mrf.mxu0
    %1763 = vmatprep.mubr.f32.mxu0 0.0
    %1764 = vmatmul.mubr.f32.gmra.mxu0 %v200
    %v1765 = vpop.f32.mrf.mxu0
    %v1766 = vadd.f32 %v1661, %v1765
    %v1767 = vpop.f32.mrf.mxu0
    %1768 = vmatprep.mubr.f32.mxu0 0.0
    %1769 = vmatmul.mubr.f32.gmra.mxu0 %v203
    %v1770 = vpop.f32.mrf.mxu0
    %v1771 = vadd.f32 %v1666, %v1770
    %v1772 = vpop.f32.mrf.mxu0
    %1773 = vmatprep.mubr.f32.mxu0 0.0
    %1774 = vmatmul.mubr.f32.gmra.mxu0 %v206
    %v1775 = vpop.f32.mrf.mxu0
    %v1776 = vadd.f32 %v1671, %v1775
    %v1777 = vpop.f32.mrf.mxu0
    %1778 = vdwg.mxu0
    %v1779 = vld [vmem:[#allocation10 + $0x2] sm:$0x1]
    %v1780 = vlaneseq
    %v1781 = vshrl.u32 %v1780, 7
    %v1782 = vsub.s32 0, %v1781
    %v1783 = vrot.slane %v1779, %v1782
    %v1784 = vadd.f32 %v1741, %v1783
    %v1785 = vadd.f32 %v1746, %v1783
    %v1786 = vadd.f32 %v1751, %v1783
    %v1787 = vadd.f32 %v1756, %v1783
    %v1788 = vadd.f32 %v1761, %v1783
    %v1789 = vadd.f32 %v1766, %v1783
    %v1790 = vadd.f32 %v1771, %v1783
    %v1791 = vadd.f32 %v1776, %v1783
    %v1792 = vld [vmem:[#allocation10 + $0x3] sm:$0x1]
    %v1793 = vld [vmem:[#allocation10 + $0x4] sm:$0x1]
    %v1794 = vsel %vm183, %v1784, 0.0
    %1795 = vadd.xlane.f32.xlu0 %v1794
    %v1796 = vpop.xlane.xlu0 %1795
    %v1797 = vsel %vm183, %v1785, 0.0
    %1798 = vadd.xlane.f32.xlu0 %v1797
    %v1799 = vpop.xlane.xlu0 %1798
    %v1800 = vsel %vm183, %v1786, 0.0
    %1801 = vadd.xlane.f32.xlu0 %v1800
    %v1802 = vpop.xlane.xlu0 %1801
    %v1803 = vsel %vm183, %v1787, 0.0
    %1804 = vadd.xlane.f32.xlu0 %v1803
    %v1805 = vpop.xlane.xlu0 %1804
    %v1806 = vsel %vm183, %v1788, 0.0
    %1807 = vadd.xlane.f32.xlu0 %v1806
    %v1808 = vpop.xlane.xlu0 %1807
    %v1809 = vsel %vm183, %v1789, 0.0
    %1810 = vadd.xlane.f32.xlu0 %v1809
    %v1811 = vpop.xlane.xlu0 %1810
    %v1812 = vsel %vm183, %v1790, 0.0
    %1813 = vadd.xlane.f32.xlu0 %v1812
    %v1814 = vpop.xlane.xlu0 %1813
    %v1815 = vsel %vm183, %v1791, 0.0
    %1816 = vadd.xlane.f32.xlu0 %v1815
    %v1817 = vpop.xlane.xlu0 %1816
    %v1818 = vrcp.pop 48.0
    %v1819 = vmul.f32 %v1796, %v1818
    %v1820 = vmul.f32 %v1799, %v1818
    %v1821 = vmul.f32 %v1802, %v1818
    %v1822 = vmul.f32 %v1805, %v1818
    %v1823 = vmul.f32 %v1808, %v1818
    %v1824 = vmul.f32 %v1811, %v1818
    %v1825 = vmul.f32 %v1814, %v1818
    %v1826 = vmul.f32 %v1817, %v1818
    %v1827 = vsub.f32 %v1784, %v1819
    %v1828 = vsub.f32 %v1785, %v1820
    %v1829 = vsub.f32 %v1786, %v1821
    %v1830 = vsub.f32 %v1787, %v1822
    %v1831 = vsub.f32 %v1788, %v1823
    %v1832 = vsub.f32 %v1789, %v1824
    %v1833 = vsub.f32 %v1790, %v1825
    %v1834 = vsub.f32 %v1791, %v1826
    %v1835 = vmul.f32 %v1827, %v1827
    %v1836 = vmul.f32 %v1828, %v1828
    %v1837 = vmul.f32 %v1829, %v1829
    %v1838 = vmul.f32 %v1830, %v1830
    %v1839 = vmul.f32 %v1831, %v1831
    %v1840 = vmul.f32 %v1832, %v1832
    %v1841 = vmul.f32 %v1833, %v1833
    %v1842 = vmul.f32 %v1834, %v1834
    %v1843 = vsel %vm183, %v1835, 0.0
    %1844 = vadd.xlane.f32.xlu0 %v1843
    %v1845 = vpop.xlane.xlu0 %1844
    %v1846 = vsel %vm183, %v1836, 0.0
    %1847 = vadd.xlane.f32.xlu0 %v1846
    %v1848 = vpop.xlane.xlu0 %1847
    %v1849 = vsel %vm183, %v1837, 0.0
    %1850 = vadd.xlane.f32.xlu0 %v1849
    %v1851 = vpop.xlane.xlu0 %1850
    %v1852 = vsel %vm183, %v1838, 0.0
    %1853 = vadd.xlane.f32.xlu0 %v1852
    %v1854 = vpop.xlane.xlu0 %1853
    %v1855 = vsel %vm183, %v1839, 0.0
    %1856 = vadd.xlane.f32.xlu0 %v1855
    %v1857 = vpop.xlane.xlu0 %1856
    %v1858 = vsel %vm183, %v1840, 0.0
    %1859 = vadd.xlane.f32.xlu0 %v1858
    %v1860 = vpop.xlane.xlu0 %1859
    %v1861 = vsel %vm183, %v1841, 0.0
    %1862 = vadd.xlane.f32.xlu0 %v1861
    %v1863 = vpop.xlane.xlu0 %1862
    %v1864 = vsel %vm183, %v1842, 0.0
    %1865 = vadd.xlane.f32.xlu0 %v1864
    %v1866 = vpop.xlane.xlu0 %1865
    %v1867 = vmul.f32 %v1845, %v1818
    %v1868 = vmul.f32 %v1848, %v1818
    %v1869 = vmul.f32 %v1851, %v1818
    %v1870 = vmul.f32 %v1854, %v1818
    %v1871 = vmul.f32 %v1857, %v1818
    %v1872 = vmul.f32 %v1860, %v1818
    %v1873 = vmul.f32 %v1863, %v1818
    %v1874 = vmul.f32 %v1866, %v1818
    %v1875 = vadd.f32 %v1867, 1e-05
    %v1876 = vadd.f32 %v1868, 1e-05
    %v1877 = vadd.f32 %v1869, 1e-05
    %v1878 = vadd.f32 %v1870, 1e-05
    %v1879 = vadd.f32 %v1871, 1e-05
    %v1880 = vadd.f32 %v1872, 1e-05
    %v1881 = vadd.f32 %v1873, 1e-05
    %v1882 = vadd.f32 %v1874, 1e-05
    %v1883 = vrsqrt.pop %v1875
    %v1884 = vrsqrt.pop %v1876
    %v1885 = vrsqrt.pop %v1877
    %v1886 = vrsqrt.pop %v1878
    %v1887 = vrsqrt.pop %v1879
    %v1888 = vrsqrt.pop %v1880
    %v1889 = vrsqrt.pop %v1881
    %v1890 = vrsqrt.pop %v1882
    %v1891 = vmul.f32 %v1827, %v1883
    %v1892 = vmul.f32 %v1828, %v1884
    %v1893 = vmul.f32 %v1829, %v1885
    %v1894 = vmul.f32 %v1830, %v1886
    %v1895 = vmul.f32 %v1831, %v1887
    %v1896 = vmul.f32 %v1832, %v1888
    %v1897 = vmul.f32 %v1833, %v1889
    %v1898 = vmul.f32 %v1834, %v1890
    %v1899 = vlaneseq
    %v1900 = vshrl.u32 %v1899, 7
    %v1901 = vsub.s32 0, %v1900
    %v1902 = vrot.slane %v1792, %v1901
    %v1903 = vmul.f32 %v1891, %v1902
    %v1904 = vmul.f32 %v1892, %v1902
    %v1905 = vmul.f32 %v1893, %v1902
    %v1906 = vmul.f32 %v1894, %v1902
    %v1907 = vmul.f32 %v1895, %v1902
    %v1908 = vmul.f32 %v1896, %v1902
    %v1909 = vmul.f32 %v1897, %v1902
    %v1910 = vmul.f32 %v1898, %v1902
    %v1911 = vlaneseq
    %v1912 = vshrl.u32 %v1911, 7
    %v1913 = vsub.s32 0, %v1912
    %v1914 = vrot.slane %v1793, %v1913
    %v1915 = vadd.f32 %v1903, %v1914
    %v1916 = vadd.f32 %v1904, %v1914
    %v1917 = vadd.f32 %v1905, %v1914
    %v1918 = vadd.f32 %v1906, %v1914
    %v1919 = vadd.f32 %v1907, %v1914
    %v1920 = vadd.f32 %v1908, %v1914
    %v1921 = vadd.f32 %v1909, %v1914
    %v1922 = vadd.f32 %v1910, %v1914
    %v1923 = vxor.u32 %v1915, 2147483648
    %v1924 = vxor.u32 %v1916, 2147483648
    %v1925 = vxor.u32 %v1917, 2147483648
    %v1926 = vxor.u32 %v1918, 2147483648
    %v1927 = vxor.u32 %v1919, 2147483648
    %v1928 = vxor.u32 %v1920, 2147483648
    %v1929 = vxor.u32 %v1921, 2147483648
    %v1930 = vxor.u32 %v1922, 2147483648
    %v1931 = vmul.f32 %v1923, 1.442695
    %v1932 = vpow.pop %v1931
    %v1933 = vmul.f32 %v1924, 1.442695
    %v1934 = vpow.pop %v1933
    %v1935 = vmul.f32 %v1925, 1.442695
    %v1936 = vpow.pop %v1935
    %v1937 = vmul.f32 %v1926, 1.442695
    %v1938 = vpow.pop %v1937
    %v1939 = vmul.f32 %v1927, 1.442695
    %v1940 = vpow.pop %v1939
    %v1941 = vmul.f32 %v1928, 1.442695
    %v1942 = vpow.pop %v1941
    %v1943 = vmul.f32 %v1929, 1.442695
    %v1944 = vpow.pop %v1943
    %v1945 = vmul.f32 %v1930, 1.442695
    %v1946 = vpow.pop %v1945
    %v1947 = vadd.f32 %v1932, 1.0
    %v1948 = vadd.f32 %v1934, 1.0
    %v1949 = vadd.f32 %v1936, 1.0
    %v1950 = vadd.f32 %v1938, 1.0
    %v1951 = vadd.f32 %v1940, 1.0
    %v1952 = vadd.f32 %v1942, 1.0
    %v1953 = vadd.f32 %v1944, 1.0
    %v1954 = vadd.f32 %v1946, 1.0
    %v1955 = vrcp.pop %v1947
    %v1956 = vmul.f32 1.0, %v1955
    %v1957 = vrcp.pop %v1948
    %v1958 = vmul.f32 1.0, %v1957
    %v1959 = vrcp.pop %v1949
    %v1960 = vmul.f32 1.0, %v1959
    %v1961 = vrcp.pop %v1950
    %v1962 = vmul.f32 1.0, %v1961
    %v1963 = vrcp.pop %v1951
    %v1964 = vmul.f32 1.0, %v1963
    %v1965 = vrcp.pop %v1952
    %v1966 = vmul.f32 1.0, %v1965
    %v1967 = vrcp.pop %v1953
    %v1968 = vmul.f32 1.0, %v1967
    %v1969 = vrcp.pop %v1954
    %v1970 = vmul.f32 1.0, %v1969
    %v1971 = vmul.f32 %v1956, %v1523
    %v1972 = vmul.f32 %v1958, %v1524
    %v1973 = vmul.f32 %v1960, %v1525
    %v1974 = vmul.f32 %v1962, %v1526
    %v1975 = vmul.f32 %v1964, %v1527
    %v1976 = vmul.f32 %v1966, %v1528
    %v1977 = vmul.f32 %v1968, %v1529
    %v1978 = vmul.f32 %v1970, %v1530
    %v1979 = vadd.f32 %v162, %v1971
    %v1980 = vadd.f32 %v163, %v1972
    %v1981 = vadd.f32 %v164, %v1973
    %v1982 = vadd.f32 %v165, %v1974
    %v1983 = vadd.f32 %v166, %v1975
    %v1984 = vadd.f32 %v167, %v1976
    %v1985 = vadd.f32 %v168, %v1977
    %v1986 = vadd.f32 %v169, %v1978
    %v1987 = vld [vmem:[#allocation10 + $0x5] sm:$0x1]
    %v1988 = vld [vmem:[#allocation10 + $0x6] sm:$0x1]
    %v1989 = vsel %vm183, %v1979, 0.0
    %1990 = vadd.xlane.f32.xlu0 %v1989
    %v1991 = vpop.xlane.xlu0 %1990
    %v1992 = vsel %vm183, %v1980, 0.0
    %1993 = vadd.xlane.f32.xlu0 %v1992
    %v1994 = vpop.xlane.xlu0 %1993
    %v1995 = vsel %vm183, %v1981, 0.0
    %1996 = vadd.xlane.f32.xlu0 %v1995
    %v1997 = vpop.xlane.xlu0 %1996
    %v1998 = vsel %vm183, %v1982, 0.0
    %1999 = vadd.xlane.f32.xlu0 %v1998
    %v2000 = vpop.xlane.xlu0 %1999
    %v2001 = vsel %vm183, %v1983, 0.0
    %2002 = vadd.xlane.f32.xlu0 %v2001
    %v2003 = vpop.xlane.xlu0 %2002
    %v2004 = vsel %vm183, %v1984, 0.0
    %2005 = vadd.xlane.f32.xlu0 %v2004
    %v2006 = vpop.xlane.xlu0 %2005
    %v2007 = vsel %vm183, %v1985, 0.0
    %2008 = vadd.xlane.f32.xlu0 %v2007
    %v2009 = vpop.xlane.xlu0 %2008
    %v2010 = vsel %vm183, %v1986, 0.0
    %2011 = vadd.xlane.f32.xlu0 %v2010
    %v2012 = vpop.xlane.xlu0 %2011
    %v2013 = vmul.f32 %v1991, %v1818
    %v2014 = vmul.f32 %v1994, %v1818
    %v2015 = vmul.f32 %v1997, %v1818
    %v2016 = vmul.f32 %v2000, %v1818
    %v2017 = vmul.f32 %v2003, %v1818
    %v2018 = vmul.f32 %v2006, %v1818
    %v2019 = vmul.f32 %v2009, %v1818
    %v2020 = vmul.f32 %v2012, %v1818
    %v2021 = vsub.f32 %v1979, %v2013
    %v2022 = vsub.f32 %v1980, %v2014
    %v2023 = vsub.f32 %v1981, %v2015
    %v2024 = vsub.f32 %v1982, %v2016
    %v2025 = vsub.f32 %v1983, %v2017
    %v2026 = vsub.f32 %v1984, %v2018
    %v2027 = vsub.f32 %v1985, %v2019
    %v2028 = vsub.f32 %v1986, %v2020
    %v2029 = vmul.f32 %v2021, %v2021
    %v2030 = vmul.f32 %v2022, %v2022
    %v2031 = vmul.f32 %v2023, %v2023
    %v2032 = vmul.f32 %v2024, %v2024
    %v2033 = vmul.f32 %v2025, %v2025
    %v2034 = vmul.f32 %v2026, %v2026
    %v2035 = vmul.f32 %v2027, %v2027
    %v2036 = vmul.f32 %v2028, %v2028
    %v2037 = vsel %vm183, %v2029, 0.0
    %2038 = vadd.xlane.f32.xlu0 %v2037
    %v2039 = vpop.xlane.xlu0 %2038
    %v2040 = vsel %vm183, %v2030, 0.0
    %2041 = vadd.xlane.f32.xlu0 %v2040
    %v2042 = vpop.xlane.xlu0 %2041
    %v2043 = vsel %vm183, %v2031, 0.0
    %2044 = vadd.xlane.f32.xlu0 %v2043
    %v2045 = vpop.xlane.xlu0 %2044
    %v2046 = vsel %vm183, %v2032, 0.0
    %2047 = vadd.xlane.f32.xlu0 %v2046
    %v2048 = vpop.xlane.xlu0 %2047
    %v2049 = vsel %vm183, %v2033, 0.0
    %2050 = vadd.xlane.f32.xlu0 %v2049
    %v2051 = vpop.xlane.xlu0 %2050
    %v2052 = vsel %vm183, %v2034, 0.0
    %2053 = vadd.xlane.f32.xlu0 %v2052
    %v2054 = vpop.xlane.xlu0 %2053
    %v2055 = vsel %vm183, %v2035, 0.0
    %2056 = vadd.xlane.f32.xlu0 %v2055
    %v2057 = vpop.xlane.xlu0 %2056
    %v2058 = vsel %vm183, %v2036, 0.0
    %2059 = vadd.xlane.f32.xlu0 %v2058
    %v2060 = vpop.xlane.xlu0 %2059
    %v2061 = vmul.f32 %v2039, %v1818
    %v2062 = vmul.f32 %v2042, %v1818
    %v2063 = vmul.f32 %v2045, %v1818
    %v2064 = vmul.f32 %v2048, %v1818
    %v2065 = vmul.f32 %v2051, %v1818
    %v2066 = vmul.f32 %v2054, %v1818
    %v2067 = vmul.f32 %v2057, %v1818
    %v2068 = vmul.f32 %v2060, %v1818
    %v2069 = vadd.f32 %v2061, 1e-05
    %v2070 = vadd.f32 %v2062, 1e-05
    %v2071 = vadd.f32 %v2063, 1e-05
    %v2072 = vadd.f32 %v2064, 1e-05
    %v2073 = vadd.f32 %v2065, 1e-05
    %v2074 = vadd.f32 %v2066, 1e-05
    %v2075 = vadd.f32 %v2067, 1e-05
    %v2076 = vadd.f32 %v2068, 1e-05
    %v2077 = vrsqrt.pop %v2069
    %v2078 = vrsqrt.pop %v2070
    %v2079 = vrsqrt.pop %v2071
    %v2080 = vrsqrt.pop %v2072
    %v2081 = vrsqrt.pop %v2073
    %v2082 = vrsqrt.pop %v2074
    %v2083 = vrsqrt.pop %v2075
    %v2084 = vrsqrt.pop %v2076
    %v2085 = vmul.f32 %v2021, %v2077
    %v2086 = vmul.f32 %v2022, %v2078
    %v2087 = vmul.f32 %v2023, %v2079
    %v2088 = vmul.f32 %v2024, %v2080
    %v2089 = vmul.f32 %v2025, %v2081
    %v2090 = vmul.f32 %v2026, %v2082
    %v2091 = vmul.f32 %v2027, %v2083
    %v2092 = vmul.f32 %v2028, %v2084
    %v2093 = vlaneseq
    %v2094 = vshrl.u32 %v2093, 7
    %v2095 = vsub.s32 0, %v2094
    %v2096 = vrot.slane %v1987, %v2095
    %v2097 = vmul.f32 %v2085, %v2096
    %v2098 = vmul.f32 %v2086, %v2096
    %v2099 = vmul.f32 %v2087, %v2096
    %v2100 = vmul.f32 %v2088, %v2096
    %v2101 = vmul.f32 %v2089, %v2096
    %v2102 = vmul.f32 %v2090, %v2096
    %v2103 = vmul.f32 %v2091, %v2096
    %v2104 = vmul.f32 %v2092, %v2096
    %v2105 = vlaneseq
    %v2106 = vshrl.u32 %v2105, 7
    %v2107 = vsub.s32 0, %v2106
    %v2108 = vrot.slane %v1988, %v2107
    %v2109 = vadd.f32 %v2097, %v2108
    %v2110 = vadd.f32 %v2098, %v2108
    %v2111 = vadd.f32 %v2099, %v2108
    %v2112 = vadd.f32 %v2100, %v2108
    %v2113 = vadd.f32 %v2101, %v2108
    %v2114 = vadd.f32 %v2102, %v2108
    %v2115 = vadd.f32 %v2103, %v2108
    %v2116 = vadd.f32 %v2104, %v2108
    %v2117 = vld [vmem:[%s2] sm:$0xff]
    %v2118 = vld [vmem:[%s2 + $0x8] sm:$0xff]
    %v2119 = vld [vmem:[%s2 + $0x10] sm:$0xff]
    %v2120 = vld [vmem:[%s2 + $0x18] sm:$0xff]
    %v2121 = vld [vmem:[%s2 + $0x20] sm:$0xff]
    %v2122 = vld [vmem:[%s2 + $0x28] sm:$0xff]
    %v2123 = vld [vmem:[%s2 + $0x30] sm:$0xff]
    %v2124 = vld [vmem:[%s2 + $0x38] sm:$0xff]
    %v2125 = vld [vmem:[%s7] sm:$0xff]
    %v2126 = vld [vmem:[%s7 + $0x8] sm:$0xff]
    %v2127 = vld [vmem:[%s7 + $0x10] sm:$0xff]
    %v2128 = vld [vmem:[%s7 + $0x18] sm:$0xff]
    %v2129 = vld [vmem:[%s7 + $0x20] sm:$0xff]
    %v2130 = vld [vmem:[%s7 + $0x28] sm:$0xff]
    %v2131 = vld [vmem:[%s8] sm:$0x7]
    %vm2132 = vcmask 23552
    %v2134 = vsel %vm2132, %v2117, 0
    %v2137 = vsel %vm2132, %v2118, 0
    %v2140 = vsel %vm2132, %v2119, 0
    %v2143 = vsel %vm2132, %v2120, 0
    %v2146 = vsel %vm2132, %v2121, 0
    %v2149 = vsel %vm2132, %v2122, 0
    %v2152 = vsel %vm2132, %v2123, 0
    %v2155 = vsel %vm2132, %v2124, 0
    %vm2157 = vcmask 1042432
    %v2159 = vsel %vm2157, %v2131, 0
    %2161 = vmatprep.subr.mxu0 0.0
    %2162 = vmatpush1.msra.mxu0 0.0
    %2163 = vmatprep.subr.mxu0 0.0
    %2164 = vmatpush1.msra.mxu0 0.0
    %2165 = vmatprep.subr.mxu0 0.0
    %2166 = vmatpush1.msra.mxu0 0.0
    %2167 = vmatprep.subr.mxu0 0.0
    %2168 = vmatpush1.msra.mxu0 0.0
    %2169 = vmatprep.subr.mxu0 0.0
    %2170 = vmatpush1.msra.mxu0 0.0
    %2171 = vmatprep.subr.mxu0 0.0
    %2172 = vmatpush1.msra.mxu0 0.0
    %2173 = vmatprep.subr.mxu0 0.0
    %2174 = vmatpush1.msra.mxu0 0.0
    %2175 = vmatprep.subr.mxu0 0.0
    %2176 = vmatpush1.msra.mxu0 0.0
    %2177 = vmatprep.subr.mxu0 0.0
    %2178 = vmatpush1.msra.mxu0 0.0
    %2179 = vmatprep.subr.mxu0 0.0
    %2180 = vmatpush1.msra.mxu0 0.0
    %2181 = vmatprep.subr.mxu0 0.0
    %2182 = vmatpush1.msra.mxu0 0.0
    %2183 = vmatprep.subr.mxu0 0.0
    %2184 = vmatpush1.msra.mxu0 0.0
    %2185 = vmatprep.subr.mxu0 0.0
    %2186 = vmatpush1.msra.mxu0 0.0
    %2187 = vmatprep.subr.mxu0 0.0
    %2188 = vmatpush1.msra.mxu0 0.0
    %2189 = vmatprep.subr.mxu0 0.0
    %2190 = vmatpush1.msra.mxu0 0.0
    %2191 = vmatprep.subr.mxu0 0.0
    %2192 = vmatpush1.msra.mxu0 %v2159
    %2193 = vmatprep.subr.mxu0 0.0
    %2194 = vmatpush2.msra.mxu0 0.0
    %2195 = vmatprep.subr.mxu0 0.0
    %2196 = vmatpush2.msra.mxu0 0.0
    %2197 = vmatprep.subr.mxu0 0.0
    %2198 = vmatpush2.msra.mxu0 0.0
    %2199 = vmatprep.subr.mxu0 0.0
    %2200 = vmatpush2.msra.mxu0 0.0
    %2201 = vmatprep.subr.mxu0 0.0
    %2202 = vmatpush2.msra.mxu0 0.0
    %2203 = vmatprep.subr.mxu0 0.0
    %2204 = vmatpush2.msra.mxu0 0.0
    %2205 = vmatprep.subr.mxu0 0.0
    %2206 = vmatpush2.msra.mxu0 0.0
    %2207 = vmatprep.subr.mxu0 0.0
    %2208 = vmatpush2.msra.mxu0 0.0
    %2209 = vmatprep.subr.mxu0 0.0
    %2210 = vmatpush2.msra.mxu0 0.0
    %2211 = vmatprep.subr.mxu0 0.0
    %2212 = vmatpush2.msra.mxu0 0.0
    %2213 = vmatprep.subr.mxu0 0.0
    %2214 = vmatpush2.msra.mxu0 0.0
    %2215 = vmatprep.subr.mxu0 0.0
    %2216 = vmatpush2.msra.mxu0 0.0
    %2217 = vmatprep.subr.mxu0 0.0
    %2218 = vmatpush2.msra.mxu0 0.0
    %2219 = vmatprep.subr.mxu0 0.0
    %2220 = vmatpush2.msra.mxu0 0.0
    %2221 = vmatprep.subr.mxu0 0.0
    %2222 = vmatpush2.msra.mxu0 0.0
    %2223 = vmatprep.subr.mxu0 0.0
    %2224 = vmatpush2.msra.mxu0 0.0
    %2225 = vmatprep.mubr.f32.mxu0 0.0
    %2226 = vmatmul.mubr.f32.gmra.mxu0 %v2134
    %v2227 = vpop.f32.mrf.mxu0
    %v2228 = vadd.f32 0.0, %v2227
    %v2229 = vpop.f32.mrf.mxu0
    %2230 = vmatprep.mubr.f32.mxu0 0.0
    %2231 = vmatmul.mubr.f32.gmra.mxu0 %v2137
    %v2232 = vpop.f32.mrf.mxu0
    %v2233 = vadd.f32 0.0, %v2232
    %v2234 = vpop.f32.mrf.mxu0
    %2235 = vmatprep.mubr.f32.mxu0 0.0
    %2236 = vmatmul.mubr.f32.gmra.mxu0 %v2140
    %v2237 = vpop.f32.mrf.mxu0
    %v2238 = vadd.f32 0.0, %v2237
    %v2239 = vpop.f32.mrf.mxu0
    %2240 = vmatprep.mubr.f32.mxu0 0.0
    %2241 = vmatmul.mubr.f32.gmra.mxu0 %v2143
    %v2242 = vpop.f32.mrf.mxu0
    %v2243 = vadd.f32 0.0, %v2242
    %v2244 = vpop.f32.mrf.mxu0
    %2245 = vmatprep.mubr.f32.mxu0 0.0
    %2246 = vmatmul.mubr.f32.gmra.mxu0 %v2146
    %v2247 = vpop.f32.mrf.mxu0
    %v2248 = vadd.f32 0.0, %v2247
    %v2249 = vpop.f32.mrf.mxu0
    %2250 = vmatprep.mubr.f32.mxu0 0.0
    %2251 = vmatmul.mubr.f32.gmra.mxu0 %v2149
    %v2252 = vpop.f32.mrf.mxu0
    %v2253 = vadd.f32 0.0, %v2252
    %v2254 = vpop.f32.mrf.mxu0
    %2255 = vmatprep.mubr.f32.mxu0 0.0
    %2256 = vmatmul.mubr.f32.gmra.mxu0 %v2152
    %v2257 = vpop.f32.mrf.mxu0
    %v2258 = vadd.f32 0.0, %v2257
    %v2259 = vpop.f32.mrf.mxu0
    %2260 = vmatprep.mubr.f32.mxu0 0.0
    %2261 = vmatmul.mubr.f32.gmra.mxu0 %v2155
    %v2262 = vpop.f32.mrf.mxu0
    %v2263 = vadd.f32 0.0, %v2262
    %v2264 = vpop.f32.mrf.mxu0
    %2265 = vdwg.mxu0
    %v2267 = vsel %vm183, %v2109, 0
    %v2270 = vsel %vm183, %v2110, 0
    %v2273 = vsel %vm183, %v2111, 0
    %v2276 = vsel %vm183, %v2112, 0
    %v2279 = vsel %vm183, %v2113, 0
    %v2282 = vsel %vm183, %v2114, 0
    %v2285 = vsel %vm183, %v2115, 0
    %v2288 = vsel %vm183, %v2116, 0
    %2290 = vmatprep.subr.mxu0 0.0
    %2291 = vmatpush1.msra.mxu0 0.0
    %2292 = vmatprep.subr.mxu0 0.0
    %2293 = vmatpush1.msra.mxu0 0.0
    %2294 = vmatprep.subr.mxu0 0.0
    %2295 = vmatpush1.msra.mxu0 0.0
    %2296 = vmatprep.subr.mxu0 0.0
    %2297 = vmatpush1.msra.mxu0 0.0
    %2298 = vmatprep.subr.mxu0 0.0
    %2299 = vmatpush1.msra.mxu0 0.0
    %2300 = vmatprep.subr.mxu0 0.0
    %2301 = vmatpush1.msra.mxu0 0.0
    %2302 = vmatprep.subr.mxu0 0.0
    %2303 = vmatpush1.msra.mxu0 0.0
    %2304 = vmatprep.subr.mxu0 0.0
    %2305 = vmatpush1.msra.mxu0 0.0
    %2306 = vmatprep.subr.mxu0 0.0
    %2307 = vmatpush1.msra.mxu0 0.0
    %2308 = vmatprep.subr.mxu0 0.0
    %2309 = vmatpush1.msra.mxu0 0.0
    %2310 = vmatprep.subr.mxu0 0.0
    %2311 = vmatpush1.msra.mxu0 %v2130
    %2312 = vmatprep.subr.mxu0 0.0
    %2313 = vmatpush1.msra.mxu0 %v2129
    %2314 = vmatprep.subr.mxu0 0.0
    %2315 = vmatpush1.msra.mxu0 %v2128
    %2316 = vmatprep.subr.mxu0 0.0
    %2317 = vmatpush1.msra.mxu0 %v2127
    %2318 = vmatprep.subr.mxu0 0.0
    %2319 = vmatpush1.msra.mxu0 %v2126
    %2320 = vmatprep.subr.mxu0 0.0
    %2321 = vmatpush1.msra.mxu0 %v2125
    %2322 = vmatprep.subr.mxu0 0.0
    %2323 = vmatpush2.msra.mxu0 0.0
    %2324 = vmatprep.subr.mxu0 0.0
    %2325 = vmatpush2.msra.mxu0 0.0
    %2326 = vmatprep.subr.mxu0 0.0
    %2327 = vmatpush2.msra.mxu0 0.0
    %2328 = vmatprep.subr.mxu0 0.0
    %2329 = vmatpush2.msra.mxu0 0.0
    %2330 = vmatprep.subr.mxu0 0.0
    %2331 = vmatpush2.msra.mxu0 0.0
    %2332 = vmatprep.subr.mxu0 0.0
    %2333 = vmatpush2.msra.mxu0 0.0
    %2334 = vmatprep.subr.mxu0 0.0
    %2335 = vmatpush2.msra.mxu0 0.0
    %2336 = vmatprep.subr.mxu0 0.0
    %2337 = vmatpush2.msra.mxu0 0.0
    %2338 = vmatprep.subr.mxu0 0.0
    %2339 = vmatpush2.msra.mxu0 0.0
    %2340 = vmatprep.subr.mxu0 0.0
    %2341 = vmatpush2.msra.mxu0 0.0
    %2342 = vmatprep.subr.mxu0 0.0
    %2343 = vmatpush2.msra.mxu0 0.0
    %2344 = vmatprep.subr.mxu0 0.0
    %2345 = vmatpush2.msra.mxu0 0.0
    %2346 = vmatprep.subr.mxu0 0.0
    %2347 = vmatpush2.msra.mxu0 0.0
    %2348 = vmatprep.subr.mxu0 0.0
    %2349 = vmatpush2.msra.mxu0 0.0
    %2350 = vmatprep.subr.mxu0 0.0
    %2351 = vmatpush2.msra.mxu0 0.0
    %2352 = vmatprep.subr.mxu0 0.0
    %2353 = vmatpush2.msra.mxu0 0.0
    %2354 = vmatprep.mubr.f32.mxu0 0.0
    %2355 = vmatmul.mubr.f32.gmra.mxu0 %v2267
    %v2356 = vpop.f32.mrf.mxu0
    %v2357 = vadd.f32 %v2228, %v2356
    %v2358 = vpop.f32.mrf.mxu0
    %2359 = vmatprep.mubr.f32.mxu0 0.0
    %2360 = vmatmul.mubr.f32.gmra.mxu0 %v2270
    %v2361 = vpop.f32.mrf.mxu0
    %v2362 = vadd.f32 %v2233, %v2361
    %v2363 = vpop.f32.mrf.mxu0
    %2364 = vmatprep.mubr.f32.mxu0 0.0
    %2365 = vmatmul.mubr.f32.gmra.mxu0 %v2273
    %v2366 = vpop.f32.mrf.mxu0
    %v2367 = vadd.f32 %v2238, %v2366
    %v2368 = vpop.f32.mrf.mxu0
    %2369 = vmatprep.mubr.f32.mxu0 0.0
    %2370 = vmatmul.mubr.f32.gmra.mxu0 %v2276
    %v2371 = vpop.f32.mrf.mxu0
    %v2372 = vadd.f32 %v2243, %v2371
    %v2373 = vpop.f32.mrf.mxu0
    %2374 = vmatprep.mubr.f32.mxu0 0.0
    %2375 = vmatmul.mubr.f32.gmra.mxu0 %v2279
    %v2376 = vpop.f32.mrf.mxu0
    %v2377 = vadd.f32 %v2248, %v2376
    %v2378 = vpop.f32.mrf.mxu0
    %2379 = vmatprep.mubr.f32.mxu0 0.0
    %2380 = vmatmul.mubr.f32.gmra.mxu0 %v2282
    %v2381 = vpop.f32.mrf.mxu0
    %v2382 = vadd.f32 %v2253, %v2381
    %v2383 = vpop.f32.mrf.mxu0
    %2384 = vmatprep.mubr.f32.mxu0 0.0
    %2385 = vmatmul.mubr.f32.gmra.mxu0 %v2285
    %v2386 = vpop.f32.mrf.mxu0
    %v2387 = vadd.f32 %v2258, %v2386
    %v2388 = vpop.f32.mrf.mxu0
    %2389 = vmatprep.mubr.f32.mxu0 0.0
    %2390 = vmatmul.mubr.f32.gmra.mxu0 %v2288
    %v2391 = vpop.f32.mrf.mxu0
    %v2392 = vadd.f32 %v2263, %v2391
    %v2393 = vpop.f32.mrf.mxu0
    %2394 = vdwg.mxu0
    %v2395 = vld [vmem:[#allocation13] sm:$0x1]
    %v2396 = vlaneseq
    %v2397 = vshrl.u32 %v2396, 7
    %v2398 = vsub.s32 0, %v2397
    %v2399 = vrot.slane %v2395, %v2398
    %v2400 = vadd.f32 %v2357, %v2399
    %v2401 = vadd.f32 %v2362, %v2399
    %v2402 = vadd.f32 %v2367, %v2399
    %v2403 = vadd.f32 %v2372, %v2399
    %v2404 = vadd.f32 %v2377, %v2399
    %v2405 = vadd.f32 %v2382, %v2399
    %v2406 = vadd.f32 %v2387, %v2399
    %v2407 = vadd.f32 %v2392, %v2399
    %v2408 = vld [vmem:[#allocation13 + $0x1] sm:$0x1]
    %v2409 = vld [vmem:[#allocation13 + $0x2] sm:$0x1]
    %vm2410 = vcmask 203776
    %v2411 = vsel %vm2410, %v2400, 0.0
    %2412 = vadd.xlane.f32.xlu0 %v2411
    %v2413 = vpop.xlane.xlu0 %2412
    %v2414 = vsel %vm2410, %v2401, 0.0
    %2415 = vadd.xlane.f32.xlu0 %v2414
    %v2416 = vpop.xlane.xlu0 %2415
    %v2417 = vsel %vm2410, %v2402, 0.0
    %2418 = vadd.xlane.f32.xlu0 %v2417
    %v2419 = vpop.xlane.xlu0 %2418
    %v2420 = vsel %vm2410, %v2403, 0.0
    %2421 = vadd.xlane.f32.xlu0 %v2420
    %v2422 = vpop.xlane.xlu0 %2421
    %v2423 = vsel %vm2410, %v2404, 0.0
    %2424 = vadd.xlane.f32.xlu0 %v2423
    %v2425 = vpop.xlane.xlu0 %2424
    %v2426 = vsel %vm2410, %v2405, 0.0
    %2427 = vadd.xlane.f32.xlu0 %v2426
    %v2428 = vpop.xlane.xlu0 %2427
    %v2429 = vsel %vm2410, %v2406, 0.0
    %2430 = vadd.xlane.f32.xlu0 %v2429
    %v2431 = vpop.xlane.xlu0 %2430
    %v2432 = vsel %vm2410, %v2407, 0.0
    %2433 = vadd.xlane.f32.xlu0 %v2432
    %v2434 = vpop.xlane.xlu0 %2433
    %v2435 = vrcp.pop 25.0
    %v2436 = vmul.f32 %v2413, %v2435
    %v2437 = vmul.f32 %v2416, %v2435
    %v2438 = vmul.f32 %v2419, %v2435
    %v2439 = vmul.f32 %v2422, %v2435
    %v2440 = vmul.f32 %v2425, %v2435
    %v2441 = vmul.f32 %v2428, %v2435
    %v2442 = vmul.f32 %v2431, %v2435
    %v2443 = vmul.f32 %v2434, %v2435
    %v2444 = vsub.f32 %v2400, %v2436
    %v2445 = vsub.f32 %v2401, %v2437
    %v2446 = vsub.f32 %v2402, %v2438
    %v2447 = vsub.f32 %v2403, %v2439
    %v2448 = vsub.f32 %v2404, %v2440
    %v2449 = vsub.f32 %v2405, %v2441
    %v2450 = vsub.f32 %v2406, %v2442
    %v2451 = vsub.f32 %v2407, %v2443
    %v2452 = vmul.f32 %v2444, %v2444
    %v2453 = vmul.f32 %v2445, %v2445
    %v2454 = vmul.f32 %v2446, %v2446
    %v2455 = vmul.f32 %v2447, %v2447
    %v2456 = vmul.f32 %v2448, %v2448
    %v2457 = vmul.f32 %v2449, %v2449
    %v2458 = vmul.f32 %v2450, %v2450
    %v2459 = vmul.f32 %v2451, %v2451
    %v2460 = vsel %vm2410, %v2452, 0.0
    %2461 = vadd.xlane.f32.xlu0 %v2460
    %v2462 = vpop.xlane.xlu0 %2461
    %v2463 = vsel %vm2410, %v2453, 0.0
    %2464 = vadd.xlane.f32.xlu0 %v2463
    %v2465 = vpop.xlane.xlu0 %2464
    %v2466 = vsel %vm2410, %v2454, 0.0
    %2467 = vadd.xlane.f32.xlu0 %v2466
    %v2468 = vpop.xlane.xlu0 %2467
    %v2469 = vsel %vm2410, %v2455, 0.0
    %2470 = vadd.xlane.f32.xlu0 %v2469
    %v2471 = vpop.xlane.xlu0 %2470
    %v2472 = vsel %vm2410, %v2456, 0.0
    %2473 = vadd.xlane.f32.xlu0 %v2472
    %v2474 = vpop.xlane.xlu0 %2473
    %v2475 = vsel %vm2410, %v2457, 0.0
    %2476 = vadd.xlane.f32.xlu0 %v2475
    %v2477 = vpop.xlane.xlu0 %2476
    %v2478 = vsel %vm2410, %v2458, 0.0
    %2479 = vadd.xlane.f32.xlu0 %v2478
    %v2480 = vpop.xlane.xlu0 %2479
    %v2481 = vsel %vm2410, %v2459, 0.0
    %2482 = vadd.xlane.f32.xlu0 %v2481
    %v2483 = vpop.xlane.xlu0 %2482
    %v2484 = vmul.f32 %v2462, %v2435
    %v2485 = vmul.f32 %v2465, %v2435
    %v2486 = vmul.f32 %v2468, %v2435
    %v2487 = vmul.f32 %v2471, %v2435
    %v2488 = vmul.f32 %v2474, %v2435
    %v2489 = vmul.f32 %v2477, %v2435
    %v2490 = vmul.f32 %v2480, %v2435
    %v2491 = vmul.f32 %v2483, %v2435
    %v2492 = vadd.f32 %v2484, 1e-05
    %v2493 = vadd.f32 %v2485, 1e-05
    %v2494 = vadd.f32 %v2486, 1e-05
    %v2495 = vadd.f32 %v2487, 1e-05
    %v2496 = vadd.f32 %v2488, 1e-05
    %v2497 = vadd.f32 %v2489, 1e-05
    %v2498 = vadd.f32 %v2490, 1e-05
    %v2499 = vadd.f32 %v2491, 1e-05
    %v2500 = vrsqrt.pop %v2492
    %v2501 = vrsqrt.pop %v2493
    %v2502 = vrsqrt.pop %v2494
    %v2503 = vrsqrt.pop %v2495
    %v2504 = vrsqrt.pop %v2496
    %v2505 = vrsqrt.pop %v2497
    %v2506 = vrsqrt.pop %v2498
    %v2507 = vrsqrt.pop %v2499
    %v2508 = vmul.f32 %v2444, %v2500
    %v2509 = vmul.f32 %v2445, %v2501
    %v2510 = vmul.f32 %v2446, %v2502
    %v2511 = vmul.f32 %v2447, %v2503
    %v2512 = vmul.f32 %v2448, %v2504
    %v2513 = vmul.f32 %v2449, %v2505
    %v2514 = vmul.f32 %v2450, %v2506
    %v2515 = vmul.f32 %v2451, %v2507
    %v2516 = vlaneseq
    %v2517 = vshrl.u32 %v2516, 7
    %v2518 = vsub.s32 0, %v2517
    %v2519 = vrot.slane %v2408, %v2518
    %v2520 = vmul.f32 %v2508, %v2519
    %v2521 = vmul.f32 %v2509, %v2519
    %v2522 = vmul.f32 %v2510, %v2519
    %v2523 = vmul.f32 %v2511, %v2519
    %v2524 = vmul.f32 %v2512, %v2519
    %v2525 = vmul.f32 %v2513, %v2519
    %v2526 = vmul.f32 %v2514, %v2519
    %v2527 = vmul.f32 %v2515, %v2519
    %v2528 = vlaneseq
    %v2529 = vshrl.u32 %v2528, 7
    %v2530 = vsub.s32 0, %v2529
    %v2531 = vrot.slane %v2409, %v2530
    %v2532 = vadd.f32 %v2520, %v2531
    %v2533 = vadd.f32 %v2521, %v2531
    %v2534 = vadd.f32 %v2522, %v2531
    %v2535 = vadd.f32 %v2523, %v2531
    %v2536 = vadd.f32 %v2524, %v2531
    %v2537 = vadd.f32 %v2525, %v2531
    %v2538 = vadd.f32 %v2526, %v2531
    %v2539 = vadd.f32 %v2527, %v2531
    %v2540 = vmul.f32 %v2532, 0.5
    %v2541 = vmul.f32 %v2533, 0.5
    %v2542 = vmul.f32 %v2534, 0.5
    %v2543 = vmul.f32 %v2535, 0.5
    %v2544 = vmul.f32 %v2536, 0.5
    %v2545 = vmul.f32 %v2537, 0.5
    %v2546 = vmul.f32 %v2538, 0.5
    %v2547 = vmul.f32 %v2539, 0.5
    %v2548 = vrcp.pop 1.4142135
    %v2549 = vmul.f32 %v2532, %v2548
    %v2550 = vmul.f32 %v2533, %v2548
    %v2551 = vmul.f32 %v2534, %v2548
    %v2552 = vmul.f32 %v2535, %v2548
    %v2553 = vmul.f32 %v2536, %v2548
    %v2554 = vmul.f32 %v2537, %v2548
    %v2555 = vmul.f32 %v2538, %v2548
    %v2556 = vmul.f32 %v2539, %v2548
    %v2557 = verf.f32.pop %v2549
    %v2558 = verf.f32.pop %v2550
    %v2559 = verf.f32.pop %v2551
    %v2560 = verf.f32.pop %v2552
    %v2561 = verf.f32.pop %v2553
    %v2562 = verf.f32.pop %v2554
    %v2563 = verf.f32.pop %v2555
    %v2564 = verf.f32.pop %v2556
    %v2565 = vadd.f32 %v2557, 1.0
    %v2566 = vadd.f32 %v2558, 1.0
    %v2567 = vadd.f32 %v2559, 1.0
    %v2568 = vadd.f32 %v2560, 1.0
    %v2569 = vadd.f32 %v2561, 1.0
    %v2570 = vadd.f32 %v2562, 1.0
    %v2571 = vadd.f32 %v2563, 1.0
    %v2572 = vadd.f32 %v2564, 1.0
    %v2573 = vmul.f32 %v2540, %v2565
    %v2574 = vmul.f32 %v2541, %v2566
    %v2575 = vmul.f32 %v2542, %v2567
    %v2576 = vmul.f32 %v2543, %v2568
    %v2577 = vmul.f32 %v2544, %v2569
    %v2578 = vmul.f32 %v2545, %v2570
    %v2579 = vmul.f32 %v2546, %v2571
    %v2580 = vmul.f32 %v2547, %v2572
    %v2581 = vld [vmem:[%s9] sm:$0xff]
    %v2582 = vld [vmem:[%s9 + $0x8] sm:$0xff]
    %v2583 = vld [vmem:[%s9 + $0x10] sm:$0xff]
    %v2584 = vld [vmem:[%s9 + $0x18] sm:$0x1]
    %v2585 = vld [vmem:[#allocation14] sm:$0x1]
    %v2586 = vlaneseq
    %v2587 = vshrl.u32 %v2586, 7
    %v2588 = vsub.s32 0, %v2587
    %v2589 = vrot.slane %v2585, %v2588
    %v2591 = vsel %vm2410, %v2573, 0
    %v2594 = vsel %vm2410, %v2574, 0
    %v2597 = vsel %vm2410, %v2575, 0
    %v2600 = vsel %vm2410, %v2576, 0
    %v2603 = vsel %vm2410, %v2577, 0
    %v2606 = vsel %vm2410, %v2578, 0
    %v2609 = vsel %vm2410, %v2579, 0
    %v2612 = vsel %vm2410, %v2580, 0
    %vm2614 = vcmask 1040384
    %v2616 = vsel %vm2614, %v2584, 0
    %2618 = vmatprep.subr.mxu0 0.0
    %2619 = vmatpush1.msra.mxu0 0.0
    %2620 = vmatprep.subr.mxu0 0.0
    %2621 = vmatpush1.msra.mxu0 0.0
    %2622 = vmatprep.subr.mxu0 0.0
    %2623 = vmatpush1.msra.mxu0 0.0
    %2624 = vmatprep.subr.mxu0 0.0
    %2625 = vmatpush1.msra.mxu0 0.0
    %2626 = vmatprep.subr.mxu0 0.0
    %2627 = vmatpush1.msra.mxu0 0.0
    %2628 = vmatprep.subr.mxu0 0.0
    %2629 = vmatpush1.msra.mxu0 0.0
    %2630 = vmatprep.subr.mxu0 0.0
    %2631 = vmatpush1.msra.mxu0 0.0
    %2632 = vmatprep.subr.mxu0 0.0
    %2633 = vmatpush1.msra.mxu0 0.0
    %2634 = vmatprep.subr.mxu0 0.0
    %2635 = vmatpush1.msra.mxu0 0.0
    %2636 = vmatprep.subr.mxu0 0.0
    %2637 = vmatpush1.msra.mxu0 0.0
    %2638 = vmatprep.subr.mxu0 0.0
    %2639 = vmatpush1.msra.mxu0 0.0
    %2640 = vmatprep.subr.mxu0 0.0
    %2641 = vmatpush1.msra.mxu0 0.0
    %2642 = vmatprep.subr.mxu0 0.0
    %2643 = vmatpush1.msra.mxu0 %v2616
    %2644 = vmatprep.subr.mxu0 0.0
    %2645 = vmatpush1.msra.mxu0 %v2583
    %2646 = vmatprep.subr.mxu0 0.0
    %2647 = vmatpush1.msra.mxu0 %v2582
    %2648 = vmatprep.subr.mxu0 0.0
    %2649 = vmatpush1.msra.mxu0 %v2581
    %2650 = vmatprep.subr.mxu0 0.0
    %2651 = vmatpush2.msra.mxu0 0.0
    %2652 = vmatprep.subr.mxu0 0.0
    %2653 = vmatpush2.msra.mxu0 0.0
    %2654 = vmatprep.subr.mxu0 0.0
    %2655 = vmatpush2.msra.mxu0 0.0
    %2656 = vmatprep.subr.mxu0 0.0
    %2657 = vmatpush2.msra.mxu0 0.0
    %2658 = vmatprep.subr.mxu0 0.0
    %2659 = vmatpush2.msra.mxu0 0.0
    %2660 = vmatprep.subr.mxu0 0.0
    %2661 = vmatpush2.msra.mxu0 0.0
    %2662 = vmatprep.subr.mxu0 0.0
    %2663 = vmatpush2.msra.mxu0 0.0
    %2664 = vmatprep.subr.mxu0 0.0
    %2665 = vmatpush2.msra.mxu0 0.0
    %2666 = vmatprep.subr.mxu0 0.0
    %2667 = vmatpush2.msra.mxu0 0.0
    %2668 = vmatprep.subr.mxu0 0.0
    %2669 = vmatpush2.msra.mxu0 0.0
    %2670 = vmatprep.subr.mxu0 0.0
    %2671 = vmatpush2.msra.mxu0 0.0
    %2672 = vmatprep.subr.mxu0 0.0
    %2673 = vmatpush2.msra.mxu0 0.0
    %2674 = vmatprep.subr.mxu0 0.0
    %2675 = vmatpush2.msra.mxu0 0.0
    %2676 = vmatprep.subr.mxu0 0.0
    %2677 = vmatpush2.msra.mxu0 0.0
    %2678 = vmatprep.subr.mxu0 0.0
    %2679 = vmatpush2.msra.mxu0 0.0
    %2680 = vmatprep.subr.mxu0 0.0
    %2681 = vmatpush2.msra.mxu0 0.0
    %2682 = vmatprep.mubr.f32.mxu0 0.0
    %2683 = vmatmul.mubr.f32.gmra.mxu0 %v2591
    %v2684 = vpop.f32.mrf.mxu0
    %v2685 = vadd.f32 %v2589, %v2684
    %v2686 = vpop.f32.mrf.mxu0
    %2687 = vmatprep.mubr.f32.mxu0 0.0
    %2688 = vmatmul.mubr.f32.gmra.mxu0 %v2594
    %v2689 = vpop.f32.mrf.mxu0
    %v2690 = vadd.f32 %v2589, %v2689
    %v2691 = vpop.f32.mrf.mxu0
    %2692 = vmatprep.mubr.f32.mxu0 0.0
    %2693 = vmatmul.mubr.f32.gmra.mxu0 %v2597
    %v2694 = vpop.f32.mrf.mxu0
    %v2695 = vadd.f32 %v2589, %v2694
    %v2696 = vpop.f32.mrf.mxu0
    %2697 = vmatprep.mubr.f32.mxu0 0.0
    %2698 = vmatmul.mubr.f32.gmra.mxu0 %v2600
    %v2699 = vpop.f32.mrf.mxu0
    %v2700 = vadd.f32 %v2589, %v2699
    %v2701 = vpop.f32.mrf.mxu0
    %2702 = vmatprep.mubr.f32.mxu0 0.0
    %2703 = vmatmul.mubr.f32.gmra.mxu0 %v2603
    %v2704 = vpop.f32.mrf.mxu0
    %v2705 = vadd.f32 %v2589, %v2704
    %v2706 = vpop.f32.mrf.mxu0
    %2707 = vmatprep.mubr.f32.mxu0 0.0
    %2708 = vmatmul.mubr.f32.gmra.mxu0 %v2606
    %v2709 = vpop.f32.mrf.mxu0
    %v2710 = vadd.f32 %v2589, %v2709
    %v2711 = vpop.f32.mrf.mxu0
    %2712 = vmatprep.mubr.f32.mxu0 0.0
    %2713 = vmatmul.mubr.f32.gmra.mxu0 %v2609
    %v2714 = vpop.f32.mrf.mxu0
    %v2715 = vadd.f32 %v2589, %v2714
    %v2716 = vpop.f32.mrf.mxu0
    %2717 = vmatprep.mubr.f32.mxu0 0.0
    %2718 = vmatmul.mubr.f32.gmra.mxu0 %v2612
    %v2719 = vpop.f32.mrf.mxu0
    %v2720 = vadd.f32 %v2589, %v2719
    %v2721 = vpop.f32.mrf.mxu0
    %2722 = vdwg.mxu0
    %v2723 = vld [vmem:[#allocation14 + $0x1] sm:$0x1]
    %v2724 = vld [vmem:[#allocation14 + $0x2] sm:$0x1]
    %vm2725 = vcmask 56320
    %v2726 = vsel %vm2725, %v2685, 0.0
    %2727 = vadd.xlane.f32.xlu0 %v2726
    %v2728 = vpop.xlane.xlu0 %2727
    %v2729 = vsel %vm2725, %v2690, 0.0
    %2730 = vadd.xlane.f32.xlu0 %v2729
    %v2731 = vpop.xlane.xlu0 %2730
    %v2732 = vsel %vm2725, %v2695, 0.0
    %2733 = vadd.xlane.f32.xlu0 %v2732
    %v2734 = vpop.xlane.xlu0 %2733
    %v2735 = vsel %vm2725, %v2700, 0.0
    %2736 = vadd.xlane.f32.xlu0 %v2735
    %v2737 = vpop.xlane.xlu0 %2736
    %v2738 = vsel %vm2725, %v2705, 0.0
    %2739 = vadd.xlane.f32.xlu0 %v2738
    %v2740 = vpop.xlane.xlu0 %2739
    %v2741 = vsel %vm2725, %v2710, 0.0
    %2742 = vadd.xlane.f32.xlu0 %v2741
    %v2743 = vpop.xlane.xlu0 %2742
    %v2744 = vsel %vm2725, %v2715, 0.0
    %2745 = vadd.xlane.f32.xlu0 %v2744
    %v2746 = vpop.xlane.xlu0 %2745
    %v2747 = vsel %vm2725, %v2720, 0.0
    %2748 = vadd.xlane.f32.xlu0 %v2747
    %v2749 = vpop.xlane.xlu0 %2748
    %v2750 = vrcp.pop 7.0
    %v2751 = vmul.f32 %v2728, %v2750
    %v2752 = vmul.f32 %v2731, %v2750
    %v2753 = vmul.f32 %v2734, %v2750
    %v2754 = vmul.f32 %v2737, %v2750
    %v2755 = vmul.f32 %v2740, %v2750
    %v2756 = vmul.f32 %v2743, %v2750
    %v2757 = vmul.f32 %v2746, %v2750
    %v2758 = vmul.f32 %v2749, %v2750
    %v2759 = vsub.f32 %v2685, %v2751
    %v2760 = vsub.f32 %v2690, %v2752
    %v2761 = vsub.f32 %v2695, %v2753
    %v2762 = vsub.f32 %v2700, %v2754
    %v2763 = vsub.f32 %v2705, %v2755
    %v2764 = vsub.f32 %v2710, %v2756
    %v2765 = vsub.f32 %v2715, %v2757
    %v2766 = vsub.f32 %v2720, %v2758
    %v2767 = vmul.f32 %v2759, %v2759
    %v2768 = vmul.f32 %v2760, %v2760
    %v2769 = vmul.f32 %v2761, %v2761
    %v2770 = vmul.f32 %v2762, %v2762
    %v2771 = vmul.f32 %v2763, %v2763
    %v2772 = vmul.f32 %v2764, %v2764
    %v2773 = vmul.f32 %v2765, %v2765
    %v2774 = vmul.f32 %v2766, %v2766
    %v2775 = vsel %vm2725, %v2767, 0.0
    %2776 = vadd.xlane.f32.xlu0 %v2775
    %v2777 = vpop.xlane.xlu0 %2776
    %v2778 = vsel %vm2725, %v2768, 0.0
    %2779 = vadd.xlane.f32.xlu0 %v2778
    %v2780 = vpop.xlane.xlu0 %2779
    %v2781 = vsel %vm2725, %v2769, 0.0
    %2782 = vadd.xlane.f32.xlu0 %v2781
    %v2783 = vpop.xlane.xlu0 %2782
    %v2784 = vsel %vm2725, %v2770, 0.0
    %2785 = vadd.xlane.f32.xlu0 %v2784
    %v2786 = vpop.xlane.xlu0 %2785
    %v2787 = vsel %vm2725, %v2771, 0.0
    %2788 = vadd.xlane.f32.xlu0 %v2787
    %v2789 = vpop.xlane.xlu0 %2788
    %v2790 = vsel %vm2725, %v2772, 0.0
    %2791 = vadd.xlane.f32.xlu0 %v2790
    %v2792 = vpop.xlane.xlu0 %2791
    %v2793 = vsel %vm2725, %v2773, 0.0
    %2794 = vadd.xlane.f32.xlu0 %v2793
    %v2795 = vpop.xlane.xlu0 %2794
    %v2796 = vsel %vm2725, %v2774, 0.0
    %2797 = vadd.xlane.f32.xlu0 %v2796
    %v2798 = vpop.xlane.xlu0 %2797
    %v2799 = vmul.f32 %v2777, %v2750
    %v2800 = vmul.f32 %v2780, %v2750
    %v2801 = vmul.f32 %v2783, %v2750
    %v2802 = vmul.f32 %v2786, %v2750
    %v2803 = vmul.f32 %v2789, %v2750
    %v2804 = vmul.f32 %v2792, %v2750
    %v2805 = vmul.f32 %v2795, %v2750
    %v2806 = vmul.f32 %v2798, %v2750
    %v2807 = vadd.f32 %v2799, 1e-05
    %v2808 = vadd.f32 %v2800, 1e-05
    %v2809 = vadd.f32 %v2801, 1e-05
    %v2810 = vadd.f32 %v2802, 1e-05
    %v2811 = vadd.f32 %v2803, 1e-05
    %v2812 = vadd.f32 %v2804, 1e-05
    %v2813 = vadd.f32 %v2805, 1e-05
    %v2814 = vadd.f32 %v2806, 1e-05
    %v2815 = vrsqrt.pop %v2807
    %v2816 = vrsqrt.pop %v2808
    %v2817 = vrsqrt.pop %v2809
    %v2818 = vrsqrt.pop %v2810
    %v2819 = vrsqrt.pop %v2811
    %v2820 = vrsqrt.pop %v2812
    %v2821 = vrsqrt.pop %v2813
    %v2822 = vrsqrt.pop %v2814
    %v2823 = vmul.f32 %v2759, %v2815
    %v2824 = vmul.f32 %v2760, %v2816
    %v2825 = vmul.f32 %v2761, %v2817
    %v2826 = vmul.f32 %v2762, %v2818
    %v2827 = vmul.f32 %v2763, %v2819
    %v2828 = vmul.f32 %v2764, %v2820
    %v2829 = vmul.f32 %v2765, %v2821
    %v2830 = vmul.f32 %v2766, %v2822
    %v2831 = vlaneseq
    %v2832 = vshrl.u32 %v2831, 7
    %v2833 = vsub.s32 0, %v2832
    %v2834 = vrot.slane %v2723, %v2833
    %v2835 = vmul.f32 %v2823, %v2834
    %v2836 = vmul.f32 %v2824, %v2834
    %v2837 = vmul.f32 %v2825, %v2834
    %v2838 = vmul.f32 %v2826, %v2834
    %v2839 = vmul.f32 %v2827, %v2834
    %v2840 = vmul.f32 %v2828, %v2834
    %v2841 = vmul.f32 %v2829, %v2834
    %v2842 = vmul.f32 %v2830, %v2834
    %v2843 = vlaneseq
    %v2844 = vshrl.u32 %v2843, 7
    %v2845 = vsub.s32 0, %v2844
    %v2846 = vrot.slane %v2724, %v2845
    %v2847 = vadd.f32 %v2835, %v2846
    %v2848 = vadd.f32 %v2836, %v2846
    %v2849 = vadd.f32 %v2837, %v2846
    %v2850 = vadd.f32 %v2838, %v2846
    %v2851 = vadd.f32 %v2839, %v2846
    %v2852 = vadd.f32 %v2840, %v2846
    %v2853 = vadd.f32 %v2841, %v2846
    %v2854 = vadd.f32 %v2842, %v2846
    %v2855 = vsel %vm2725, %v2847, -inf
    %2856 = vmax.xlane.f32.xlu0 %v2855
    %v2857 = vpop.xlane.xlu0 %2856
    %v2858 = vsel %vm2725, %v2848, -inf
    %2859 = vmax.xlane.f32.xlu0 %v2858
    %v2860 = vpop.xlane.xlu0 %2859
    %v2861 = vsel %vm2725, %v2849, -inf
    %2862 = vmax.xlane.f32.xlu0 %v2861
    %v2863 = vpop.xlane.xlu0 %2862
    %v2864 = vsel %vm2725, %v2850, -inf
    %2865 = vmax.xlane.f32.xlu0 %v2864
    %v2866 = vpop.xlane.xlu0 %2865
    %v2867 = vsel %vm2725, %v2851, -inf
    %2868 = vmax.xlane.f32.xlu0 %v2867
    %v2869 = vpop.xlane.xlu0 %2868
    %v2870 = vsel %vm2725, %v2852, -inf
    %2871 = vmax.xlane.f32.xlu0 %v2870
    %v2872 = vpop.xlane.xlu0 %2871
    %v2873 = vsel %vm2725, %v2853, -inf
    %2874 = vmax.xlane.f32.xlu0 %v2873
    %v2875 = vpop.xlane.xlu0 %2874
    %v2876 = vsel %vm2725, %v2854, -inf
    %2877 = vmax.xlane.f32.xlu0 %v2876
    %v2878 = vpop.xlane.xlu0 %2877
    %v2879 = vsub.f32 %v2847, %v2857
    %v2880 = vsub.f32 %v2848, %v2860
    %v2881 = vsub.f32 %v2849, %v2863
    %v2882 = vsub.f32 %v2850, %v2866
    %v2883 = vsub.f32 %v2851, %v2869
    %v2884 = vsub.f32 %v2852, %v2872
    %v2885 = vsub.f32 %v2853, %v2875
    %v2886 = vsub.f32 %v2854, %v2878
    %v2887 = vmul.f32 %v2879, 1.442695
    %v2888 = vpow.pop %v2887
    %v2889 = vmul.f32 %v2880, 1.442695
    %v2890 = vpow.pop %v2889
    %v2891 = vmul.f32 %v2881, 1.442695
    %v2892 = vpow.pop %v2891
    %v2893 = vmul.f32 %v2882, 1.442695
    %v2894 = vpow.pop %v2893
    %v2895 = vmul.f32 %v2883, 1.442695
    %v2896 = vpow.pop %v2895
    %v2897 = vmul.f32 %v2884, 1.442695
    %v2898 = vpow.pop %v2897
    %v2899 = vmul.f32 %v2885, 1.442695
    %v2900 = vpow.pop %v2899
    %v2901 = vmul.f32 %v2886, 1.442695
    %v2902 = vpow.pop %v2901
    %v2903 = vsel %vm2725, %v2888, 0.0
    %2904 = vadd.xlane.f32.xlu0 %v2903
    %v2905 = vpop.xlane.xlu0 %2904
    %v2906 = vsel %vm2725, %v2890, 0.0
    %2907 = vadd.xlane.f32.xlu0 %v2906
    %v2908 = vpop.xlane.xlu0 %2907
    %v2909 = vsel %vm2725, %v2892, 0.0
    %2910 = vadd.xlane.f32.xlu0 %v2909
    %v2911 = vpop.xlane.xlu0 %2910
    %v2912 = vsel %vm2725, %v2894, 0.0
    %2913 = vadd.xlane.f32.xlu0 %v2912
    %v2914 = vpop.xlane.xlu0 %2913
    %v2915 = vsel %vm2725, %v2896, 0.0
    %2916 = vadd.xlane.f32.xlu0 %v2915
    %v2917 = vpop.xlane.xlu0 %2916
    %v2918 = vsel %vm2725, %v2898, 0.0
    %2919 = vadd.xlane.f32.xlu0 %v2918
    %v2920 = vpop.xlane.xlu0 %2919
    %v2921 = vsel %vm2725, %v2900, 0.0
    %2922 = vadd.xlane.f32.xlu0 %v2921
    %v2923 = vpop.xlane.xlu0 %2922
    %v2924 = vsel %vm2725, %v2902, 0.0
    %2925 = vadd.xlane.f32.xlu0 %v2924
    %v2926 = vpop.xlane.xlu0 %2925
    %v2927 = vrcp.pop %v2905
    %v2928 = vmul.f32 %v2888, %v2927
    %v2929 = vrcp.pop %v2908
    %v2930 = vmul.f32 %v2890, %v2929
    %v2931 = vrcp.pop %v2911
    %v2932 = vmul.f32 %v2892, %v2931
    %v2933 = vrcp.pop %v2914
    %v2934 = vmul.f32 %v2894, %v2933
    %v2935 = vrcp.pop %v2917
    %v2936 = vmul.f32 %v2896, %v2935
    %v2937 = vrcp.pop %v2920
    %v2938 = vmul.f32 %v2898, %v2937
    %v2939 = vrcp.pop %v2923
    %v2940 = vmul.f32 %v2900, %v2939
    %v2941 = vrcp.pop %v2926
    %v2942 = vmul.f32 %v2902, %v2941
    %2943 = vst.msk [vmem:[%s18] sm:$0xff] %vm2725, %v2928
    %2944 = vst.msk [vmem:[%s18 + $0x8] sm:$0xff] %vm2725, %v2930
    %2945 = vst.msk [vmem:[%s18 + $0x10] sm:$0xff] %vm2725, %v2932
    %2946 = vst.msk [vmem:[%s18 + $0x18] sm:$0xff] %vm2725, %v2934
    %2947 = vst.msk [vmem:[%s18 + $0x20] sm:$0xff] %vm2725, %v2936
    %2948 = vst.msk [vmem:[%s18 + $0x28] sm:$0xff] %vm2725, %v2938
    %2949 = vst.msk [vmem:[%s18 + $0x30] sm:$0xff] %vm2725, %v2940
    %2950 = vst.msk [vmem:[%s18 + $0x38] sm:$0xff] %vm2725, %v2942
    %v2951 = vld [vmem:[%s3] sm:$0xff]
    %v2952 = vld [vmem:[%s3 + $0x8] sm:$0xff]
    %v2953 = vld [vmem:[%s3 + $0x10] sm:$0xff]
    %v2954 = vld [vmem:[%s3 + $0x18] sm:$0xff]
    %v2955 = vld [vmem:[%s3 + $0x20] sm:$0xff]
    %v2956 = vld [vmem:[%s3 + $0x28] sm:$0xff]
    %v2957 = vld [vmem:[%s3 + $0x30] sm:$0xff]
    %v2958 = vld [vmem:[%s3 + $0x38] sm:$0xff]
    %2960 = vset.pattern.permute.xlu0 0
    %2961 = vperm.xlu0 %2960, %v2928
    %v2962 = vpop.permute.xlu0 %2961
    %2965 = vset.pattern.permute.xlu0 0
    %2966 = vperm.xlu0 %2965, %v2930
    %v2967 = vpop.permute.xlu0 %2966
    %2970 = vset.pattern.permute.xlu0 0
    %2971 = vperm.xlu0 %2970, %v2932
    %v2972 = vpop.permute.xlu0 %2971
    %2975 = vset.pattern.permute.xlu0 0
    %2976 = vperm.xlu0 %2975, %v2934
    %v2977 = vpop.permute.xlu0 %2976
    %2980 = vset.pattern.permute.xlu0 0
    %2981 = vperm.xlu0 %2980, %v2936
    %v2982 = vpop.permute.xlu0 %2981
    %2985 = vset.pattern.permute.xlu0 0
    %2986 = vperm.xlu0 %2985, %v2938
    %v2987 = vpop.permute.xlu0 %2986
    %2990 = vset.pattern.permute.xlu0 0
    %2991 = vperm.xlu0 %2990, %v2940
    %v2992 = vpop.permute.xlu0 %2991
    %2995 = vset.pattern.permute.xlu0 0
    %2996 = vperm.xlu0 %2995, %v2942
    %v2997 = vpop.permute.xlu0 %2996
    %v2999 = vmul.f32 %v2962, %v2951
    %v3000 = vmul.f32 %v2967, %v2952
    %v3001 = vmul.f32 %v2972, %v2953
    %v3002 = vmul.f32 %v2977, %v2954
    %v3003 = vmul.f32 %v2982, %v2955
    %v3004 = vmul.f32 %v2987, %v2956
    %v3005 = vmul.f32 %v2992, %v2957
    %v3006 = vmul.f32 %v2997, %v2958
    %s3007 = scalar_lea.vmem %s3, 64
    %v3008 = vld [vmem:[%s3007] sm:$0xff]
    %v3009 = vld [vmem:[%s3007 + $0x8] sm:$0xff]
    %v3010 = vld [vmem:[%s3007 + $0x10] sm:$0xff]
    %v3011 = vld [vmem:[%s3007 + $0x18] sm:$0xff]
    %v3012 = vld [vmem:[%s3007 + $0x20] sm:$0xff]
    %v3013 = vld [vmem:[%s3007 + $0x28] sm:$0xff]
    %v3014 = vld [vmem:[%s3007 + $0x30] sm:$0xff]
    %v3015 = vld [vmem:[%s3007 + $0x38] sm:$0xff]
    %3016 = vset.pattern.permute.xlu0 1
    %3017 = vperm.xlu0 %3016, %v2928
    %v3018 = vpop.permute.xlu0 %3017
    %3020 = vset.pattern.permute.xlu0 1
    %3021 = vperm.xlu0 %3020, %v2930
    %v3022 = vpop.permute.xlu0 %3021
    %3024 = vset.pattern.permute.xlu0 1
    %3025 = vperm.xlu0 %3024, %v2932
    %v3026 = vpop.permute.xlu0 %3025
    %3028 = vset.pattern.permute.xlu0 1
    %3029 = vperm.xlu0 %3028, %v2934
    %v3030 = vpop.permute.xlu0 %3029
    %3032 = vset.pattern.permute.xlu0 1
    %3033 = vperm.xlu0 %3032, %v2936
    %v3034 = vpop.permute.xlu0 %3033
    %3036 = vset.pattern.permute.xlu0 1
    %3037 = vperm.xlu0 %3036, %v2938
    %v3038 = vpop.permute.xlu0 %3037
    %3040 = vset.pattern.permute.xlu0 1
    %3041 = vperm.xlu0 %3040, %v2940
    %v3042 = vpop.permute.xlu0 %3041
    %3044 = vset.pattern.permute.xlu0 1
    %3045 = vperm.xlu0 %3044, %v2942
    %v3046 = vpop.permute.xlu0 %3045
    %v3048 = vmul.f32 %v3018, %v3008
    %v3049 = vmul.f32 %v3022, %v3009
    %v3050 = vmul.f32 %v3026, %v3010
    %v3051 = vmul.f32 %v3030, %v3011
    %v3052 = vmul.f32 %v3034, %v3012
    %v3053 = vmul.f32 %v3038, %v3013
    %v3054 = vmul.f32 %v3042, %v3014
    %v3055 = vmul.f32 %v3046, %v3015
    %v3056 = vadd.f32 %v2999, %v3048
    %v3057 = vadd.f32 %v3000, %v3049
    %v3058 = vadd.f32 %v3001, %v3050
    %v3059 = vadd.f32 %v3002, %v3051
    %v3060 = vadd.f32 %v3003, %v3052
    %v3061 = vadd.f32 %v3004, %v3053
    %v3062 = vadd.f32 %v3005, %v3054
    %v3063 = vadd.f32 %v3006, %v3055
    %s3064 = scalar_lea.vmem %s3, 128
    %v3065 = vld [vmem:[%s3064] sm:$0xff]
    %v3066 = vld [vmem:[%s3064 + $0x8] sm:$0xff]
    %v3067 = vld [vmem:[%s3064 + $0x10] sm:$0xff]
    %v3068 = vld [vmem:[%s3064 + $0x18] sm:$0xff]
    %v3069 = vld [vmem:[%s3064 + $0x20] sm:$0xff]
    %v3070 = vld [vmem:[%s3064 + $0x28] sm:$0xff]
    %v3071 = vld [vmem:[%s3064 + $0x30] sm:$0xff]
    %v3072 = vld [vmem:[%s3064 + $0x38] sm:$0xff]
    %3073 = vset.pattern.permute.xlu0 2
    %3074 = vperm.xlu0 %3073, %v2928
    %v3075 = vpop.permute.xlu0 %3074
    %3077 = vset.pattern.permute.xlu0 2
    %3078 = vperm.xlu0 %3077, %v2930
    %v3079 = vpop.permute.xlu0 %3078
    %3081 = vset.pattern.permute.xlu0 2
    %3082 = vperm.xlu0 %3081, %v2932
    %v3083 = vpop.permute.xlu0 %3082
    %3085 = vset.pattern.permute.xlu0 2
    %3086 = vperm.xlu0 %3085, %v2934
    %v3087 = vpop.permute.xlu0 %3086
    %3089 = vset.pattern.permute.xlu0 2
    %3090 = vperm.xlu0 %3089, %v2936
    %v3091 = vpop.permute.xlu0 %3090
    %3093 = vset.pattern.permute.xlu0 2
    %3094 = vperm.xlu0 %3093, %v2938
    %v3095 = vpop.permute.xlu0 %3094
    %3097 = vset.pattern.permute.xlu0 2
    %3098 = vperm.xlu0 %3097, %v2940
    %v3099 = vpop.permute.xlu0 %3098
    %3101 = vset.pattern.permute.xlu0 2
    %3102 = vperm.xlu0 %3101, %v2942
    %v3103 = vpop.permute.xlu0 %3102
    %v3105 = vmul.f32 %v3075, %v3065
    %v3106 = vmul.f32 %v3079, %v3066
    %v3107 = vmul.f32 %v3083, %v3067
    %v3108 = vmul.f32 %v3087, %v3068
    %v3109 = vmul.f32 %v3091, %v3069
    %v3110 = vmul.f32 %v3095, %v3070
    %v3111 = vmul.f32 %v3099, %v3071
    %v3112 = vmul.f32 %v3103, %v3072
    %v3113 = vadd.f32 %v3056, %v3105
    %v3114 = vadd.f32 %v3057, %v3106
    %v3115 = vadd.f32 %v3058, %v3107
    %v3116 = vadd.f32 %v3059, %v3108
    %v3117 = vadd.f32 %v3060, %v3109
    %v3118 = vadd.f32 %v3061, %v3110
    %v3119 = vadd.f32 %v3062, %v3111
    %v3120 = vadd.f32 %v3063, %v3112
    %s3121 = scalar_lea.vmem %s3, 192
    %v3122 = vld [vmem:[%s3121] sm:$0xff]
    %v3123 = vld [vmem:[%s3121 + $0x8] sm:$0xff]
    %v3124 = vld [vmem:[%s3121 + $0x10] sm:$0xff]
    %v3125 = vld [vmem:[%s3121 + $0x18] sm:$0xff]
    %v3126 = vld [vmem:[%s3121 + $0x20] sm:$0xff]
    %v3127 = vld [vmem:[%s3121 + $0x28] sm:$0xff]
    %v3128 = vld [vmem:[%s3121 + $0x30] sm:$0xff]
    %v3129 = vld [vmem:[%s3121 + $0x38] sm:$0xff]
    %3130 = vset.pattern.permute.xlu0 3
    %3131 = vperm.xlu0 %3130, %v2928
    %v3132 = vpop.permute.xlu0 %3131
    %3134 = vset.pattern.permute.xlu0 3
    %3135 = vperm.xlu0 %3134, %v2930
    %v3136 = vpop.permute.xlu0 %3135
    %3138 = vset.pattern.permute.xlu0 3
    %3139 = vperm.xlu0 %3138, %v2932
    %v3140 = vpop.permute.xlu0 %3139
    %3142 = vset.pattern.permute.xlu0 3
    %3143 = vperm.xlu0 %3142, %v2934
    %v3144 = vpop.permute.xlu0 %3143
    %3146 = vset.pattern.permute.xlu0 3
    %3147 = vperm.xlu0 %3146, %v2936
    %v3148 = vpop.permute.xlu0 %3147
    %3150 = vset.pattern.permute.xlu0 3
    %3151 = vperm.xlu0 %3150, %v2938
    %v3152 = vpop.permute.xlu0 %3151
    %3154 = vset.pattern.permute.xlu0 3
    %3155 = vperm.xlu0 %3154, %v2940
    %v3156 = vpop.permute.xlu0 %3155
    %3158 = vset.pattern.permute.xlu0 3
    %3159 = vperm.xlu0 %3158, %v2942
    %v3160 = vpop.permute.xlu0 %3159
    %v3162 = vmul.f32 %v3132, %v3122
    %v3163 = vmul.f32 %v3136, %v3123
    %v3164 = vmul.f32 %v3140, %v3124
    %v3165 = vmul.f32 %v3144, %v3125
    %v3166 = vmul.f32 %v3148, %v3126
    %v3167 = vmul.f32 %v3152, %v3127
    %v3168 = vmul.f32 %v3156, %v3128
    %v3169 = vmul.f32 %v3160, %v3129
    %v3170 = vadd.f32 %v3113, %v3162
    %v3171 = vadd.f32 %v3114, %v3163
    %v3172 = vadd.f32 %v3115, %v3164
    %v3173 = vadd.f32 %v3116, %v3165
    %v3174 = vadd.f32 %v3117, %v3166
    %v3175 = vadd.f32 %v3118, %v3167
    %v3176 = vadd.f32 %v3119, %v3168
    %v3177 = vadd.f32 %v3120, %v3169
    %s3178 = scalar_lea.vmem %s3, 256
    %v3179 = vld [vmem:[%s3178] sm:$0xff]
    %v3180 = vld [vmem:[%s3178 + $0x8] sm:$0xff]
    %v3181 = vld [vmem:[%s3178 + $0x10] sm:$0xff]
    %v3182 = vld [vmem:[%s3178 + $0x18] sm:$0xff]
    %v3183 = vld [vmem:[%s3178 + $0x20] sm:$0xff]
    %v3184 = vld [vmem:[%s3178 + $0x28] sm:$0xff]
    %v3185 = vld [vmem:[%s3178 + $0x30] sm:$0xff]
    %v3186 = vld [vmem:[%s3178 + $0x38] sm:$0xff]
    %3187 = vset.pattern.permute.xlu0 4
    %3188 = vperm.xlu0 %3187, %v2928
    %v3189 = vpop.permute.xlu0 %3188
    %3191 = vset.pattern.permute.xlu0 4
    %3192 = vperm.xlu0 %3191, %v2930
    %v3193 = vpop.permute.xlu0 %3192
    %3195 = vset.pattern.permute.xlu0 4
    %3196 = vperm.xlu0 %3195, %v2932
    %v3197 = vpop.permute.xlu0 %3196
    %3199 = vset.pattern.permute.xlu0 4
    %3200 = vperm.xlu0 %3199, %v2934
    %v3201 = vpop.permute.xlu0 %3200
    %3203 = vset.pattern.permute.xlu0 4
    %3204 = vperm.xlu0 %3203, %v2936
    %v3205 = vpop.permute.xlu0 %3204
    %3207 = vset.pattern.permute.xlu0 4
    %3208 = vperm.xlu0 %3207, %v2938
    %v3209 = vpop.permute.xlu0 %3208
    %3211 = vset.pattern.permute.xlu0 4
    %3212 = vperm.xlu0 %3211, %v2940
    %v3213 = vpop.permute.xlu0 %3212
    %3215 = vset.pattern.permute.xlu0 4
    %3216 = vperm.xlu0 %3215, %v2942
    %v3217 = vpop.permute.xlu0 %3216
    %v3219 = vmul.f32 %v3189, %v3179
    %v3220 = vmul.f32 %v3193, %v3180
    %v3221 = vmul.f32 %v3197, %v3181
    %v3222 = vmul.f32 %v3201, %v3182
    %v3223 = vmul.f32 %v3205, %v3183
    %v3224 = vmul.f32 %v3209, %v3184
    %v3225 = vmul.f32 %v3213, %v3185
    %v3226 = vmul.f32 %v3217, %v3186
    %v3227 = vadd.f32 %v3170, %v3219
    %v3228 = vadd.f32 %v3171, %v3220
    %v3229 = vadd.f32 %v3172, %v3221
    %v3230 = vadd.f32 %v3173, %v3222
    %v3231 = vadd.f32 %v3174, %v3223
    %v3232 = vadd.f32 %v3175, %v3224
    %v3233 = vadd.f32 %v3176, %v3225
    %v3234 = vadd.f32 %v3177, %v3226
    %s3235 = scalar_lea.vmem %s3, 320
    %v3236 = vld [vmem:[%s3235] sm:$0xff]
    %v3237 = vld [vmem:[%s3235 + $0x8] sm:$0xff]
    %v3238 = vld [vmem:[%s3235 + $0x10] sm:$0xff]
    %v3239 = vld [vmem:[%s3235 + $0x18] sm:$0xff]
    %v3240 = vld [vmem:[%s3235 + $0x20] sm:$0xff]
    %v3241 = vld [vmem:[%s3235 + $0x28] sm:$0xff]
    %v3242 = vld [vmem:[%s3235 + $0x30] sm:$0xff]
    %v3243 = vld [vmem:[%s3235 + $0x38] sm:$0xff]
    %3244 = vset.pattern.permute.xlu0 5
    %3245 = vperm.xlu0 %3244, %v2928
    %v3246 = vpop.permute.xlu0 %3245
    %3248 = vset.pattern.permute.xlu0 5
    %3249 = vperm.xlu0 %3248, %v2930
    %v3250 = vpop.permute.xlu0 %3249
    %3252 = vset.pattern.permute.xlu0 5
    %3253 = vperm.xlu0 %3252, %v2932
    %v3254 = vpop.permute.xlu0 %3253
    %3256 = vset.pattern.permute.xlu0 5
    %3257 = vperm.xlu0 %3256, %v2934
    %v3258 = vpop.permute.xlu0 %3257
    %3260 = vset.pattern.permute.xlu0 5
    %3261 = vperm.xlu0 %3260, %v2936
    %v3262 = vpop.permute.xlu0 %3261
    %3264 = vset.pattern.permute.xlu0 5
    %3265 = vperm.xlu0 %3264, %v2938
    %v3266 = vpop.permute.xlu0 %3265
    %3268 = vset.pattern.permute.xlu0 5
    %3269 = vperm.xlu0 %3268, %v2940
    %v3270 = vpop.permute.xlu0 %3269
    %3272 = vset.pattern.permute.xlu0 5
    %3273 = vperm.xlu0 %3272, %v2942
    %v3274 = vpop.permute.xlu0 %3273
    %v3276 = vmul.f32 %v3246, %v3236
    %v3277 = vmul.f32 %v3250, %v3237
    %v3278 = vmul.f32 %v3254, %v3238
    %v3279 = vmul.f32 %v3258, %v3239
    %v3280 = vmul.f32 %v3262, %v3240
    %v3281 = vmul.f32 %v3266, %v3241
    %v3282 = vmul.f32 %v3270, %v3242
    %v3283 = vmul.f32 %v3274, %v3243
    %v3284 = vadd.f32 %v3227, %v3276
    %v3285 = vadd.f32 %v3228, %v3277
    %v3286 = vadd.f32 %v3229, %v3278
    %v3287 = vadd.f32 %v3230, %v3279
    %v3288 = vadd.f32 %v3231, %v3280
    %v3289 = vadd.f32 %v3232, %v3281
    %v3290 = vadd.f32 %v3233, %v3282
    %v3291 = vadd.f32 %v3234, %v3283
    %s3292 = scalar_lea.vmem %s3, 384
    %v3293 = vld [vmem:[%s3292] sm:$0xff]
    %v3294 = vld [vmem:[%s3292 + $0x8] sm:$0xff]
    %v3295 = vld [vmem:[%s3292 + $0x10] sm:$0xff]
    %v3296 = vld [vmem:[%s3292 + $0x18] sm:$0xff]
    %v3297 = vld [vmem:[%s3292 + $0x20] sm:$0xff]
    %v3298 = vld [vmem:[%s3292 + $0x28] sm:$0xff]
    %v3299 = vld [vmem:[%s3292 + $0x30] sm:$0xff]
    %v3300 = vld [vmem:[%s3292 + $0x38] sm:$0xff]
    %3301 = vset.pattern.permute.xlu0 6
    %3302 = vperm.xlu0 %3301, %v2928
    %v3303 = vpop.permute.xlu0 %3302
    %3305 = vset.pattern.permute.xlu0 6
    %3306 = vperm.xlu0 %3305, %v2930
    %v3307 = vpop.permute.xlu0 %3306
    %3309 = vset.pattern.permute.xlu0 6
    %3310 = vperm.xlu0 %3309, %v2932
    %v3311 = vpop.permute.xlu0 %3310
    %3313 = vset.pattern.permute.xlu0 6
    %3314 = vperm.xlu0 %3313, %v2934
    %v3315 = vpop.permute.xlu0 %3314
    %3317 = vset.pattern.permute.xlu0 6
    %3318 = vperm.xlu0 %3317, %v2936
    %v3319 = vpop.permute.xlu0 %3318
    %3321 = vset.pattern.permute.xlu0 6
    %3322 = vperm.xlu0 %3321, %v2938
    %v3323 = vpop.permute.xlu0 %3322
    %3325 = vset.pattern.permute.xlu0 6
    %3326 = vperm.xlu0 %3325, %v2940
    %v3327 = vpop.permute.xlu0 %3326
    %3329 = vset.pattern.permute.xlu0 6
    %3330 = vperm.xlu0 %3329, %v2942
    %v3331 = vpop.permute.xlu0 %3330
    %v3333 = vmul.f32 %v3303, %v3293
    %v3334 = vmul.f32 %v3307, %v3294
    %v3335 = vmul.f32 %v3311, %v3295
    %v3336 = vmul.f32 %v3315, %v3296
    %v3337 = vmul.f32 %v3319, %v3297
    %v3338 = vmul.f32 %v3323, %v3298
    %v3339 = vmul.f32 %v3327, %v3299
    %v3340 = vmul.f32 %v3331, %v3300
    %v3341 = vadd.f32 %v3284, %v3333
    %v3342 = vadd.f32 %v3285, %v3334
    %v3343 = vadd.f32 %v3286, %v3335
    %v3344 = vadd.f32 %v3287, %v3336
    %v3345 = vadd.f32 %v3288, %v3337
    %v3346 = vadd.f32 %v3289, %v3338
    %v3347 = vadd.f32 %v3290, %v3339
    %v3348 = vadd.f32 %v3291, %v3340
    %v3349 = vld [vmem:[#allocation8] sm:$0xff]
    %v3350 = vld [vmem:[#allocation8 + $0x8] sm:$0xff]
    %v3351 = vld [vmem:[#allocation8 + $0x10] sm:$0xff]
    %v3352 = vld [vmem:[#allocation8 + $0x18] sm:$0xff]
    %v3353 = vld [vmem:[#allocation8 + $0x20] sm:$0xff]
    %v3354 = vld [vmem:[#allocation8 + $0x28] sm:$0xff]
    %v3355 = vld [vmem:[#allocation8 + $0x30] sm:$0xff]
    %v3356 = vld [vmem:[#allocation8 + $0x38] sm:$0xff]
    %v3357 = vld [vmem:[#allocation8 + $0x40] sm:$0xff]
    %v3358 = vld [vmem:[#allocation8 + $0x48] sm:$0xff]
    %v3359 = vld [vmem:[#allocation8 + $0x50] sm:$0xff]
    %v3360 = vld [vmem:[#allocation8 + $0x58] sm:$0xff]
    %v3361 = vld [vmem:[#allocation11] sm:$0x3]
    %v3363 = vlaneseq
    %v3364 = vshrl.u32 %v3363, 7
    %v3365 = vsub.s32 0, %v3364
    %v3366 = vrot.slane %v3361, %v3365
    %v3367 = vlaneseq
    %v3368 = vshrl.u32 %v3367, 7
    %v3369 = vsub.s32 1, %v3368
    %v3370 = vrot.slane %v3361, %v3369
    %v3374 = vsel %vm183, %v3341, 0
    %v3377 = vsel %vm183, %v3342, 0
    %v3380 = vsel %vm183, %v3343, 0
    %v3383 = vsel %vm183, %v3344, 0
    %v3386 = vsel %vm183, %v3345, 0
    %v3389 = vsel %vm183, %v3346, 0
    %v3392 = vsel %vm183, %v3347, 0
    %v3395 = vsel %vm183, %v3348, 0
    %3397 = vmatprep.subr.mxu0 0.0
    %3398 = vmatpush1.msra.mxu0 0.0
    %3399 = vmatprep.subr.mxu0 0.0
    %3400 = vmatpush1.msra.mxu0 0.0
    %3401 = vmatprep.subr.mxu0 0.0
    %3402 = vmatpush1.msra.mxu0 0.0
    %3403 = vmatprep.subr.mxu0 0.0
    %3404 = vmatpush1.msra.mxu0 0.0
    %3405 = vmatprep.subr.mxu0 0.0
    %3406 = vmatpush1.msra.mxu0 0.0
    %3407 = vmatprep.subr.mxu0 0.0
    %3408 = vmatpush1.msra.mxu0 0.0
    %3409 = vmatprep.subr.mxu0 0.0
    %3410 = vmatpush1.msra.mxu0 0.0
    %3411 = vmatprep.subr.mxu0 0.0
    %3412 = vmatpush1.msra.mxu0 0.0
    %3413 = vmatprep.subr.mxu0 0.0
    %3414 = vmatpush1.msra.mxu0 0.0
    %3415 = vmatprep.subr.mxu0 0.0
    %3416 = vmatpush1.msra.mxu0 0.0
    %3417 = vmatprep.subr.mxu0 %v3360
    %3418 = vmatpush1.msra.mxu0 %v3359
    %3419 = vmatprep.subr.mxu0 %v3358
    %3420 = vmatpush1.msra.mxu0 %v3357
    %3421 = vmatprep.subr.mxu0 %v3356
    %3422 = vmatpush1.msra.mxu0 %v3355
    %3423 = vmatprep.subr.mxu0 %v3354
    %3424 = vmatpush1.msra.mxu0 %v3353
    %3425 = vmatprep.subr.mxu0 %v3352
    %3426 = vmatpush1.msra.mxu0 %v3351
    %3427 = vmatprep.subr.mxu0 %v3350
    %3428 = vmatpush1.msra.mxu0 %v3349
    %3429 = vmatprep.subr.mxu0 0.0
    %3430 = vmatpush2.msra.mxu0 0.0
    %3431 = vmatprep.subr.mxu0 0.0
    %3432 = vmatpush2.msra.mxu0 0.0
    %3433 = vmatprep.subr.mxu0 0.0
    %3434 = vmatpush2.msra.mxu0 0.0
    %3435 = vmatprep.subr.mxu0 0.0
    %3436 = vmatpush2.msra.mxu0 0.0
    %3437 = vmatprep.subr.mxu0 0.0
    %3438 = vmatpush2.msra.mxu0 0.0
    %3439 = vmatprep.subr.mxu0 0.0
    %3440 = vmatpush2.msra.mxu0 0.0
    %3441 = vmatprep.subr.mxu0 0.0
    %3442 = vmatpush2.msra.mxu0 0.0
    %3443 = vmatprep.subr.mxu0 0.0
    %3444 = vmatpush2.msra.mxu0 0.0
    %3445 = vmatprep.subr.mxu0 0.0
    %3446 = vmatpush2.msra.mxu0 0.0
    %3447 = vmatprep.subr.mxu0 0.0
    %3448 = vmatpush2.msra.mxu0 0.0
    %3449 = vmatprep.subr.mxu0 0.0
    %3450 = vmatpush2.msra.mxu0 0.0
    %3451 = vmatprep.subr.mxu0 0.0
    %3452 = vmatpush2.msra.mxu0 0.0
    %3453 = vmatprep.subr.mxu0 0.0
    %3454 = vmatpush2.msra.mxu0 0.0
    %3455 = vmatprep.subr.mxu0 0.0
    %3456 = vmatpush2.msra.mxu0 0.0
    %3457 = vmatprep.subr.mxu0 0.0
    %3458 = vmatpush2.msra.mxu0 0.0
    %3459 = vmatprep.subr.mxu0 0.0
    %3460 = vmatpush2.msra.mxu0 0.0
    %3461 = vmatprep.mubr.f32.mxu0 0.0
    %3462 = vmatmul.mubr.f32.gmra.mxu0 %v3374
    %v3463 = vpop.f32.mrf.mxu0
    %v3464 = vadd.f32 %v3366, %v3463
    %v3465 = vpop.f32.mrf.mxu0
    %v3466 = vadd.f32 %v3370, %v3465
    %3467 = vmatprep.mubr.f32.mxu0 0.0
    %3468 = vmatmul.mubr.f32.gmra.mxu0 %v3377
    %v3469 = vpop.f32.mrf.mxu0
    %v3470 = vadd.f32 %v3366, %v3469
    %v3471 = vpop.f32.mrf.mxu0
    %v3472 = vadd.f32 %v3370, %v3471
    %3473 = vmatprep.mubr.f32.mxu0 0.0
    %3474 = vmatmul.mubr.f32.gmra.mxu0 %v3380
    %v3475 = vpop.f32.mrf.mxu0
    %v3476 = vadd.f32 %v3366, %v3475
    %v3477 = vpop.f32.mrf.mxu0
    %v3478 = vadd.f32 %v3370, %v3477
    %3479 = vmatprep.mubr.f32.mxu0 0.0
    %3480 = vmatmul.mubr.f32.gmra.mxu0 %v3383
    %v3481 = vpop.f32.mrf.mxu0
    %v3482 = vadd.f32 %v3366, %v3481
    %v3483 = vpop.f32.mrf.mxu0
    %v3484 = vadd.f32 %v3370, %v3483
    %3485 = vmatprep.mubr.f32.mxu0 0.0
    %3486 = vmatmul.mubr.f32.gmra.mxu0 %v3386
    %v3487 = vpop.f32.mrf.mxu0
    %v3488 = vadd.f32 %v3366, %v3487
    %v3489 = vpop.f32.mrf.mxu0
    %v3490 = vadd.f32 %v3370, %v3489
    %3491 = vmatprep.mubr.f32.mxu0 0.0
    %3492 = vmatmul.mubr.f32.gmra.mxu0 %v3389
    %v3493 = vpop.f32.mrf.mxu0
    %v3494 = vadd.f32 %v3366, %v3493
    %v3495 = vpop.f32.mrf.mxu0
    %v3496 = vadd.f32 %v3370, %v3495
    %3497 = vmatprep.mubr.f32.mxu0 0.0
    %3498 = vmatmul.mubr.f32.gmra.mxu0 %v3392
    %v3499 = vpop.f32.mrf.mxu0
    %v3500 = vadd.f32 %v3366, %v3499
    %v3501 = vpop.f32.mrf.mxu0
    %v3502 = vadd.f32 %v3370, %v3501
    %3503 = vmatprep.mubr.f32.mxu0 0.0
    %3504 = vmatmul.mubr.f32.gmra.mxu0 %v3395
    %v3505 = vpop.f32.mrf.mxu0
    %v3506 = vadd.f32 %v3366, %v3505
    %v3507 = vpop.f32.mrf.mxu0
    %v3508 = vadd.f32 %v3370, %v3507
    %3509 = vdwg.mxu0
    %v3510 = vld [vmem:[%s16] sm:$0xff]
    %v3511 = vld [vmem:[%s16 + $0x8] sm:$0xff]
    %v3512 = vld [vmem:[%s16 + $0x10] sm:$0xff]
    %v3513 = vld [vmem:[%s16 + $0x18] sm:$0xff]
    %v3514 = vld [vmem:[%s16 + $0x20] sm:$0xff]
    %v3515 = vld [vmem:[%s16 + $0x28] sm:$0xff]
    %v3516 = vld [vmem:[%s16 + $0x30] sm:$0xff]
    %v3517 = vld [vmem:[%s16 + $0x38] sm:$0xff]
    %v3518 = vld [vmem:[%s16 + $0x40] sm:$0xff]
    %v3519 = vld [vmem:[%s16 + $0x48] sm:$0xff]
    %v3520 = vld [vmem:[%s16 + $0x50] sm:$0xff]
    %v3521 = vld [vmem:[%s16 + $0x58] sm:$0xff]
    %v3522 = vld [vmem:[%s16 + $0x60] sm:$0xff]
    %v3523 = vld [vmem:[%s16 + $0x68] sm:$0xff]
    %v3524 = vld [vmem:[%s16 + $0x70] sm:$0xff]
    %v3525 = vld [vmem:[%s16 + $0x78] sm:$0xff]
    %v3526 = vld [vmem:[%s16 + $0x80] sm:$0xff]
    %v3527 = vld [vmem:[%s16 + $0x88] sm:$0xff]
    %v3528 = vld [vmem:[%s16 + $0x90] sm:$0xff]
    %v3529 = vld [vmem:[%s16 + $0x98] sm:$0xff]
    %v3530 = vld [vmem:[%s16 + $0xa0] sm:$0xff]
    %v3531 = vld [vmem:[%s16 + $0xa8] sm:$0xff]
    %v3532 = vld [vmem:[%s16 + $0xb0] sm:$0xff]
    %v3533 = vld [vmem:[%s16 + $0xb8] sm:$0xff]
    %v3534 = vld [vmem:[%s16 + $0xc0] sm:$0xff]
    %v3535 = vld [vmem:[%s16 + $0xc8] sm:$0xff]
    %v3536 = vld [vmem:[%s16 + $0xd0] sm:$0xff]
    %v3537 = vld [vmem:[%s16 + $0xd8] sm:$0xff]
    %v3538 = vld [vmem:[%s16 + $0xe0] sm:$0xff]
    %v3539 = vld [vmem:[%s16 + $0xe8] sm:$0xff]
    %v3540 = vld [vmem:[%s16 + $0xf0] sm:$0xff]
    %v3541 = vld [vmem:[%s16 + $0xf8] sm:$0xff]
    %3574 = vrot.lane.b32.xlu0 %v3510, 48
    %v3575 = vpop.permute.xlu0 %3574
    %3576 = vrot.lane.b32.xlu0 %v3511, 48
    %v3577 = vpop.permute.xlu0 %3576
    %3578 = vrot.lane.b32.xlu0 %v3512, 48
    %v3579 = vpop.permute.xlu0 %3578
    %3580 = vrot.lane.b32.xlu0 %v3513, 48
    %v3581 = vpop.permute.xlu0 %3580
    %3582 = vrot.lane.b32.xlu0 %v3514, 48
    %v3583 = vpop.permute.xlu0 %3582
    %3584 = vrot.lane.b32.xlu0 %v3515, 48
    %v3585 = vpop.permute.xlu0 %3584
    %3586 = vrot.lane.b32.xlu0 %v3516, 48
    %v3587 = vpop.permute.xlu0 %3586
    %3588 = vrot.lane.b32.xlu0 %v3517, 48
    %v3589 = vpop.permute.xlu0 %3588
    %3590 = vrot.lane.b32.xlu0 %v3518, 48
    %v3591 = vpop.permute.xlu0 %3590
    %3592 = vrot.lane.b32.xlu0 %v3519, 48
    %v3593 = vpop.permute.xlu0 %3592
    %3594 = vrot.lane.b32.xlu0 %v3520, 48
    %v3595 = vpop.permute.xlu0 %3594
    %3596 = vrot.lane.b32.xlu0 %v3521, 48
    %v3597 = vpop.permute.xlu0 %3596
    %3598 = vrot.lane.b32.xlu0 %v3522, 48
    %v3599 = vpop.permute.xlu0 %3598
    %3600 = vrot.lane.b32.xlu0 %v3523, 48
    %v3601 = vpop.permute.xlu0 %3600
    %3602 = vrot.lane.b32.xlu0 %v3524, 48
    %v3603 = vpop.permute.xlu0 %3602
    %3604 = vrot.lane.b32.xlu0 %v3525, 48
    %v3605 = vpop.permute.xlu0 %3604
    %3606 = vrot.lane.b32.xlu0 %v3526, 48
    %v3607 = vpop.permute.xlu0 %3606
    %3608 = vrot.lane.b32.xlu0 %v3527, 48
    %v3609 = vpop.permute.xlu0 %3608
    %3610 = vrot.lane.b32.xlu0 %v3528, 48
    %v3611 = vpop.permute.xlu0 %3610
    %3612 = vrot.lane.b32.xlu0 %v3529, 48
    %v3613 = vpop.permute.xlu0 %3612
    %3614 = vrot.lane.b32.xlu0 %v3530, 48
    %v3615 = vpop.permute.xlu0 %3614
    %3616 = vrot.lane.b32.xlu0 %v3531, 48
    %v3617 = vpop.permute.xlu0 %3616
    %3618 = vrot.lane.b32.xlu0 %v3532, 48
    %v3619 = vpop.permute.xlu0 %3618
    %3620 = vrot.lane.b32.xlu0 %v3533, 48
    %v3621 = vpop.permute.xlu0 %3620
    %3622 = vrot.lane.b32.xlu0 %v3534, 48
    %v3623 = vpop.permute.xlu0 %3622
    %3624 = vrot.lane.b32.xlu0 %v3535, 48
    %v3625 = vpop.permute.xlu0 %3624
    %3626 = vrot.lane.b32.xlu0 %v3536, 48
    %v3627 = vpop.permute.xlu0 %3626
    %3628 = vrot.lane.b32.xlu0 %v3537, 48
    %v3629 = vpop.permute.xlu0 %3628
    %3630 = vrot.lane.b32.xlu0 %v3538, 48
    %v3631 = vpop.permute.xlu0 %3630
    %3632 = vrot.lane.b32.xlu0 %v3539, 48
    %v3633 = vpop.permute.xlu0 %3632
    %3634 = vrot.lane.b32.xlu0 %v3540, 48
    %v3635 = vpop.permute.xlu0 %3634
    %3636 = vrot.lane.b32.xlu0 %v3541, 48
    %v3637 = vpop.permute.xlu0 %3636
    %v3670 = vmul.f32 %v3464, %v3575
    %v3671 = vmul.f32 %v3470, %v3577
    %v3672 = vmul.f32 %v3476, %v3579
    %v3673 = vmul.f32 %v3482, %v3581
    %v3674 = vmul.f32 %v3464, %v3583
    %v3675 = vmul.f32 %v3470, %v3585
    %v3676 = vmul.f32 %v3476, %v3587
    %v3677 = vmul.f32 %v3482, %v3589
    %v3678 = vmul.f32 %v3464, %v3591
    %v3679 = vmul.f32 %v3470, %v3593
    %v3680 = vmul.f32 %v3476, %v3595
    %v3681 = vmul.f32 %v3482, %v3597
    %v3682 = vmul.f32 %v3464, %v3599
    %v3683 = vmul.f32 %v3470, %v3601
    %v3684 = vmul.f32 %v3476, %v3603
    %v3685 = vmul.f32 %v3482, %v3605
    %v3686 = vmul.f32 %v3464, %v3607
    %v3687 = vmul.f32 %v3470, %v3609
    %v3688 = vmul.f32 %v3476, %v3611
    %v3689 = vmul.f32 %v3482, %v3613
    %v3690 = vmul.f32 %v3464, %v3615
    %v3691 = vmul.f32 %v3470, %v3617
    %v3692 = vmul.f32 %v3476, %v3619
    %v3693 = vmul.f32 %v3482, %v3621
    %v3694 = vmul.f32 %v3464, %v3623
    %v3695 = vmul.f32 %v3470, %v3625
    %v3696 = vmul.f32 %v3476, %v3627
    %v3697 = vmul.f32 %v3482, %v3629
    %v3698 = vmul.f32 %v3464, %v3631
    %v3699 = vmul.f32 %v3470, %v3633
    %v3700 = vmul.f32 %v3476, %v3635
    %v3701 = vmul.f32 %v3482, %v3637
    %3734 = vrot.lane.b32.xlu0 %v3670, 80
    %v3735 = vpop.permute.xlu0 %3734
    %3736 = vrot.lane.b32.xlu0 %v3671, 80
    %v3737 = vpop.permute.xlu0 %3736
    %3738 = vrot.lane.b32.xlu0 %v3672, 80
    %v3739 = vpop.permute.xlu0 %3738
    %3740 = vrot.lane.b32.xlu0 %v3673, 80
    %v3741 = vpop.permute.xlu0 %3740
    %3742 = vrot.lane.b32.xlu0 %v3674, 80
    %v3743 = vpop.permute.xlu0 %3742
    %3744 = vrot.lane.b32.xlu0 %v3675, 80
    %v3745 = vpop.permute.xlu0 %3744
    %3746 = vrot.lane.b32.xlu0 %v3676, 80
    %v3747 = vpop.permute.xlu0 %3746
    %3748 = vrot.lane.b32.xlu0 %v3677, 80
    %v3749 = vpop.permute.xlu0 %3748
    %3750 = vrot.lane.b32.xlu0 %v3678, 80
    %v3751 = vpop.permute.xlu0 %3750
    %3752 = vrot.lane.b32.xlu0 %v3679, 80
    %v3753 = vpop.permute.xlu0 %3752
    %3754 = vrot.lane.b32.xlu0 %v3680, 80
    %v3755 = vpop.permute.xlu0 %3754
    %3756 = vrot.lane.b32.xlu0 %v3681, 80
    %v3757 = vpop.permute.xlu0 %3756
    %3758 = vrot.lane.b32.xlu0 %v3682, 80
    %v3759 = vpop.permute.xlu0 %3758
    %3760 = vrot.lane.b32.xlu0 %v3683, 80
    %v3761 = vpop.permute.xlu0 %3760
    %3762 = vrot.lane.b32.xlu0 %v3684, 80
    %v3763 = vpop.permute.xlu0 %3762
    %3764 = vrot.lane.b32.xlu0 %v3685, 80
    %v3765 = vpop.permute.xlu0 %3764
    %3766 = vrot.lane.b32.xlu0 %v3686, 80
    %v3767 = vpop.permute.xlu0 %3766
    %3768 = vrot.lane.b32.xlu0 %v3687, 80
    %v3769 = vpop.permute.xlu0 %3768
    %3770 = vrot.lane.b32.xlu0 %v3688, 80
    %v3771 = vpop.permute.xlu0 %3770
    %3772 = vrot.lane.b32.xlu0 %v3689, 80
    %v3773 = vpop.permute.xlu0 %3772
    %3774 = vrot.lane.b32.xlu0 %v3690, 80
    %v3775 = vpop.permute.xlu0 %3774
    %3776 = vrot.lane.b32.xlu0 %v3691, 80
    %v3777 = vpop.permute.xlu0 %3776
    %3778 = vrot.lane.b32.xlu0 %v3692, 80
    %v3779 = vpop.permute.xlu0 %3778
    %3780 = vrot.lane.b32.xlu0 %v3693, 80
    %v3781 = vpop.permute.xlu0 %3780
    %3782 = vrot.lane.b32.xlu0 %v3694, 80
    %v3783 = vpop.permute.xlu0 %3782
    %3784 = vrot.lane.b32.xlu0 %v3695, 80
    %v3785 = vpop.permute.xlu0 %3784
    %3786 = vrot.lane.b32.xlu0 %v3696, 80
    %v3787 = vpop.permute.xlu0 %3786
    %3788 = vrot.lane.b32.xlu0 %v3697, 80
    %v3789 = vpop.permute.xlu0 %3788
    %3790 = vrot.lane.b32.xlu0 %v3698, 80
    %v3791 = vpop.permute.xlu0 %3790
    %3792 = vrot.lane.b32.xlu0 %v3699, 80
    %v3793 = vpop.permute.xlu0 %3792
    %3794 = vrot.lane.b32.xlu0 %v3700, 80
    %v3795 = vpop.permute.xlu0 %3794
    %3796 = vrot.lane.b32.xlu0 %v3701, 80
    %v3797 = vpop.permute.xlu0 %3796
    %v3799 = vsel %vm183, %v3464, 0
    %v3802 = vsel %vm183, %v3470, 0
    %v3805 = vsel %vm183, %v3476, 0
    %v3808 = vsel %vm183, %v3482, 0
    %v3810 = vsel %vm183, %v3735, 0
    %v3812 = vsel %vm183, %v3737, 0
    %v3814 = vsel %vm183, %v3739, 0
    %v3816 = vsel %vm183, %v3741, 0
    %v3818 = vsel %vm183, %v3743, 0
    %v3820 = vsel %vm183, %v3745, 0
    %v3822 = vsel %vm183, %v3747, 0
    %v3824 = vsel %vm183, %v3749, 0
    %v3826 = vsel %vm183, %v3751, 0
    %v3828 = vsel %vm183, %v3753, 0
    %v3830 = vsel %vm183, %v3755, 0
    %v3832 = vsel %vm183, %v3757, 0
    %v3834 = vsel %vm183, %v3759, 0
    %v3836 = vsel %vm183, %v3761, 0
    %v3838 = vsel %vm183, %v3763, 0
    %v3840 = vsel %vm183, %v3765, 0
    %v3842 = vsel %vm183, %v3767, 0
    %v3844 = vsel %vm183, %v3769, 0
    %v3846 = vsel %vm183, %v3771, 0
    %v3848 = vsel %vm183, %v3773, 0
    %v3850 = vsel %vm183, %v3775, 0
    %v3852 = vsel %vm183, %v3777, 0
    %v3854 = vsel %vm183, %v3779, 0
    %v3856 = vsel %vm183, %v3781, 0
    %v3858 = vsel %vm183, %v3783, 0
    %v3860 = vsel %vm183, %v3785, 0
    %v3862 = vsel %vm183, %v3787, 0
    %v3864 = vsel %vm183, %v3789, 0
    %v3866 = vsel %vm183, %v3791, 0
    %v3868 = vsel %vm183, %v3793, 0
    %v3870 = vsel %vm183, %v3795, 0
    %v3872 = vsel %vm183, %v3797, 0
    %3874 = vmatprep.subr.mxu0 0.0
    %3875 = vmatpush1.xpose.msra.mxu0 %v3840
    %3876 = vmatprep.subr.mxu0 0.0
    %3877 = vmatpush1.xpose.msra.mxu0 %v3838
    %3878 = vmatprep.subr.mxu0 0.0
    %3879 = vmatpush1.xpose.msra.mxu0 %v3836
    %3880 = vmatprep.subr.mxu0 0.0
    %3881 = vmatpush1.xpose.msra.mxu0 %v3834
    %3882 = vmatprep.subr.mxu0 0.0
    %3883 = vmatpush1.xpose.msra.mxu0 %v3832
    %3884 = vmatprep.subr.mxu0 0.0
    %3885 = vmatpush1.xpose.msra.mxu0 %v3830
    %3886 = vmatprep.subr.mxu0 0.0
    %3887 = vmatpush1.xpose.msra.mxu0 %v3828
    %3888 = vmatprep.subr.mxu0 0.0
    %3889 = vmatpush1.xpose.msra.mxu0 %v3826
    %3890 = vmatprep.subr.mxu0 0.0
    %3891 = vmatpush1.xpose.msra.mxu0 %v3824
    %3892 = vmatprep.subr.mxu0 0.0
    %3893 = vmatpush1.xpose.msra.mxu0 %v3822
    %3894 = vmatprep.subr.mxu0 0.0
    %3895 = vmatpush1.xpose.msra.mxu0 %v3820
    %3896 = vmatprep.subr.mxu0 0.0
    %3897 = vmatpush1.xpose.msra.mxu0 %v3818
    %3898 = vmatprep.subr.mxu0 0.0
    %3899 = vmatpush1.xpose.msra.mxu0 %v3816
    %3900 = vmatprep.subr.mxu0 0.0
    %3901 = vmatpush1.xpose.msra.mxu0 %v3814
    %3902 = vmatprep.subr.mxu0 0.0
    %3903 = vmatpush1.xpose.msra.mxu0 %v3812
    %3904 = vmatprep.subr.mxu0 0.0
    %3905 = vmatpush1.xpose.msra.mxu0 %v3810
    %3906 = vmatprep.subr.mxu0 0.0
    %3907 = vmatpush2.xpose.msra.mxu0 %v3872
    %3908 = vmatprep.subr.mxu0 0.0
    %3909 = vmatpush2.xpose.msra.mxu0 %v3870
    %3910 = vmatprep.subr.mxu0 0.0
    %3911 = vmatpush2.xpose.msra.mxu0 %v3868
    %3912 = vmatprep.subr.mxu0 0.0
    %3913 = vmatpush2.xpose.msra.mxu0 %v3866
    %3914 = vmatprep.subr.mxu0 0.0
    %3915 = vmatpush2.xpose.msra.mxu0 %v3864
    %3916 = vmatprep.subr.mxu0 0.0
    %3917 = vmatpush2.xpose.msra.mxu0 %v3862
    %3918 = vmatprep.subr.mxu0 0.0
    %3919 = vmatpush2.xpose.msra.mxu0 %v3860
    %3920 = vmatprep.subr.mxu0 0.0
    %3921 = vmatpush2.xpose.msra.mxu0 %v3858
    %3922 = vmatprep.subr.mxu0 0.0
    %3923 = vmatpush2.xpose.msra.mxu0 %v3856
    %3924 = vmatprep.subr.mxu0 0.0
    %3925 = vmatpush2.xpose.msra.mxu0 %v3854
    %3926 = vmatprep.subr.mxu0 0.0
    %3927 = vmatpush2.xpose.msra.mxu0 %v3852
    %3928 = vmatprep.subr.mxu0 0.0
    %3929 = vmatpush2.xpose.msra.mxu0 %v3850
    %3930 = vmatprep.subr.mxu0 0.0
    %3931 = vmatpush2.xpose.msra.mxu0 %v3848
    %3932 = vmatprep.subr.mxu0 0.0
    %3933 = vmatpush2.xpose.msra.mxu0 %v3846
    %3934 = vmatprep.subr.mxu0 0.0
    %3935 = vmatpush2.xpose.msra.mxu0 %v3844
    %3936 = vmatprep.subr.mxu0 0.0
    %3937 = vmatpush2.xpose.msra.mxu0 %v3842
    %3938 = vmatprep.mubr.f32.mxu0 0.0
    %3939 = vmatmul.mubr.f32.gmra.mxu0 %v3799
    %v3940 = vpop.f32.mrf.mxu0
    %v3941 = vadd.f32 0.0, %v3940
    %v3942 = vpop.f32.mrf.mxu0
    %v3943 = vadd.f32 0.0, %v3942
    %3944 = vmatprep.mubr.f32.mxu0 0.0
    %3945 = vmatmul.mubr.f32.gmra.mxu0 %v3802
    %v3946 = vpop.f32.mrf.mxu0
    %v3947 = vadd.f32 0.0, %v3946
    %v3948 = vpop.f32.mrf.mxu0
    %v3949 = vadd.f32 0.0, %v3948
    %3950 = vmatprep.mubr.f32.mxu0 0.0
    %3951 = vmatmul.mubr.f32.gmra.mxu0 %v3805
    %v3952 = vpop.f32.mrf.mxu0
    %v3953 = vadd.f32 0.0, %v3952
    %v3954 = vpop.f32.mrf.mxu0
    %v3955 = vadd.f32 0.0, %v3954
    %3956 = vmatprep.mubr.f32.mxu0 0.0
    %3957 = vmatmul.mubr.f32.gmra.mxu0 %v3808
    %v3958 = vpop.f32.mrf.mxu0
    %v3959 = vadd.f32 0.0, %v3958
    %v3960 = vpop.f32.mrf.mxu0
    %v3961 = vadd.f32 0.0, %v3960
    %3962 = vdwg.mxu0
    %v3963 = vmul.f32 %v3941, 0.4082483
    %v3964 = vmul.f32 %v3943, 0.4082483
    %v3965 = vmul.f32 %v3947, 0.4082483
    %v3966 = vmul.f32 %v3949, 0.4082483
    %v3967 = vmul.f32 %v3953, 0.4082483
    %v3968 = vmul.f32 %v3955, 0.4082483
    %v3969 = vmul.f32 %v3959, 0.4082483
    %v3970 = vmul.f32 %v3961, 0.4082483
    %v3971 = vmax.f32 %v3963, %v3964
    %3972 = vmax.xlane.f32.xlu0 %v3971
    %v3973 = vpop.xlane.xlu0 %3972
    %v3974 = vmax.f32 %v3965, %v3966
    %3975 = vmax.xlane.f32.xlu0 %v3974
    %v3976 = vpop.xlane.xlu0 %3975
    %v3977 = vmax.f32 %v3967, %v3968
    %3978 = vmax.xlane.f32.xlu0 %v3977
    %v3979 = vpop.xlane.xlu0 %3978
    %v3980 = vmax.f32 %v3969, %v3970
    %3981 = vmax.xlane.f32.xlu0 %v3980
    %v3982 = vpop.xlane.xlu0 %3981
    %v3983 = vsub.f32 %v3963, %v3973
    %v3984 = vsub.f32 %v3964, %v3973
    %v3985 = vsub.f32 %v3965, %v3976
    %v3986 = vsub.f32 %v3966, %v3976
    %v3987 = vsub.f32 %v3967, %v3979
    %v3988 = vsub.f32 %v3968, %v3979
    %v3989 = vsub.f32 %v3969, %v3982
    %v3990 = vsub.f32 %v3970, %v3982
    %v3991 = vmul.f32 %v3983, 1.442695
    %v3992 = vpow.pop %v3991
    %v3993 = vmul.f32 %v3984, 1.442695
    %v3994 = vpow.pop %v3993
    %v3995 = vmul.f32 %v3985, 1.442695
    %v3996 = vpow.pop %v3995
    %v3997 = vmul.f32 %v3986, 1.442695
    %v3998 = vpow.pop %v3997
    %v3999 = vmul.f32 %v3987, 1.442695
    %v4000 = vpow.pop %v3999
    %v4001 = vmul.f32 %v3988, 1.442695
    %v4002 = vpow.pop %v4001
    %v4003 = vmul.f32 %v3989, 1.442695
    %v4004 = vpow.pop %v4003
    %v4005 = vmul.f32 %v3990, 1.442695
    %v4006 = vpow.pop %v4005
    %4007 = vmatprep.subr.mxu0 0.0
    %4008 = vmatpush1.msra.mxu0 %v3525
    %4009 = vmatprep.subr.mxu0 0.0
    %4010 = vmatpush1.msra.mxu0 %v3524
    %4011 = vmatprep.subr.mxu0 0.0
    %4012 = vmatpush1.msra.mxu0 %v3523
    %4013 = vmatprep.subr.mxu0 0.0
    %4014 = vmatpush1.msra.mxu0 %v3522
    %4015 = vmatprep.subr.mxu0 0.0
    %4016 = vmatpush1.msra.mxu0 %v3521
    %4017 = vmatprep.subr.mxu0 0.0
    %4018 = vmatpush1.msra.mxu0 %v3520
    %4019 = vmatprep.subr.mxu0 0.0
    %4020 = vmatpush1.msra.mxu0 %v3519
    %4021 = vmatprep.subr.mxu0 0.0
    %4022 = vmatpush1.msra.mxu0 %v3518
    %4023 = vmatprep.subr.mxu0 0.0
    %4024 = vmatpush1.msra.mxu0 %v3517
    %4025 = vmatprep.subr.mxu0 0.0
    %4026 = vmatpush1.msra.mxu0 %v3516
    %4027 = vmatprep.subr.mxu0 0.0
    %4028 = vmatpush1.msra.mxu0 %v3515
    %4029 = vmatprep.subr.mxu0 0.0
    %4030 = vmatpush1.msra.mxu0 %v3514
    %4031 = vmatprep.subr.mxu0 0.0
    %4032 = vmatpush1.msra.mxu0 %v3513
    %4033 = vmatprep.subr.mxu0 0.0
    %4034 = vmatpush1.msra.mxu0 %v3512
    %4035 = vmatprep.subr.mxu0 0.0
    %4036 = vmatpush1.msra.mxu0 %v3511
    %4037 = vmatprep.subr.mxu0 0.0
    %4038 = vmatpush1.msra.mxu0 %v3510
    %4039 = vmatprep.subr.mxu0 0.0
    %4040 = vmatpush2.msra.mxu0 %v3541
    %4041 = vmatprep.subr.mxu0 0.0
    %4042 = vmatpush2.msra.mxu0 %v3540
    %4043 = vmatprep.subr.mxu0 0.0
    %4044 = vmatpush2.msra.mxu0 %v3539
    %4045 = vmatprep.subr.mxu0 0.0
    %4046 = vmatpush2.msra.mxu0 %v3538
    %4047 = vmatprep.subr.mxu0 0.0
    %4048 = vmatpush2.msra.mxu0 %v3537
    %4049 = vmatprep.subr.mxu0 0.0
    %4050 = vmatpush2.msra.mxu0 %v3536
    %4051 = vmatprep.subr.mxu0 0.0
    %4052 = vmatpush2.msra.mxu0 %v3535
    %4053 = vmatprep.subr.mxu0 0.0
    %4054 = vmatpush2.msra.mxu0 %v3534
    %4055 = vmatprep.subr.mxu0 0.0
    %4056 = vmatpush2.msra.mxu0 %v3533
    %4057 = vmatprep.subr.mxu0 0.0
    %4058 = vmatpush2.msra.mxu0 %v3532
    %4059 = vmatprep.subr.mxu0 0.0
    %4060 = vmatpush2.msra.mxu0 %v3531
    %4061 = vmatprep.subr.mxu0 0.0
    %4062 = vmatpush2.msra.mxu0 %v3530
    %4063 = vmatprep.subr.mxu0 0.0
    %4064 = vmatpush2.msra.mxu0 %v3529
    %4065 = vmatprep.subr.mxu0 0.0
    %4066 = vmatpush2.msra.mxu0 %v3528
    %4067 = vmatprep.subr.mxu0 0.0
    %4068 = vmatpush2.msra.mxu0 %v3527
    %4069 = vmatprep.subr.mxu0 0.0
    %4070 = vmatpush2.msra.mxu0 %v3526
    %4071 = vmatprep.mubr.f32.mxu0 %v3994
    %4072 = vmatmul.mubr.f32.gmra.mxu0 %v3992
    %v4073 = vpop.f32.mrf.mxu0
    %v4074 = vadd.f32 0.0, %v4073
    %v4075 = vpop.f32.mrf.mxu0
    %4076 = vmatprep.mubr.f32.mxu0 %v3998
    %4077 = vmatmul.mubr.f32.gmra.mxu0 %v3996
    %v4078 = vpop.f32.mrf.mxu0
    %v4079 = vadd.f32 0.0, %v4078
    %v4080 = vpop.f32.mrf.mxu0
    %4081 = vmatprep.mubr.f32.mxu0 %v4002
    %4082 = vmatmul.mubr.f32.gmra.mxu0 %v4000
    %v4083 = vpop.f32.mrf.mxu0
    %v4084 = vadd.f32 0.0, %v4083
    %v4085 = vpop.f32.mrf.mxu0
    %4086 = vmatprep.mubr.f32.mxu0 %v4006
    %4087 = vmatmul.mubr.f32.gmra.mxu0 %v4004
    %v4088 = vpop.f32.mrf.mxu0
    %v4089 = vadd.f32 0.0, %v4088
    %v4090 = vpop.f32.mrf.mxu0
    %4091 = vdwg.mxu0
    %4092 = vrot.lane.b32.xlu0 %v3510, 96
    %v4093 = vpop.permute.xlu0 %4092
    %4094 = vrot.lane.b32.xlu0 %v3511, 96
    %v4095 = vpop.permute.xlu0 %4094
    %4096 = vrot.lane.b32.xlu0 %v3512, 96
    %v4097 = vpop.permute.xlu0 %4096
    %4098 = vrot.lane.b32.xlu0 %v3513, 96
    %v4099 = vpop.permute.xlu0 %4098
    %4100 = vrot.lane.b32.xlu0 %v3514, 96
    %v4101 = vpop.permute.xlu0 %4100
    %4102 = vrot.lane.b32.xlu0 %v3515, 96
    %v4103 = vpop.permute.xlu0 %4102
    %4104 = vrot.lane.b32.xlu0 %v3516, 96
    %v4105 = vpop.permute.xlu0 %4104
    %4106 = vrot.lane.b32.xlu0 %v3517, 96
    %v4107 = vpop.permute.xlu0 %4106
    %4108 = vrot.lane.b32.xlu0 %v3518, 96
    %v4109 = vpop.permute.xlu0 %4108
    %4110 = vrot.lane.b32.xlu0 %v3519, 96
    %v4111 = vpop.permute.xlu0 %4110
    %4112 = vrot.lane.b32.xlu0 %v3520, 96
    %v4113 = vpop.permute.xlu0 %4112
    %4114 = vrot.lane.b32.xlu0 %v3521, 96
    %v4115 = vpop.permute.xlu0 %4114
    %4116 = vrot.lane.b32.xlu0 %v3522, 96
    %v4117 = vpop.permute.xlu0 %4116
    %4118 = vrot.lane.b32.xlu0 %v3523, 96
    %v4119 = vpop.permute.xlu0 %4118
    %4120 = vrot.lane.b32.xlu0 %v3524, 96
    %v4121 = vpop.permute.xlu0 %4120
    %4122 = vrot.lane.b32.xlu0 %v3525, 96
    %v4123 = vpop.permute.xlu0 %4122
    %4124 = vrot.lane.b32.xlu0 %v3526, 96
    %v4125 = vpop.permute.xlu0 %4124
    %4126 = vrot.lane.b32.xlu0 %v3527, 96
    %v4127 = vpop.permute.xlu0 %4126
    %4128 = vrot.lane.b32.xlu0 %v3528, 96
    %v4129 = vpop.permute.xlu0 %4128
    %4130 = vrot.lane.b32.xlu0 %v3529, 96
    %v4131 = vpop.permute.xlu0 %4130
    %4132 = vrot.lane.b32.xlu0 %v3530, 96
    %v4133 = vpop.permute.xlu0 %4132
    %4134 = vrot.lane.b32.xlu0 %v3531, 96
    %v4135 = vpop.permute.xlu0 %4134
    %4136 = vrot.lane.b32.xlu0 %v3532, 96
    %v4137 = vpop.permute.xlu0 %4136
    %4138 = vrot.lane.b32.xlu0 %v3533, 96
    %v4139 = vpop.permute.xlu0 %4138
    %4140 = vrot.lane.b32.xlu0 %v3534, 96
    %v4141 = vpop.permute.xlu0 %4140
    %4142 = vrot.lane.b32.xlu0 %v3535, 96
    %v4143 = vpop.permute.xlu0 %4142
    %4144 = vrot.lane.b32.xlu0 %v3536, 96
    %v4145 = vpop.permute.xlu0 %4144
    %4146 = vrot.lane.b32.xlu0 %v3537, 96
    %v4147 = vpop.permute.xlu0 %4146
    %4148 = vrot.lane.b32.xlu0 %v3538, 96
    %v4149 = vpop.permute.xlu0 %4148
    %4150 = vrot.lane.b32.xlu0 %v3539, 96
    %v4151 = vpop.permute.xlu0 %4150
    %4152 = vrot.lane.b32.xlu0 %v3540, 96
    %v4153 = vpop.permute.xlu0 %4152
    %4154 = vrot.lane.b32.xlu0 %v3541, 96
    %v4155 = vpop.permute.xlu0 %4154
    %v4188 = vmul.f32 %v3464, %v4093
    %v4189 = vmul.f32 %v3466, %v4093
    %v4190 = vmul.f32 %v3470, %v4095
    %v4191 = vmul.f32 %v3472, %v4095
    %v4192 = vmul.f32 %v3476, %v4097
    %v4193 = vmul.f32 %v3478, %v4097
    %v4194 = vmul.f32 %v3482, %v4099
    %v4195 = vmul.f32 %v3484, %v4099
    %v4196 = vmul.f32 %v3464, %v4101
    %v4197 = vmul.f32 %v3466, %v4101
    %v4198 = vmul.f32 %v3470, %v4103
    %v4199 = vmul.f32 %v3472, %v4103
    %v4200 = vmul.f32 %v3476, %v4105
    %v4201 = vmul.f32 %v3478, %v4105
    %v4202 = vmul.f32 %v3482, %v4107
    %v4203 = vmul.f32 %v3484, %v4107
    %v4204 = vmul.f32 %v3464, %v4109
    %v4205 = vmul.f32 %v3466, %v4109
    %v4206 = vmul.f32 %v3470, %v4111
    %v4207 = vmul.f32 %v3472, %v4111
    %v4208 = vmul.f32 %v3476, %v4113
    %v4209 = vmul.f32 %v3478, %v4113
    %v4210 = vmul.f32 %v3482, %v4115
    %v4211 = vmul.f32 %v3484, %v4115
    %v4212 = vmul.f32 %v3464, %v4117
    %v4213 = vmul.f32 %v3466, %v4117
    %v4214 = vmul.f32 %v3470, %v4119
    %v4215 = vmul.f32 %v3472, %v4119
    %v4216 = vmul.f32 %v3476, %v4121
    %v4217 = vmul.f32 %v3478, %v4121
    %v4218 = vmul.f32 %v3482, %v4123
    %v4219 = vmul.f32 %v3484, %v4123
    %v4220 = vmul.f32 %v3464, %v4125
    %v4221 = vmul.f32 %v3466, %v4125
    %v4222 = vmul.f32 %v3470, %v4127
    %v4223 = vmul.f32 %v3472, %v4127
    %v4224 = vmul.f32 %v3476, %v4129
    %v4225 = vmul.f32 %v3478, %v4129
    %v4226 = vmul.f32 %v3482, %v4131
    %v4227 = vmul.f32 %v3484, %v4131
    %v4228 = vmul.f32 %v3464, %v4133
    %v4229 = vmul.f32 %v3466, %v4133
    %v4230 = vmul.f32 %v3470, %v4135
    %v4231 = vmul.f32 %v3472, %v4135
    %v4232 = vmul.f32 %v3476, %v4137
    %v4233 = vmul.f32 %v3478, %v4137
    %v4234 = vmul.f32 %v3482, %v4139
    %v4235 = vmul.f32 %v3484, %v4139
    %v4236 = vmul.f32 %v3464, %v4141
    %v4237 = vmul.f32 %v3466, %v4141
    %v4238 = vmul.f32 %v3470, %v4143
    %v4239 = vmul.f32 %v3472, %v4143
    %v4240 = vmul.f32 %v3476, %v4145
    %v4241 = vmul.f32 %v3478, %v4145
    %v4242 = vmul.f32 %v3482, %v4147
    %v4243 = vmul.f32 %v3484, %v4147
    %v4244 = vmul.f32 %v3464, %v4149
    %v4245 = vmul.f32 %v3466, %v4149
    %v4246 = vmul.f32 %v3470, %v4151
    %v4247 = vmul.f32 %v3472, %v4151
    %v4248 = vmul.f32 %v3476, %v4153
    %v4249 = vmul.f32 %v3478, %v4153
    %v4250 = vmul.f32 %v3482, %v4155
    %v4251 = vmul.f32 %v3484, %v4155
    %4316 = vrot.lane.b32.xlu0 %v4188, 32
    %v4317 = vpop.permute.xlu0 %4316
    %4318 = vrot.lane.b32.xlu0 %v4189, 32
    %v4319 = vpop.permute.xlu0 %4318
    %4320 = vrot.lane.b32.xlu0 %v4190, 32
    %v4321 = vpop.permute.xlu0 %4320
    %4322 = vrot.lane.b32.xlu0 %v4191, 32
    %v4323 = vpop.permute.xlu0 %4322
    %4324 = vrot.lane.b32.xlu0 %v4192, 32
    %v4325 = vpop.permute.xlu0 %4324
    %4326 = vrot.lane.b32.xlu0 %v4193, 32
    %v4327 = vpop.permute.xlu0 %4326
    %4328 = vrot.lane.b32.xlu0 %v4194, 32
    %v4329 = vpop.permute.xlu0 %4328
    %4330 = vrot.lane.b32.xlu0 %v4195, 32
    %v4331 = vpop.permute.xlu0 %4330
    %4332 = vrot.lane.b32.xlu0 %v4196, 32
    %v4333 = vpop.permute.xlu0 %4332
    %4334 = vrot.lane.b32.xlu0 %v4197, 32
    %v4335 = vpop.permute.xlu0 %4334
    %4336 = vrot.lane.b32.xlu0 %v4198, 32
    %v4337 = vpop.permute.xlu0 %4336
    %4338 = vrot.lane.b32.xlu0 %v4199, 32
    %v4339 = vpop.permute.xlu0 %4338
    %4340 = vrot.lane.b32.xlu0 %v4200, 32
    %v4341 = vpop.permute.xlu0 %4340
    %4342 = vrot.lane.b32.xlu0 %v4201, 32
    %v4343 = vpop.permute.xlu0 %4342
    %4344 = vrot.lane.b32.xlu0 %v4202, 32
    %v4345 = vpop.permute.xlu0 %4344
    %4346 = vrot.lane.b32.xlu0 %v4203, 32
    %v4347 = vpop.permute.xlu0 %4346
    %4348 = vrot.lane.b32.xlu0 %v4204, 32
    %v4349 = vpop.permute.xlu0 %4348
    %4350 = vrot.lane.b32.xlu0 %v4205, 32
    %v4351 = vpop.permute.xlu0 %4350
    %4352 = vrot.lane.b32.xlu0 %v4206, 32
    %v4353 = vpop.permute.xlu0 %4352
    %4354 = vrot.lane.b32.xlu0 %v4207, 32
    %v4355 = vpop.permute.xlu0 %4354
    %4356 = vrot.lane.b32.xlu0 %v4208, 32
    %v4357 = vpop.permute.xlu0 %4356
    %4358 = vrot.lane.b32.xlu0 %v4209, 32
    %v4359 = vpop.permute.xlu0 %4358
    %4360 = vrot.lane.b32.xlu0 %v4210, 32
    %v4361 = vpop.permute.xlu0 %4360
    %4362 = vrot.lane.b32.xlu0 %v4211, 32
    %v4363 = vpop.permute.xlu0 %4362
    %4364 = vrot.lane.b32.xlu0 %v4212, 32
    %v4365 = vpop.permute.xlu0 %4364
    %4366 = vrot.lane.b32.xlu0 %v4213, 32
    %v4367 = vpop.permute.xlu0 %4366
    %4368 = vrot.lane.b32.xlu0 %v4214, 32
    %v4369 = vpop.permute.xlu0 %4368
    %4370 = vrot.lane.b32.xlu0 %v4215, 32
    %v4371 = vpop.permute.xlu0 %4370
    %4372 = vrot.lane.b32.xlu0 %v4216, 32
    %v4373 = vpop.permute.xlu0 %4372
    %4374 = vrot.lane.b32.xlu0 %v4217, 32
    %v4375 = vpop.permute.xlu0 %4374
    %4376 = vrot.lane.b32.xlu0 %v4218, 32
    %v4377 = vpop.permute.xlu0 %4376
    %4378 = vrot.lane.b32.xlu0 %v4219, 32
    %v4379 = vpop.permute.xlu0 %4378
    %4380 = vrot.lane.b32.xlu0 %v4220, 32
    %v4381 = vpop.permute.xlu0 %4380
    %4382 = vrot.lane.b32.xlu0 %v4221, 32
    %v4383 = vpop.permute.xlu0 %4382
    %4384 = vrot.lane.b32.xlu0 %v4222, 32
    %v4385 = vpop.permute.xlu0 %4384
    %4386 = vrot.lane.b32.xlu0 %v4223, 32
    %v4387 = vpop.permute.xlu0 %4386
    %4388 = vrot.lane.b32.xlu0 %v4224, 32
    %v4389 = vpop.permute.xlu0 %4388
    %4390 = vrot.lane.b32.xlu0 %v4225, 32
    %v4391 = vpop.permute.xlu0 %4390
    %4392 = vrot.lane.b32.xlu0 %v4226, 32
    %v4393 = vpop.permute.xlu0 %4392
    %4394 = vrot.lane.b32.xlu0 %v4227, 32
    %v4395 = vpop.permute.xlu0 %4394
    %4396 = vrot.lane.b32.xlu0 %v4228, 32
    %v4397 = vpop.permute.xlu0 %4396
    %4398 = vrot.lane.b32.xlu0 %v4229, 32
    %v4399 = vpop.permute.xlu0 %4398
    %4400 = vrot.lane.b32.xlu0 %v4230, 32
    %v4401 = vpop.permute.xlu0 %4400
    %4402 = vrot.lane.b32.xlu0 %v4231, 32
    %v4403 = vpop.permute.xlu0 %4402
    %4404 = vrot.lane.b32.xlu0 %v4232, 32
    %v4405 = vpop.permute.xlu0 %4404
    %4406 = vrot.lane.b32.xlu0 %v4233, 32
    %v4407 = vpop.permute.xlu0 %4406
    %4408 = vrot.lane.b32.xlu0 %v4234, 32
    %v4409 = vpop.permute.xlu0 %4408
    %4410 = vrot.lane.b32.xlu0 %v4235, 32
    %v4411 = vpop.permute.xlu0 %4410
    %4412 = vrot.lane.b32.xlu0 %v4236, 32
    %v4413 = vpop.permute.xlu0 %4412
    %4414 = vrot.lane.b32.xlu0 %v4237, 32
    %v4415 = vpop.permute.xlu0 %4414
    %4416 = vrot.lane.b32.xlu0 %v4238, 32
    %v4417 = vpop.permute.xlu0 %4416
    %4418 = vrot.lane.b32.xlu0 %v4239, 32
    %v4419 = vpop.permute.xlu0 %4418
    %4420 = vrot.lane.b32.xlu0 %v4240, 32
    %v4421 = vpop.permute.xlu0 %4420
    %4422 = vrot.lane.b32.xlu0 %v4241, 32
    %v4423 = vpop.permute.xlu0 %4422
    %4424 = vrot.lane.b32.xlu0 %v4242, 32
    %v4425 = vpop.permute.xlu0 %4424
    %4426 = vrot.lane.b32.xlu0 %v4243, 32
    %v4427 = vpop.permute.xlu0 %4426
    %4428 = vrot.lane.b32.xlu0 %v4244, 32
    %v4429 = vpop.permute.xlu0 %4428
    %4430 = vrot.lane.b32.xlu0 %v4245, 32
    %v4431 = vpop.permute.xlu0 %4430
    %4432 = vrot.lane.b32.xlu0 %v4246, 32
    %v4433 = vpop.permute.xlu0 %4432
    %4434 = vrot.lane.b32.xlu0 %v4247, 32
    %v4435 = vpop.permute.xlu0 %4434
    %4436 = vrot.lane.b32.xlu0 %v4248, 32
    %v4437 = vpop.permute.xlu0 %4436
    %4438 = vrot.lane.b32.xlu0 %v4249, 32
    %v4439 = vpop.permute.xlu0 %4438
    %4440 = vrot.lane.b32.xlu0 %v4250, 32
    %v4441 = vpop.permute.xlu0 %4440
    %4442 = vrot.lane.b32.xlu0 %v4251, 32
    %v4443 = vpop.permute.xlu0 %4442
    %vm4444 = vcmask 261120
    %v4445 = vsel %vm4444, %v4317, %v4319
    %v4446 = vsel %vm4444, %v4321, %v4323
    %v4447 = vsel %vm4444, %v4325, %v4327
    %v4448 = vsel %vm4444, %v4329, %v4331
    %v4449 = vsel %vm4444, %v4333, %v4335
    %v4450 = vsel %vm4444, %v4337, %v4339
    %v4451 = vsel %vm4444, %v4341, %v4343
    %v4452 = vsel %vm4444, %v4345, %v4347
    %v4453 = vsel %vm4444, %v4349, %v4351
    %v4454 = vsel %vm4444, %v4353, %v4355
    %v4455 = vsel %vm4444, %v4357, %v4359
    %v4456 = vsel %vm4444, %v4361, %v4363
    %v4457 = vsel %vm4444, %v4365, %v4367
    %v4458 = vsel %vm4444, %v4369, %v4371
    %v4459 = vsel %vm4444, %v4373, %v4375
    %v4460 = vsel %vm4444, %v4377, %v4379
    %v4461 = vsel %vm4444, %v4381, %v4383
    %v4462 = vsel %vm4444, %v4385, %v4387
    %v4463 = vsel %vm4444, %v4389, %v4391
    %v4464 = vsel %vm4444, %v4393, %v4395
    %v4465 = vsel %vm4444, %v4397, %v4399
    %v4466 = vsel %vm4444, %v4401, %v4403
    %v4467 = vsel %vm4444, %v4405, %v4407
    %v4468 = vsel %vm4444, %v4409, %v4411
    %v4469 = vsel %vm4444, %v4413, %v4415
    %v4470 = vsel %vm4444, %v4417, %v4419
    %v4471 = vsel %vm4444, %v4421, %v4423
    %v4472 = vsel %vm4444, %v4425, %v4427
    %v4473 = vsel %vm4444, %v4429, %v4431
    %v4474 = vsel %vm4444, %v4433, %v4435
    %v4475 = vsel %vm4444, %v4437, %v4439
    %v4476 = vsel %vm4444, %v4441, %v4443
    %4509 = vmatprep.subr.mxu0 0.0
    %4510 = vmatpush1.msra.mxu0 %v4460
    %4511 = vmatprep.subr.mxu0 0.0
    %4512 = vmatpush1.msra.mxu0 %v4459
    %4513 = vmatprep.subr.mxu0 0.0
    %4514 = vmatpush1.msra.mxu0 %v4458
    %4515 = vmatprep.subr.mxu0 0.0
    %4516 = vmatpush1.msra.mxu0 %v4457
    %4517 = vmatprep.subr.mxu0 0.0
    %4518 = vmatpush1.msra.mxu0 %v4456
    %4519 = vmatprep.subr.mxu0 0.0
    %4520 = vmatpush1.msra.mxu0 %v4455
    %4521 = vmatprep.subr.mxu0 0.0
    %4522 = vmatpush1.msra.mxu0 %v4454
    %4523 = vmatprep.subr.mxu0 0.0
    %4524 = vmatpush1.msra.mxu0 %v4453
    %4525 = vmatprep.subr.mxu0 0.0
    %4526 = vmatpush1.msra.mxu0 %v4452
    %4527 = vmatprep.subr.mxu0 0.0
    %4528 = vmatpush1.msra.mxu0 %v4451
    %4529 = vmatprep.subr.mxu0 0.0
    %4530 = vmatpush1.msra.mxu0 %v4450
    %4531 = vmatprep.subr.mxu0 0.0
    %4532 = vmatpush1.msra.mxu0 %v4449
    %4533 = vmatprep.subr.mxu0 0.0
    %4534 = vmatpush1.msra.mxu0 %v4448
    %4535 = vmatprep.subr.mxu0 0.0
    %4536 = vmatpush1.msra.mxu0 %v4447
    %4537 = vmatprep.subr.mxu0 0.0
    %4538 = vmatpush1.msra.mxu0 %v4446
    %4539 = vmatprep.subr.mxu0 0.0
    %4540 = vmatpush1.msra.mxu0 %v4445
    %4541 = vmatprep.subr.mxu0 0.0
    %4542 = vmatpush2.msra.mxu0 %v4476
    %4543 = vmatprep.subr.mxu0 0.0
    %4544 = vmatpush2.msra.mxu0 %v4475
    %4545 = vmatprep.subr.mxu0 0.0
    %4546 = vmatpush2.msra.mxu0 %v4474
    %4547 = vmatprep.subr.mxu0 0.0
    %4548 = vmatpush2.msra.mxu0 %v4473
    %4549 = vmatprep.subr.mxu0 0.0
    %4550 = vmatpush2.msra.mxu0 %v4472
    %4551 = vmatprep.subr.mxu0 0.0
    %4552 = vmatpush2.msra.mxu0 %v4471
    %4553 = vmatprep.subr.mxu0 0.0
    %4554 = vmatpush2.msra.mxu0 %v4470
    %4555 = vmatprep.subr.mxu0 0.0
    %4556 = vmatpush2.msra.mxu0 %v4469
    %4557 = vmatprep.subr.mxu0 0.0
    %4558 = vmatpush2.msra.mxu0 %v4468
    %4559 = vmatprep.subr.mxu0 0.0
    %4560 = vmatpush2.msra.mxu0 %v4467
    %4561 = vmatprep.subr.mxu0 0.0
    %4562 = vmatpush2.msra.mxu0 %v4466
    %4563 = vmatprep.subr.mxu0 0.0
    %4564 = vmatpush2.msra.mxu0 %v4465
    %4565 = vmatprep.subr.mxu0 0.0
    %4566 = vmatpush2.msra.mxu0 %v4464
    %4567 = vmatprep.subr.mxu0 0.0
    %4568 = vmatpush2.msra.mxu0 %v4463
    %4569 = vmatprep.subr.mxu0 0.0
    %4570 = vmatpush2.msra.mxu0 %v4462
    %4571 = vmatprep.subr.mxu0 0.0
    %4572 = vmatpush2.msra.mxu0 %v4461
    %4573 = vmatprep.mubr.f32.mxu0 %v3994
    %4574 = vmatmul.mubr.f32.gmra.mxu0 %v3992
    %v4575 = vpop.f32.mrf.mxu0
    %v4576 = vadd.f32 0.0, %v4575
    %v4577 = vpop.f32.mrf.mxu0
    %4578 = vmatprep.mubr.f32.mxu0 %v3998
    %4579 = vmatmul.mubr.f32.gmra.mxu0 %v3996
    %v4580 = vpop.f32.mrf.mxu0
    %v4581 = vadd.f32 0.0, %v4580
    %v4582 = vpop.f32.mrf.mxu0
    %4583 = vmatprep.mubr.f32.mxu0 %v4002
    %4584 = vmatmul.mubr.f32.gmra.mxu0 %v4000
    %v4585 = vpop.f32.mrf.mxu0
    %v4586 = vadd.f32 0.0, %v4585
    %v4587 = vpop.f32.mrf.mxu0
    %4588 = vmatprep.mubr.f32.mxu0 %v4006
    %4589 = vmatmul.mubr.f32.gmra.mxu0 %v4004
    %v4590 = vpop.f32.mrf.mxu0
    %v4591 = vadd.f32 0.0, %v4590
    %v4592 = vpop.f32.mrf.mxu0
    %4593 = vdwg.mxu0
    %v4594 = vmax.f32 %v4074, 1e-30
    %v4595 = vmax.f32 %v4079, 1e-30
    %v4596 = vmax.f32 %v4084, 1e-30
    %v4597 = vmax.f32 %v4089, 1e-30
    %v4598 = vrcp.pop %v4594
    %v4599 = vrcp.pop %v4595
    %v4600 = vrcp.pop %v4596
    %v4601 = vrcp.pop %v4597
    %v4602 = vmul.f32 %v4576, %v4598
    %v4603 = vmul.f32 %v4581, %v4599
    %v4604 = vmul.f32 %v4586, %v4600
    %v4605 = vmul.f32 %v4591, %v4601
    %v4606 = vld [vmem:[%s16] sm:$0xff]
    %v4607 = vld [vmem:[%s16 + $0x8] sm:$0xff]
    %v4608 = vld [vmem:[%s16 + $0x10] sm:$0xff]
    %v4609 = vld [vmem:[%s16 + $0x18] sm:$0xff]
    %v4610 = vld [vmem:[%s16 + $0x20] sm:$0xff]
    %v4611 = vld [vmem:[%s16 + $0x28] sm:$0xff]
    %v4612 = vld [vmem:[%s16 + $0x30] sm:$0xff]
    %v4613 = vld [vmem:[%s16 + $0x38] sm:$0xff]
    %v4614 = vld [vmem:[%s16 + $0x40] sm:$0xff]
    %v4615 = vld [vmem:[%s16 + $0x48] sm:$0xff]
    %v4616 = vld [vmem:[%s16 + $0x50] sm:$0xff]
    %v4617 = vld [vmem:[%s16 + $0x58] sm:$0xff]
    %v4618 = vld [vmem:[%s16 + $0x60] sm:$0xff]
    %v4619 = vld [vmem:[%s16 + $0x68] sm:$0xff]
    %v4620 = vld [vmem:[%s16 + $0x70] sm:$0xff]
    %v4621 = vld [vmem:[%s16 + $0x78] sm:$0xff]
    %v4622 = vld [vmem:[%s16 + $0x80] sm:$0xff]
    %v4623 = vld [vmem:[%s16 + $0x88] sm:$0xff]
    %v4624 = vld [vmem:[%s16 + $0x90] sm:$0xff]
    %v4625 = vld [vmem:[%s16 + $0x98] sm:$0xff]
    %v4626 = vld [vmem:[%s16 + $0xa0] sm:$0xff]
    %v4627 = vld [vmem:[%s16 + $0xa8] sm:$0xff]
    %v4628 = vld [vmem:[%s16 + $0xb0] sm:$0xff]
    %v4629 = vld [vmem:[%s16 + $0xb8] sm:$0xff]
    %v4630 = vld [vmem:[%s16 + $0xc0] sm:$0xff]
    %v4631 = vld [vmem:[%s16 + $0xc8] sm:$0xff]
    %v4632 = vld [vmem:[%s16 + $0xd0] sm:$0xff]
    %v4633 = vld [vmem:[%s16 + $0xd8] sm:$0xff]
    %v4634 = vld [vmem:[%s16 + $0xe0] sm:$0xff]
    %v4635 = vld [vmem:[%s16 + $0xe8] sm:$0xff]
    %v4636 = vld [vmem:[%s16 + $0xf0] sm:$0xff]
    %v4637 = vld [vmem:[%s16 + $0xf8] sm:$0xff]
    %4670 = vrot.lane.b32.xlu0 %v4606, 48
    %v4671 = vpop.permute.xlu0 %4670
    %4672 = vrot.lane.b32.xlu0 %v4607, 48
    %v4673 = vpop.permute.xlu0 %4672
    %4674 = vrot.lane.b32.xlu0 %v4608, 48
    %v4675 = vpop.permute.xlu0 %4674
    %4676 = vrot.lane.b32.xlu0 %v4609, 48
    %v4677 = vpop.permute.xlu0 %4676
    %4678 = vrot.lane.b32.xlu0 %v4610, 48
    %v4679 = vpop.permute.xlu0 %4678
    %4680 = vrot.lane.b32.xlu0 %v4611, 48
    %v4681 = vpop.permute.xlu0 %4680
    %4682 = vrot.lane.b32.xlu0 %v4612, 48
    %v4683 = vpop.permute.xlu0 %4682
    %4684 = vrot.lane.b32.xlu0 %v4613, 48
    %v4685 = vpop.permute.xlu0 %4684
    %4686 = vrot.lane.b32.xlu0 %v4614, 48
    %v4687 = vpop.permute.xlu0 %4686
    %4688 = vrot.lane.b32.xlu0 %v4615, 48
    %v4689 = vpop.permute.xlu0 %4688
    %4690 = vrot.lane.b32.xlu0 %v4616, 48
    %v4691 = vpop.permute.xlu0 %4690
    %4692 = vrot.lane.b32.xlu0 %v4617, 48
    %v4693 = vpop.permute.xlu0 %4692
    %4694 = vrot.lane.b32.xlu0 %v4618, 48
    %v4695 = vpop.permute.xlu0 %4694
    %4696 = vrot.lane.b32.xlu0 %v4619, 48
    %v4697 = vpop.permute.xlu0 %4696
    %4698 = vrot.lane.b32.xlu0 %v4620, 48
    %v4699 = vpop.permute.xlu0 %4698
    %4700 = vrot.lane.b32.xlu0 %v4621, 48
    %v4701 = vpop.permute.xlu0 %4700
    %4702 = vrot.lane.b32.xlu0 %v4622, 48
    %v4703 = vpop.permute.xlu0 %4702
    %4704 = vrot.lane.b32.xlu0 %v4623, 48
    %v4705 = vpop.permute.xlu0 %4704
    %4706 = vrot.lane.b32.xlu0 %v4624, 48
    %v4707 = vpop.permute.xlu0 %4706
    %4708 = vrot.lane.b32.xlu0 %v4625, 48
    %v4709 = vpop.permute.xlu0 %4708
    %4710 = vrot.lane.b32.xlu0 %v4626, 48
    %v4711 = vpop.permute.xlu0 %4710
    %4712 = vrot.lane.b32.xlu0 %v4627, 48
    %v4713 = vpop.permute.xlu0 %4712
    %4714 = vrot.lane.b32.xlu0 %v4628, 48
    %v4715 = vpop.permute.xlu0 %4714
    %4716 = vrot.lane.b32.xlu0 %v4629, 48
    %v4717 = vpop.permute.xlu0 %4716
    %4718 = vrot.lane.b32.xlu0 %v4630, 48
    %v4719 = vpop.permute.xlu0 %4718
    %4720 = vrot.lane.b32.xlu0 %v4631, 48
    %v4721 = vpop.permute.xlu0 %4720
    %4722 = vrot.lane.b32.xlu0 %v4632, 48
    %v4723 = vpop.permute.xlu0 %4722
    %4724 = vrot.lane.b32.xlu0 %v4633, 48
    %v4725 = vpop.permute.xlu0 %4724
    %4726 = vrot.lane.b32.xlu0 %v4634, 48
    %v4727 = vpop.permute.xlu0 %4726
    %4728 = vrot.lane.b32.xlu0 %v4635, 48
    %v4729 = vpop.permute.xlu0 %4728
    %4730 = vrot.lane.b32.xlu0 %v4636, 48
    %v4731 = vpop.permute.xlu0 %4730
    %4732 = vrot.lane.b32.xlu0 %v4637, 48
    %v4733 = vpop.permute.xlu0 %4732
    %v4766 = vmul.f32 %v3488, %v4671
    %v4767 = vmul.f32 %v3494, %v4673
    %v4768 = vmul.f32 %v3500, %v4675
    %v4769 = vmul.f32 %v3506, %v4677
    %v4770 = vmul.f32 %v3488, %v4679
    %v4771 = vmul.f32 %v3494, %v4681
    %v4772 = vmul.f32 %v3500, %v4683
    %v4773 = vmul.f32 %v3506, %v4685
    %v4774 = vmul.f32 %v3488, %v4687
    %v4775 = vmul.f32 %v3494, %v4689
    %v4776 = vmul.f32 %v3500, %v4691
    %v4777 = vmul.f32 %v3506, %v4693
    %v4778 = vmul.f32 %v3488, %v4695
    %v4779 = vmul.f32 %v3494, %v4697
    %v4780 = vmul.f32 %v3500, %v4699
    %v4781 = vmul.f32 %v3506, %v4701
    %v4782 = vmul.f32 %v3488, %v4703
    %v4783 = vmul.f32 %v3494, %v4705
    %v4784 = vmul.f32 %v3500, %v4707
    %v4785 = vmul.f32 %v3506, %v4709
    %v4786 = vmul.f32 %v3488, %v4711
    %v4787 = vmul.f32 %v3494, %v4713
    %v4788 = vmul.f32 %v3500, %v4715
    %v4789 = vmul.f32 %v3506, %v4717
    %v4790 = vmul.f32 %v3488, %v4719
    %v4791 = vmul.f32 %v3494, %v4721
    %v4792 = vmul.f32 %v3500, %v4723
    %v4793 = vmul.f32 %v3506, %v4725
    %v4794 = vmul.f32 %v3488, %v4727
    %v4795 = vmul.f32 %v3494, %v4729
    %v4796 = vmul.f32 %v3500, %v4731
    %v4797 = vmul.f32 %v3506, %v4733
    %4830 = vrot.lane.b32.xlu0 %v4766, 80
    %v4831 = vpop.permute.xlu0 %4830
    %4832 = vrot.lane.b32.xlu0 %v4767, 80
    %v4833 = vpop.permute.xlu0 %4832
    %4834 = vrot.lane.b32.xlu0 %v4768, 80
    %v4835 = vpop.permute.xlu0 %4834
    %4836 = vrot.lane.b32.xlu0 %v4769, 80
    %v4837 = vpop.permute.xlu0 %4836
    %4838 = vrot.lane.b32.xlu0 %v4770, 80
    %v4839 = vpop.permute.xlu0 %4838
    %4840 = vrot.lane.b32.xlu0 %v4771, 80
    %v4841 = vpop.permute.xlu0 %4840
    %4842 = vrot.lane.b32.xlu0 %v4772, 80
    %v4843 = vpop.permute.xlu0 %4842
    %4844 = vrot.lane.b32.xlu0 %v4773, 80
    %v4845 = vpop.permute.xlu0 %4844
    %4846 = vrot.lane.b32.xlu0 %v4774, 80
    %v4847 = vpop.permute.xlu0 %4846
    %4848 = vrot.lane.b32.xlu0 %v4775, 80
    %v4849 = vpop.permute.xlu0 %4848
    %4850 = vrot.lane.b32.xlu0 %v4776, 80
    %v4851 = vpop.permute.xlu0 %4850
    %4852 = vrot.lane.b32.xlu0 %v4777, 80
    %v4853 = vpop.permute.xlu0 %4852
    %4854 = vrot.lane.b32.xlu0 %v4778, 80
    %v4855 = vpop.permute.xlu0 %4854
    %4856 = vrot.lane.b32.xlu0 %v4779, 80
    %v4857 = vpop.permute.xlu0 %4856
    %4858 = vrot.lane.b32.xlu0 %v4780, 80
    %v4859 = vpop.permute.xlu0 %4858
    %4860 = vrot.lane.b32.xlu0 %v4781, 80
    %v4861 = vpop.permute.xlu0 %4860
    %4862 = vrot.lane.b32.xlu0 %v4782, 80
    %v4863 = vpop.permute.xlu0 %4862
    %4864 = vrot.lane.b32.xlu0 %v4783, 80
    %v4865 = vpop.permute.xlu0 %4864
    %4866 = vrot.lane.b32.xlu0 %v4784, 80
    %v4867 = vpop.permute.xlu0 %4866
    %4868 = vrot.lane.b32.xlu0 %v4785, 80
    %v4869 = vpop.permute.xlu0 %4868
    %4870 = vrot.lane.b32.xlu0 %v4786, 80
    %v4871 = vpop.permute.xlu0 %4870
    %4872 = vrot.lane.b32.xlu0 %v4787, 80
    %v4873 = vpop.permute.xlu0 %4872
    %4874 = vrot.lane.b32.xlu0 %v4788, 80
    %v4875 = vpop.permute.xlu0 %4874
    %4876 = vrot.lane.b32.xlu0 %v4789, 80
    %v4877 = vpop.permute.xlu0 %4876
    %4878 = vrot.lane.b32.xlu0 %v4790, 80
    %v4879 = vpop.permute.xlu0 %4878
    %4880 = vrot.lane.b32.xlu0 %v4791, 80
    %v4881 = vpop.permute.xlu0 %4880
    %4882 = vrot.lane.b32.xlu0 %v4792, 80
    %v4883 = vpop.permute.xlu0 %4882
    %4884 = vrot.lane.b32.xlu0 %v4793, 80
    %v4885 = vpop.permute.xlu0 %4884
    %4886 = vrot.lane.b32.xlu0 %v4794, 80
    %v4887 = vpop.permute.xlu0 %4886
    %4888 = vrot.lane.b32.xlu0 %v4795, 80
    %v4889 = vpop.permute.xlu0 %4888
    %4890 = vrot.lane.b32.xlu0 %v4796, 80
    %v4891 = vpop.permute.xlu0 %4890
    %4892 = vrot.lane.b32.xlu0 %v4797, 80
    %v4893 = vpop.permute.xlu0 %4892
    %v4895 = vsel %vm183, %v3488, 0
    %v4898 = vsel %vm183, %v3494, 0
    %v4901 = vsel %vm183, %v3500, 0
    %v4904 = vsel %vm183, %v3506, 0
    %v4906 = vsel %vm183, %v4831, 0
    %v4908 = vsel %vm183, %v4833, 0
    %v4910 = vsel %vm183, %v4835, 0
    %v4912 = vsel %vm183, %v4837, 0
    %v4914 = vsel %vm183, %v4839, 0
    %v4916 = vsel %vm183, %v4841, 0
    %v4918 = vsel %vm183, %v4843, 0
    %v4920 = vsel %vm183, %v4845, 0
    %v4922 = vsel %vm183, %v4847, 0
    %v4924 = vsel %vm183, %v4849, 0
    %v4926 = vsel %vm183, %v4851, 0
    %v4928 = vsel %vm183, %v4853, 0
    %v4930 = vsel %vm183, %v4855, 0
    %v4932 = vsel %vm183, %v4857, 0
    %v4934 = vsel %vm183, %v4859, 0
    %v4936 = vsel %vm183, %v4861, 0
    %v4938 = vsel %vm183, %v4863, 0
    %v4940 = vsel %vm183, %v4865, 0
    %v4942 = vsel %vm183, %v4867, 0
    %v4944 = vsel %vm183, %v4869, 0
    %v4946 = vsel %vm183, %v4871, 0
    %v4948 = vsel %vm183, %v4873, 0
    %v4950 = vsel %vm183, %v4875, 0
    %v4952 = vsel %vm183, %v4877, 0
    %v4954 = vsel %vm183, %v4879, 0
    %v4956 = vsel %vm183, %v4881, 0
    %v4958 = vsel %vm183, %v4883, 0
    %v4960 = vsel %vm183, %v4885, 0
    %v4962 = vsel %vm183, %v4887, 0
    %v4964 = vsel %vm183, %v4889, 0
    %v4966 = vsel %vm183, %v4891, 0
    %v4968 = vsel %vm183, %v4893, 0
    %4970 = vmatprep.subr.mxu0 0.0
    %4971 = vmatpush1.xpose.msra.mxu0 %v4936
    %4972 = vmatprep.subr.mxu0 0.0
    %4973 = vmatpush1.xpose.msra.mxu0 %v4934
    %4974 = vmatprep.subr.mxu0 0.0
    %4975 = vmatpush1.xpose.msra.mxu0 %v4932
    %4976 = vmatprep.subr.mxu0 0.0
    %4977 = vmatpush1.xpose.msra.mxu0 %v4930
    %4978 = vmatprep.subr.mxu0 0.0
    %4979 = vmatpush1.xpose.msra.mxu0 %v4928
    %4980 = vmatprep.subr.mxu0 0.0
    %4981 = vmatpush1.xpose.msra.mxu0 %v4926
    %4982 = vmatprep.subr.mxu0 0.0
    %4983 = vmatpush1.xpose.msra.mxu0 %v4924
    %4984 = vmatprep.subr.mxu0 0.0
    %4985 = vmatpush1.xpose.msra.mxu0 %v4922
    %4986 = vmatprep.subr.mxu0 0.0
    %4987 = vmatpush1.xpose.msra.mxu0 %v4920
    %4988 = vmatprep.subr.mxu0 0.0
    %4989 = vmatpush1.xpose.msra.mxu0 %v4918
    %4990 = vmatprep.subr.mxu0 0.0
    %4991 = vmatpush1.xpose.msra.mxu0 %v4916
    %4992 = vmatprep.subr.mxu0 0.0
    %4993 = vmatpush1.xpose.msra.mxu0 %v4914
    %4994 = vmatprep.subr.mxu0 0.0
    %4995 = vmatpush1.xpose.msra.mxu0 %v4912
    %4996 = vmatprep.subr.mxu0 0.0
    %4997 = vmatpush1.xpose.msra.mxu0 %v4910
    %4998 = vmatprep.subr.mxu0 0.0
    %4999 = vmatpush1.xpose.msra.mxu0 %v4908
    %5000 = vmatprep.subr.mxu0 0.0
    %5001 = vmatpush1.xpose.msra.mxu0 %v4906
    %5002 = vmatprep.subr.mxu0 0.0
    %5003 = vmatpush2.xpose.msra.mxu0 %v4968
    %5004 = vmatprep.subr.mxu0 0.0
    %5005 = vmatpush2.xpose.msra.mxu0 %v4966
    %5006 = vmatprep.subr.mxu0 0.0
    %5007 = vmatpush2.xpose.msra.mxu0 %v4964
    %5008 = vmatprep.subr.mxu0 0.0
    %5009 = vmatpush2.xpose.msra.mxu0 %v4962
    %5010 = vmatprep.subr.mxu0 0.0
    %5011 = vmatpush2.xpose.msra.mxu0 %v4960
    %5012 = vmatprep.subr.mxu0 0.0
    %5013 = vmatpush2.xpose.msra.mxu0 %v4958
    %5014 = vmatprep.subr.mxu0 0.0
    %5015 = vmatpush2.xpose.msra.mxu0 %v4956
    %5016 = vmatprep.subr.mxu0 0.0
    %5017 = vmatpush2.xpose.msra.mxu0 %v4954
    %5018 = vmatprep.subr.mxu0 0.0
    %5019 = vmatpush2.xpose.msra.mxu0 %v4952
    %5020 = vmatprep.subr.mxu0 0.0
    %5021 = vmatpush2.xpose.msra.mxu0 %v4950
    %5022 = vmatprep.subr.mxu0 0.0
    %5023 = vmatpush2.xpose.msra.mxu0 %v4948
    %5024 = vmatprep.subr.mxu0 0.0
    %5025 = vmatpush2.xpose.msra.mxu0 %v4946
    %5026 = vmatprep.subr.mxu0 0.0
    %5027 = vmatpush2.xpose.msra.mxu0 %v4944
    %5028 = vmatprep.subr.mxu0 0.0
    %5029 = vmatpush2.xpose.msra.mxu0 %v4942
    %5030 = vmatprep.subr.mxu0 0.0
    %5031 = vmatpush2.xpose.msra.mxu0 %v4940
    %5032 = vmatprep.subr.mxu0 0.0
    %5033 = vmatpush2.xpose.msra.mxu0 %v4938
    %5034 = vmatprep.mubr.f32.mxu0 0.0
    %5035 = vmatmul.mubr.f32.gmra.mxu0 %v4895
    %v5036 = vpop.f32.mrf.mxu0
    %v5037 = vadd.f32 0.0, %v5036
    %v5038 = vpop.f32.mrf.mxu0
    %v5039 = vadd.f32 0.0, %v5038
    %5040 = vmatprep.mubr.f32.mxu0 0.0
    %5041 = vmatmul.mubr.f32.gmra.mxu0 %v4898
    %v5042 = vpop.f32.mrf.mxu0
    %v5043 = vadd.f32 0.0, %v5042
    %v5044 = vpop.f32.mrf.mxu0
    %v5045 = vadd.f32 0.0, %v5044
    %5046 = vmatprep.mubr.f32.mxu0 0.0
    %5047 = vmatmul.mubr.f32.gmra.mxu0 %v4901
    %v5048 = vpop.f32.mrf.mxu0
    %v5049 = vadd.f32 0.0, %v5048
    %v5050 = vpop.f32.mrf.mxu0
    %v5051 = vadd.f32 0.0, %v5050
    %5052 = vmatprep.mubr.f32.mxu0 0.0
    %5053 = vmatmul.mubr.f32.gmra.mxu0 %v4904
    %v5054 = vpop.f32.mrf.mxu0
    %v5055 = vadd.f32 0.0, %v5054
    %v5056 = vpop.f32.mrf.mxu0
    %v5057 = vadd.f32 0.0, %v5056
    %5058 = vdwg.mxu0
    %v5059 = vmul.f32 %v5037, 0.4082483
    %v5060 = vmul.f32 %v5039, 0.4082483
    %v5061 = vmul.f32 %v5043, 0.4082483
    %v5062 = vmul.f32 %v5045, 0.4082483
    %v5063 = vmul.f32 %v5049, 0.4082483
    %v5064 = vmul.f32 %v5051, 0.4082483
    %v5065 = vmul.f32 %v5055, 0.4082483
    %v5066 = vmul.f32 %v5057, 0.4082483
    %v5067 = vmax.f32 %v5059, %v5060
    %5068 = vmax.xlane.f32.xlu0 %v5067
    %v5069 = vpop.xlane.xlu0 %5068
    %v5070 = vmax.f32 %v5061, %v5062
    %5071 = vmax.xlane.f32.xlu0 %v5070
    %v5072 = vpop.xlane.xlu0 %5071
    %v5073 = vmax.f32 %v5063, %v5064
    %5074 = vmax.xlane.f32.xlu0 %v5073
    %v5075 = vpop.xlane.xlu0 %5074
    %v5076 = vmax.f32 %v5065, %v5066
    %5077 = vmax.xlane.f32.xlu0 %v5076
    %v5078 = vpop.xlane.xlu0 %5077
    %v5079 = vsub.f32 %v5059, %v5069
    %v5080 = vsub.f32 %v5060, %v5069
    %v5081 = vsub.f32 %v5061, %v5072
    %v5082 = vsub.f32 %v5062, %v5072
    %v5083 = vsub.f32 %v5063, %v5075
    %v5084 = vsub.f32 %v5064, %v5075
    %v5085 = vsub.f32 %v5065, %v5078
    %v5086 = vsub.f32 %v5066, %v5078
    %v5087 = vmul.f32 %v5079, 1.442695
    %v5088 = vpow.pop %v5087
    %v5089 = vmul.f32 %v5080, 1.442695
    %v5090 = vpow.pop %v5089
    %v5091 = vmul.f32 %v5081, 1.442695
    %v5092 = vpow.pop %v5091
    %v5093 = vmul.f32 %v5082, 1.442695
    %v5094 = vpow.pop %v5093
    %v5095 = vmul.f32 %v5083, 1.442695
    %v5096 = vpow.pop %v5095
    %v5097 = vmul.f32 %v5084, 1.442695
    %v5098 = vpow.pop %v5097
    %v5099 = vmul.f32 %v5085, 1.442695
    %v5100 = vpow.pop %v5099
    %v5101 = vmul.f32 %v5086, 1.442695
    %v5102 = vpow.pop %v5101
    %5103 = vmatprep.subr.mxu0 0.0
    %5104 = vmatpush1.msra.mxu0 %v4621
    %5105 = vmatprep.subr.mxu0 0.0
    %5106 = vmatpush1.msra.mxu0 %v4620
    %5107 = vmatprep.subr.mxu0 0.0
    %5108 = vmatpush1.msra.mxu0 %v4619
    %5109 = vmatprep.subr.mxu0 0.0
    %5110 = vmatpush1.msra.mxu0 %v4618
    %5111 = vmatprep.subr.mxu0 0.0
    %5112 = vmatpush1.msra.mxu0 %v4617
    %5113 = vmatprep.subr.mxu0 0.0
    %5114 = vmatpush1.msra.mxu0 %v4616
    %5115 = vmatprep.subr.mxu0 0.0
    %5116 = vmatpush1.msra.mxu0 %v4615
    %5117 = vmatprep.subr.mxu0 0.0
    %5118 = vmatpush1.msra.mxu0 %v4614
    %5119 = vmatprep.subr.mxu0 0.0
    %5120 = vmatpush1.msra.mxu0 %v4613
    %5121 = vmatprep.subr.mxu0 0.0
    %5122 = vmatpush1.msra.mxu0 %v4612
    %5123 = vmatprep.subr.mxu0 0.0
    %5124 = vmatpush1.msra.mxu0 %v4611
    %5125 = vmatprep.subr.mxu0 0.0
    %5126 = vmatpush1.msra.mxu0 %v4610
    %5127 = vmatprep.subr.mxu0 0.0
    %5128 = vmatpush1.msra.mxu0 %v4609
    %5129 = vmatprep.subr.mxu0 0.0
    %5130 = vmatpush1.msra.mxu0 %v4608
    %5131 = vmatprep.subr.mxu0 0.0
    %5132 = vmatpush1.msra.mxu0 %v4607
    %5133 = vmatprep.subr.mxu0 0.0
    %5134 = vmatpush1.msra.mxu0 %v4606
    %5135 = vmatprep.subr.mxu0 0.0
    %5136 = vmatpush2.msra.mxu0 %v4637
    %5137 = vmatprep.subr.mxu0 0.0
    %5138 = vmatpush2.msra.mxu0 %v4636
    %5139 = vmatprep.subr.mxu0 0.0
    %5140 = vmatpush2.msra.mxu0 %v4635
    %5141 = vmatprep.subr.mxu0 0.0
    %5142 = vmatpush2.msra.mxu0 %v4634
    %5143 = vmatprep.subr.mxu0 0.0
    %5144 = vmatpush2.msra.mxu0 %v4633
    %5145 = vmatprep.subr.mxu0 0.0
    %5146 = vmatpush2.msra.mxu0 %v4632
    %5147 = vmatprep.subr.mxu0 0.0
    %5148 = vmatpush2.msra.mxu0 %v4631
    %5149 = vmatprep.subr.mxu0 0.0
    %5150 = vmatpush2.msra.mxu0 %v4630
    %5151 = vmatprep.subr.mxu0 0.0
    %5152 = vmatpush2.msra.mxu0 %v4629
    %5153 = vmatprep.subr.mxu0 0.0
    %5154 = vmatpush2.msra.mxu0 %v4628
    %5155 = vmatprep.subr.mxu0 0.0
    %5156 = vmatpush2.msra.mxu0 %v4627
    %5157 = vmatprep.subr.mxu0 0.0
    %5158 = vmatpush2.msra.mxu0 %v4626
    %5159 = vmatprep.subr.mxu0 0.0
    %5160 = vmatpush2.msra.mxu0 %v4625
    %5161 = vmatprep.subr.mxu0 0.0
    %5162 = vmatpush2.msra.mxu0 %v4624
    %5163 = vmatprep.subr.mxu0 0.0
    %5164 = vmatpush2.msra.mxu0 %v4623
    %5165 = vmatprep.subr.mxu0 0.0
    %5166 = vmatpush2.msra.mxu0 %v4622
    %5167 = vmatprep.mubr.f32.mxu0 %v5090
    %5168 = vmatmul.mubr.f32.gmra.mxu0 %v5088
    %v5169 = vpop.f32.mrf.mxu0
    %v5170 = vadd.f32 0.0, %v5169
    %v5171 = vpop.f32.mrf.mxu0
    %5172 = vmatprep.mubr.f32.mxu0 %v5094
    %5173 = vmatmul.mubr.f32.gmra.mxu0 %v5092
    %v5174 = vpop.f32.mrf.mxu0
    %v5175 = vadd.f32 0.0, %v5174
    %v5176 = vpop.f32.mrf.mxu0
    %5177 = vmatprep.mubr.f32.mxu0 %v5098
    %5178 = vmatmul.mubr.f32.gmra.mxu0 %v5096
    %v5179 = vpop.f32.mrf.mxu0
    %v5180 = vadd.f32 0.0, %v5179
    %v5181 = vpop.f32.mrf.mxu0
    %5182 = vmatprep.mubr.f32.mxu0 %v5102
    %5183 = vmatmul.mubr.f32.gmra.mxu0 %v5100
    %v5184 = vpop.f32.mrf.mxu0
    %v5185 = vadd.f32 0.0, %v5184
    %v5186 = vpop.f32.mrf.mxu0
    %5187 = vdwg.mxu0
    %5188 = vrot.lane.b32.xlu0 %v4606, 96
    %v5189 = vpop.permute.xlu0 %5188
    %5190 = vrot.lane.b32.xlu0 %v4607, 96
    %v5191 = vpop.permute.xlu0 %5190
    %5192 = vrot.lane.b32.xlu0 %v4608, 96
    %v5193 = vpop.permute.xlu0 %5192
    %5194 = vrot.lane.b32.xlu0 %v4609, 96
    %v5195 = vpop.permute.xlu0 %5194
    %5196 = vrot.lane.b32.xlu0 %v4610, 96
    %v5197 = vpop.permute.xlu0 %5196
    %5198 = vrot.lane.b32.xlu0 %v4611, 96
    %v5199 = vpop.permute.xlu0 %5198
    %5200 = vrot.lane.b32.xlu0 %v4612, 96
    %v5201 = vpop.permute.xlu0 %5200
    %5202 = vrot.lane.b32.xlu0 %v4613, 96
    %v5203 = vpop.permute.xlu0 %5202
    %5204 = vrot.lane.b32.xlu0 %v4614, 96
    %v5205 = vpop.permute.xlu0 %5204
    %5206 = vrot.lane.b32.xlu0 %v4615, 96
    %v5207 = vpop.permute.xlu0 %5206
    %5208 = vrot.lane.b32.xlu0 %v4616, 96
    %v5209 = vpop.permute.xlu0 %5208
    %5210 = vrot.lane.b32.xlu0 %v4617, 96
    %v5211 = vpop.permute.xlu0 %5210
    %5212 = vrot.lane.b32.xlu0 %v4618, 96
    %v5213 = vpop.permute.xlu0 %5212
    %5214 = vrot.lane.b32.xlu0 %v4619, 96
    %v5215 = vpop.permute.xlu0 %5214
    %5216 = vrot.lane.b32.xlu0 %v4620, 96
    %v5217 = vpop.permute.xlu0 %5216
    %5218 = vrot.lane.b32.xlu0 %v4621, 96
    %v5219 = vpop.permute.xlu0 %5218
    %5220 = vrot.lane.b32.xlu0 %v4622, 96
    %v5221 = vpop.permute.xlu0 %5220
    %5222 = vrot.lane.b32.xlu0 %v4623, 96
    %v5223 = vpop.permute.xlu0 %5222
    %5224 = vrot.lane.b32.xlu0 %v4624, 96
    %v5225 = vpop.permute.xlu0 %5224
    %5226 = vrot.lane.b32.xlu0 %v4625, 96
    %v5227 = vpop.permute.xlu0 %5226
    %5228 = vrot.lane.b32.xlu0 %v4626, 96
    %v5229 = vpop.permute.xlu0 %5228
    %5230 = vrot.lane.b32.xlu0 %v4627, 96
    %v5231 = vpop.permute.xlu0 %5230
    %5232 = vrot.lane.b32.xlu0 %v4628, 96
    %v5233 = vpop.permute.xlu0 %5232
    %5234 = vrot.lane.b32.xlu0 %v4629, 96
    %v5235 = vpop.permute.xlu0 %5234
    %5236 = vrot.lane.b32.xlu0 %v4630, 96
    %v5237 = vpop.permute.xlu0 %5236
    %5238 = vrot.lane.b32.xlu0 %v4631, 96
    %v5239 = vpop.permute.xlu0 %5238
    %5240 = vrot.lane.b32.xlu0 %v4632, 96
    %v5241 = vpop.permute.xlu0 %5240
    %5242 = vrot.lane.b32.xlu0 %v4633, 96
    %v5243 = vpop.permute.xlu0 %5242
    %5244 = vrot.lane.b32.xlu0 %v4634, 96
    %v5245 = vpop.permute.xlu0 %5244
    %5246 = vrot.lane.b32.xlu0 %v4635, 96
    %v5247 = vpop.permute.xlu0 %5246
    %5248 = vrot.lane.b32.xlu0 %v4636, 96
    %v5249 = vpop.permute.xlu0 %5248
    %5250 = vrot.lane.b32.xlu0 %v4637, 96
    %v5251 = vpop.permute.xlu0 %5250
    %v5284 = vmul.f32 %v3488, %v5189
    %v5285 = vmul.f32 %v3490, %v5189
    %v5286 = vmul.f32 %v3494, %v5191
    %v5287 = vmul.f32 %v3496, %v5191
    %v5288 = vmul.f32 %v3500, %v5193
    %v5289 = vmul.f32 %v3502, %v5193
    %v5290 = vmul.f32 %v3506, %v5195
    %v5291 = vmul.f32 %v3508, %v5195
    %v5292 = vmul.f32 %v3488, %v5197
    %v5293 = vmul.f32 %v3490, %v5197
    %v5294 = vmul.f32 %v3494, %v5199
    %v5295 = vmul.f32 %v3496, %v5199
    %v5296 = vmul.f32 %v3500, %v5201
    %v5297 = vmul.f32 %v3502, %v5201
    %v5298 = vmul.f32 %v3506, %v5203
    %v5299 = vmul.f32 %v3508, %v5203
    %v5300 = vmul.f32 %v3488, %v5205
    %v5301 = vmul.f32 %v3490, %v5205
    %v5302 = vmul.f32 %v3494, %v5207
    %v5303 = vmul.f32 %v3496, %v5207
    %v5304 = vmul.f32 %v3500, %v5209
    %v5305 = vmul.f32 %v3502, %v5209
    %v5306 = vmul.f32 %v3506, %v5211
    %v5307 = vmul.f32 %v3508, %v5211
    %v5308 = vmul.f32 %v3488, %v5213
    %v5309 = vmul.f32 %v3490, %v5213
    %v5310 = vmul.f32 %v3494, %v5215
    %v5311 = vmul.f32 %v3496, %v5215
    %v5312 = vmul.f32 %v3500, %v5217
    %v5313 = vmul.f32 %v3502, %v5217
    %v5314 = vmul.f32 %v3506, %v5219
    %v5315 = vmul.f32 %v3508, %v5219
    %v5316 = vmul.f32 %v3488, %v5221
    %v5317 = vmul.f32 %v3490, %v5221
    %v5318 = vmul.f32 %v3494, %v5223
    %v5319 = vmul.f32 %v3496, %v5223
    %v5320 = vmul.f32 %v3500, %v5225
    %v5321 = vmul.f32 %v3502, %v5225
    %v5322 = vmul.f32 %v3506, %v5227
    %v5323 = vmul.f32 %v3508, %v5227
    %v5324 = vmul.f32 %v3488, %v5229
    %v5325 = vmul.f32 %v3490, %v5229
    %v5326 = vmul.f32 %v3494, %v5231
    %v5327 = vmul.f32 %v3496, %v5231
    %v5328 = vmul.f32 %v3500, %v5233
    %v5329 = vmul.f32 %v3502, %v5233
    %v5330 = vmul.f32 %v3506, %v5235
    %v5331 = vmul.f32 %v3508, %v5235
    %v5332 = vmul.f32 %v3488, %v5237
    %v5333 = vmul.f32 %v3490, %v5237
    %v5334 = vmul.f32 %v3494, %v5239
    %v5335 = vmul.f32 %v3496, %v5239
    %v5336 = vmul.f32 %v3500, %v5241
    %v5337 = vmul.f32 %v3502, %v5241
    %v5338 = vmul.f32 %v3506, %v5243
    %v5339 = vmul.f32 %v3508, %v5243
    %v5340 = vmul.f32 %v3488, %v5245
    %v5341 = vmul.f32 %v3490, %v5245
    %v5342 = vmul.f32 %v3494, %v5247
    %v5343 = vmul.f32 %v3496, %v5247
    %v5344 = vmul.f32 %v3500, %v5249
    %v5345 = vmul.f32 %v3502, %v5249
    %v5346 = vmul.f32 %v3506, %v5251
    %v5347 = vmul.f32 %v3508, %v5251
    %5412 = vrot.lane.b32.xlu0 %v5284, 32
    %v5413 = vpop.permute.xlu0 %5412
    %5414 = vrot.lane.b32.xlu0 %v5285, 32
    %v5415 = vpop.permute.xlu0 %5414
    %5416 = vrot.lane.b32.xlu0 %v5286, 32
    %v5417 = vpop.permute.xlu0 %5416
    %5418 = vrot.lane.b32.xlu0 %v5287, 32
    %v5419 = vpop.permute.xlu0 %5418
    %5420 = vrot.lane.b32.xlu0 %v5288, 32
    %v5421 = vpop.permute.xlu0 %5420
    %5422 = vrot.lane.b32.xlu0 %v5289, 32
    %v5423 = vpop.permute.xlu0 %5422
    %5424 = vrot.lane.b32.xlu0 %v5290, 32
    %v5425 = vpop.permute.xlu0 %5424
    %5426 = vrot.lane.b32.xlu0 %v5291, 32
    %v5427 = vpop.permute.xlu0 %5426
    %5428 = vrot.lane.b32.xlu0 %v5292, 32
    %v5429 = vpop.permute.xlu0 %5428
    %5430 = vrot.lane.b32.xlu0 %v5293, 32
    %v5431 = vpop.permute.xlu0 %5430
    %5432 = vrot.lane.b32.xlu0 %v5294, 32
    %v5433 = vpop.permute.xlu0 %5432
    %5434 = vrot.lane.b32.xlu0 %v5295, 32
    %v5435 = vpop.permute.xlu0 %5434
    %5436 = vrot.lane.b32.xlu0 %v5296, 32
    %v5437 = vpop.permute.xlu0 %5436
    %5438 = vrot.lane.b32.xlu0 %v5297, 32
    %v5439 = vpop.permute.xlu0 %5438
    %5440 = vrot.lane.b32.xlu0 %v5298, 32
    %v5441 = vpop.permute.xlu0 %5440
    %5442 = vrot.lane.b32.xlu0 %v5299, 32
    %v5443 = vpop.permute.xlu0 %5442
    %5444 = vrot.lane.b32.xlu0 %v5300, 32
    %v5445 = vpop.permute.xlu0 %5444
    %5446 = vrot.lane.b32.xlu0 %v5301, 32
    %v5447 = vpop.permute.xlu0 %5446
    %5448 = vrot.lane.b32.xlu0 %v5302, 32
    %v5449 = vpop.permute.xlu0 %5448
    %5450 = vrot.lane.b32.xlu0 %v5303, 32
    %v5451 = vpop.permute.xlu0 %5450
    %5452 = vrot.lane.b32.xlu0 %v5304, 32
    %v5453 = vpop.permute.xlu0 %5452
    %5454 = vrot.lane.b32.xlu0 %v5305, 32
    %v5455 = vpop.permute.xlu0 %5454
    %5456 = vrot.lane.b32.xlu0 %v5306, 32
    %v5457 = vpop.permute.xlu0 %5456
    %5458 = vrot.lane.b32.xlu0 %v5307, 32
    %v5459 = vpop.permute.xlu0 %5458
    %5460 = vrot.lane.b32.xlu0 %v5308, 32
    %v5461 = vpop.permute.xlu0 %5460
    %5462 = vrot.lane.b32.xlu0 %v5309, 32
    %v5463 = vpop.permute.xlu0 %5462
    %5464 = vrot.lane.b32.xlu0 %v5310, 32
    %v5465 = vpop.permute.xlu0 %5464
    %5466 = vrot.lane.b32.xlu0 %v5311, 32
    %v5467 = vpop.permute.xlu0 %5466
    %5468 = vrot.lane.b32.xlu0 %v5312, 32
    %v5469 = vpop.permute.xlu0 %5468
    %5470 = vrot.lane.b32.xlu0 %v5313, 32
    %v5471 = vpop.permute.xlu0 %5470
    %5472 = vrot.lane.b32.xlu0 %v5314, 32
    %v5473 = vpop.permute.xlu0 %5472
    %5474 = vrot.lane.b32.xlu0 %v5315, 32
    %v5475 = vpop.permute.xlu0 %5474
    %5476 = vrot.lane.b32.xlu0 %v5316, 32
    %v5477 = vpop.permute.xlu0 %5476
    %5478 = vrot.lane.b32.xlu0 %v5317, 32
    %v5479 = vpop.permute.xlu0 %5478
    %5480 = vrot.lane.b32.xlu0 %v5318, 32
    %v5481 = vpop.permute.xlu0 %5480
    %5482 = vrot.lane.b32.xlu0 %v5319, 32
    %v5483 = vpop.permute.xlu0 %5482
    %5484 = vrot.lane.b32.xlu0 %v5320, 32
    %v5485 = vpop.permute.xlu0 %5484
    %5486 = vrot.lane.b32.xlu0 %v5321, 32
    %v5487 = vpop.permute.xlu0 %5486
    %5488 = vrot.lane.b32.xlu0 %v5322, 32
    %v5489 = vpop.permute.xlu0 %5488
    %5490 = vrot.lane.b32.xlu0 %v5323, 32
    %v5491 = vpop.permute.xlu0 %5490
    %5492 = vrot.lane.b32.xlu0 %v5324, 32
    %v5493 = vpop.permute.xlu0 %5492
    %5494 = vrot.lane.b32.xlu0 %v5325, 32
    %v5495 = vpop.permute.xlu0 %5494
    %5496 = vrot.lane.b32.xlu0 %v5326, 32
    %v5497 = vpop.permute.xlu0 %5496
    %5498 = vrot.lane.b32.xlu0 %v5327, 32
    %v5499 = vpop.permute.xlu0 %5498
    %5500 = vrot.lane.b32.xlu0 %v5328, 32
    %v5501 = vpop.permute.xlu0 %5500
    %5502 = vrot.lane.b32.xlu0 %v5329, 32
    %v5503 = vpop.permute.xlu0 %5502
    %5504 = vrot.lane.b32.xlu0 %v5330, 32
    %v5505 = vpop.permute.xlu0 %5504
    %5506 = vrot.lane.b32.xlu0 %v5331, 32
    %v5507 = vpop.permute.xlu0 %5506
    %5508 = vrot.lane.b32.xlu0 %v5332, 32
    %v5509 = vpop.permute.xlu0 %5508
    %5510 = vrot.lane.b32.xlu0 %v5333, 32
    %v5511 = vpop.permute.xlu0 %5510
    %5512 = vrot.lane.b32.xlu0 %v5334, 32
    %v5513 = vpop.permute.xlu0 %5512
    %5514 = vrot.lane.b32.xlu0 %v5335, 32
    %v5515 = vpop.permute.xlu0 %5514
    %5516 = vrot.lane.b32.xlu0 %v5336, 32
    %v5517 = vpop.permute.xlu0 %5516
    %5518 = vrot.lane.b32.xlu0 %v5337, 32
    %v5519 = vpop.permute.xlu0 %5518
    %5520 = vrot.lane.b32.xlu0 %v5338, 32
    %v5521 = vpop.permute.xlu0 %5520
    %5522 = vrot.lane.b32.xlu0 %v5339, 32
    %v5523 = vpop.permute.xlu0 %5522
    %5524 = vrot.lane.b32.xlu0 %v5340, 32
    %v5525 = vpop.permute.xlu0 %5524
    %5526 = vrot.lane.b32.xlu0 %v5341, 32
    %v5527 = vpop.permute.xlu0 %5526
    %5528 = vrot.lane.b32.xlu0 %v5342, 32
    %v5529 = vpop.permute.xlu0 %5528
    %5530 = vrot.lane.b32.xlu0 %v5343, 32
    %v5531 = vpop.permute.xlu0 %5530
    %5532 = vrot.lane.b32.xlu0 %v5344, 32
    %v5533 = vpop.permute.xlu0 %5532
    %5534 = vrot.lane.b32.xlu0 %v5345, 32
    %v5535 = vpop.permute.xlu0 %5534
    %5536 = vrot.lane.b32.xlu0 %v5346, 32
    %v5537 = vpop.permute.xlu0 %5536
    %5538 = vrot.lane.b32.xlu0 %v5347, 32
    %v5539 = vpop.permute.xlu0 %5538
    %v5540 = vsel %vm4444, %v5413, %v5415
    %v5541 = vsel %vm4444, %v5417, %v5419
    %v5542 = vsel %vm4444, %v5421, %v5423
    %v5543 = vsel %vm4444, %v5425, %v5427
    %v5544 = vsel %vm4444, %v5429, %v5431
    %v5545 = vsel %vm4444, %v5433, %v5435
    %v5546 = vsel %vm4444, %v5437, %v5439
    %v5547 = vsel %vm4444, %v5441, %v5443
    %v5548 = vsel %vm4444, %v5445, %v5447
    %v5549 = vsel %vm4444, %v5449, %v5451
    %v5550 = vsel %vm4444, %v5453, %v5455
    %v5551 = vsel %vm4444, %v5457, %v5459
    %v5552 = vsel %vm4444, %v5461, %v5463
    %v5553 = vsel %vm4444, %v5465, %v5467
    %v5554 = vsel %vm4444, %v5469, %v5471
    %v5555 = vsel %vm4444, %v5473, %v5475
    %v5556 = vsel %vm4444, %v5477, %v5479
    %v5557 = vsel %vm4444, %v5481, %v5483
    %v5558 = vsel %vm4444, %v5485, %v5487
    %v5559 = vsel %vm4444, %v5489, %v5491
    %v5560 = vsel %vm4444, %v5493, %v5495
    %v5561 = vsel %vm4444, %v5497, %v5499
    %v5562 = vsel %vm4444, %v5501, %v5503
    %v5563 = vsel %vm4444, %v5505, %v5507
    %v5564 = vsel %vm4444, %v5509, %v5511
    %v5565 = vsel %vm4444, %v5513, %v5515
    %v5566 = vsel %vm4444, %v5517, %v5519
    %v5567 = vsel %vm4444, %v5521, %v5523
    %v5568 = vsel %vm4444, %v5525, %v5527
    %v5569 = vsel %vm4444, %v5529, %v5531
    %v5570 = vsel %vm4444, %v5533, %v5535
    %v5571 = vsel %vm4444, %v5537, %v5539
    %5604 = vmatprep.subr.mxu0 0.0
    %5605 = vmatpush1.msra.mxu0 %v5555
    %5606 = vmatprep.subr.mxu0 0.0
    %5607 = vmatpush1.msra.mxu0 %v5554
    %5608 = vmatprep.subr.mxu0 0.0
    %5609 = vmatpush1.msra.mxu0 %v5553
    %5610 = vmatprep.subr.mxu0 0.0
    %5611 = vmatpush1.msra.mxu0 %v5552
    %5612 = vmatprep.subr.mxu0 0.0
    %5613 = vmatpush1.msra.mxu0 %v5551
    %5614 = vmatprep.subr.mxu0 0.0
    %5615 = vmatpush1.msra.mxu0 %v5550
    %5616 = vmatprep.subr.mxu0 0.0
    %5617 = vmatpush1.msra.mxu0 %v5549
    %5618 = vmatprep.subr.mxu0 0.0
    %5619 = vmatpush1.msra.mxu0 %v5548
    %5620 = vmatprep.subr.mxu0 0.0
    %5621 = vmatpush1.msra.mxu0 %v5547
    %5622 = vmatprep.subr.mxu0 0.0
    %5623 = vmatpush1.msra.mxu0 %v5546
    %5624 = vmatprep.subr.mxu0 0.0
    %5625 = vmatpush1.msra.mxu0 %v5545
    %5626 = vmatprep.subr.mxu0 0.0
    %5627 = vmatpush1.msra.mxu0 %v5544
    %5628 = vmatprep.subr.mxu0 0.0
    %5629 = vmatpush1.msra.mxu0 %v5543
    %5630 = vmatprep.subr.mxu0 0.0
    %5631 = vmatpush1.msra.mxu0 %v5542
    %5632 = vmatprep.subr.mxu0 0.0
    %5633 = vmatpush1.msra.mxu0 %v5541
    %5634 = vmatprep.subr.mxu0 0.0
    %5635 = vmatpush1.msra.mxu0 %v5540
    %5636 = vmatprep.subr.mxu0 0.0
    %5637 = vmatpush2.msra.mxu0 %v5571
    %5638 = vmatprep.subr.mxu0 0.0
    %5639 = vmatpush2.msra.mxu0 %v5570
    %5640 = vmatprep.subr.mxu0 0.0
    %5641 = vmatpush2.msra.mxu0 %v5569
    %5642 = vmatprep.subr.mxu0 0.0
    %5643 = vmatpush2.msra.mxu0 %v5568
    %5644 = vmatprep.subr.mxu0 0.0
    %5645 = vmatpush2.msra.mxu0 %v5567
    %5646 = vmatprep.subr.mxu0 0.0
    %5647 = vmatpush2.msra.mxu0 %v5566
    %5648 = vmatprep.subr.mxu0 0.0
    %5649 = vmatpush2.msra.mxu0 %v5565
    %5650 = vmatprep.subr.mxu0 0.0
    %5651 = vmatpush2.msra.mxu0 %v5564
    %5652 = vmatprep.subr.mxu0 0.0
    %5653 = vmatpush2.msra.mxu0 %v5563
    %5654 = vmatprep.subr.mxu0 0.0
    %5655 = vmatpush2.msra.mxu0 %v5562
    %5656 = vmatprep.subr.mxu0 0.0
    %5657 = vmatpush2.msra.mxu0 %v5561
    %5658 = vmatprep.subr.mxu0 0.0
    %5659 = vmatpush2.msra.mxu0 %v5560
    %5660 = vmatprep.subr.mxu0 0.0
    %5661 = vmatpush2.msra.mxu0 %v5559
    %5662 = vmatprep.subr.mxu0 0.0
    %5663 = vmatpush2.msra.mxu0 %v5558
    %5664 = vmatprep.subr.mxu0 0.0
    %5665 = vmatpush2.msra.mxu0 %v5557
    %5666 = vmatprep.subr.mxu0 0.0
    %5667 = vmatpush2.msra.mxu0 %v5556
    %5668 = vmatprep.mubr.f32.mxu0 %v5090
    %5669 = vmatmul.mubr.f32.gmra.mxu0 %v5088
    %v5670 = vpop.f32.mrf.mxu0
    %v5671 = vadd.f32 0.0, %v5670
    %v5672 = vpop.f32.mrf.mxu0
    %5673 = vmatprep.mubr.f32.mxu0 %v5094
    %5674 = vmatmul.mubr.f32.gmra.mxu0 %v5092
    %v5675 = vpop.f32.mrf.mxu0
    %v5676 = vadd.f32 0.0, %v5675
    %v5677 = vpop.f32.mrf.mxu0
    %5678 = vmatprep.mubr.f32.mxu0 %v5098
    %5679 = vmatmul.mubr.f32.gmra.mxu0 %v5096
    %v5680 = vpop.f32.mrf.mxu0
    %v5681 = vadd.f32 0.0, %v5680
    %v5682 = vpop.f32.mrf.mxu0
    %5683 = vmatprep.mubr.f32.mxu0 %v5102
    %5684 = vmatmul.mubr.f32.gmra.mxu0 %v5100
    %v5685 = vpop.f32.mrf.mxu0
    %v5686 = vadd.f32 0.0, %v5685
    %v5687 = vpop.f32.mrf.mxu0
    %5688 = vdwg.mxu0
    %v5689 = vmax.f32 %v5170, 1e-30
    %v5690 = vmax.f32 %v5175, 1e-30
    %v5691 = vmax.f32 %v5180, 1e-30
    %v5692 = vmax.f32 %v5185, 1e-30
    %v5693 = vrcp.pop %v5689
    %v5694 = vrcp.pop %v5690
    %v5695 = vrcp.pop %v5691
    %v5696 = vrcp.pop %v5692
    %v5697 = vmul.f32 %v5671, %v5693
    %v5698 = vmul.f32 %v5676, %v5694
    %v5699 = vmul.f32 %v5681, %v5695
    %v5700 = vmul.f32 %v5686, %v5696
    %s5701 = scalar_lea.vmem %s4, 192
    %v5702 = vld [vmem:[%s5701] sm:$0xff]
    %v5703 = vld [vmem:[%s5701 + $0x8] sm:$0xff]
    %v5704 = vld [vmem:[%s5701 + $0x10] sm:$0xff]
    %v5705 = vld [vmem:[%s5701 + $0x18] sm:$0xff]
    %v5706 = vld [vmem:[%s5701 + $0x20] sm:$0xff]
    %v5707 = vld [vmem:[%s5701 + $0x28] sm:$0xff]
    %v5708 = vld [vmem:[#allocation10 + $0x7] sm:$0x1]
    %v5709 = vlaneseq
    %v5710 = vshrl.u32 %v5709, 7
    %v5711 = vsub.s32 0, %v5710
    %v5712 = vrot.slane %v5708, %v5711
    %v5714 = vsel %vm183, %v4602, 0
    %v5717 = vsel %vm183, %v4603, 0
    %v5720 = vsel %vm183, %v4604, 0
    %v5723 = vsel %vm183, %v4605, 0
    %v5726 = vsel %vm183, %v5697, 0
    %v5729 = vsel %vm183, %v5698, 0
    %v5732 = vsel %vm183, %v5699, 0
    %v5735 = vsel %vm183, %v5700, 0
    %5737 = vmatprep.subr.mxu0 0.0
    %5738 = vmatpush1.msra.mxu0 0.0
    %5739 = vmatprep.subr.mxu0 0.0
    %5740 = vmatpush1.msra.mxu0 0.0
    %5741 = vmatprep.subr.mxu0 0.0
    %5742 = vmatpush1.msra.mxu0 0.0
    %5743 = vmatprep.subr.mxu0 0.0
    %5744 = vmatpush1.msra.mxu0 0.0
    %5745 = vmatprep.subr.mxu0 0.0
    %5746 = vmatpush1.msra.mxu0 0.0
    %5747 = vmatprep.subr.mxu0 0.0
    %5748 = vmatpush1.msra.mxu0 0.0
    %5749 = vmatprep.subr.mxu0 0.0
    %5750 = vmatpush1.msra.mxu0 0.0
    %5751 = vmatprep.subr.mxu0 0.0
    %5752 = vmatpush1.msra.mxu0 0.0
    %5753 = vmatprep.subr.mxu0 0.0
    %5754 = vmatpush1.msra.mxu0 0.0
    %5755 = vmatprep.subr.mxu0 0.0
    %5756 = vmatpush1.msra.mxu0 0.0
    %5757 = vmatprep.subr.mxu0 0.0
    %5758 = vmatpush1.msra.mxu0 %v5707
    %5759 = vmatprep.subr.mxu0 0.0
    %5760 = vmatpush1.msra.mxu0 %v5706
    %5761 = vmatprep.subr.mxu0 0.0
    %5762 = vmatpush1.msra.mxu0 %v5705
    %5763 = vmatprep.subr.mxu0 0.0
    %5764 = vmatpush1.msra.mxu0 %v5704
    %5765 = vmatprep.subr.mxu0 0.0
    %5766 = vmatpush1.msra.mxu0 %v5703
    %5767 = vmatprep.subr.mxu0 0.0
    %5768 = vmatpush1.msra.mxu0 %v5702
    %5769 = vmatprep.subr.mxu0 0.0
    %5770 = vmatpush2.msra.mxu0 0.0
    %5771 = vmatprep.subr.mxu0 0.0
    %5772 = vmatpush2.msra.mxu0 0.0
    %5773 = vmatprep.subr.mxu0 0.0
    %5774 = vmatpush2.msra.mxu0 0.0
    %5775 = vmatprep.subr.mxu0 0.0
    %5776 = vmatpush2.msra.mxu0 0.0
    %5777 = vmatprep.subr.mxu0 0.0
    %5778 = vmatpush2.msra.mxu0 0.0
    %5779 = vmatprep.subr.mxu0 0.0
    %5780 = vmatpush2.msra.mxu0 0.0
    %5781 = vmatprep.subr.mxu0 0.0
    %5782 = vmatpush2.msra.mxu0 0.0
    %5783 = vmatprep.subr.mxu0 0.0
    %5784 = vmatpush2.msra.mxu0 0.0
    %5785 = vmatprep.subr.mxu0 0.0
    %5786 = vmatpush2.msra.mxu0 0.0
    %5787 = vmatprep.subr.mxu0 0.0
    %5788 = vmatpush2.msra.mxu0 0.0
    %5789 = vmatprep.subr.mxu0 0.0
    %5790 = vmatpush2.msra.mxu0 0.0
    %5791 = vmatprep.subr.mxu0 0.0
    %5792 = vmatpush2.msra.mxu0 0.0
    %5793 = vmatprep.subr.mxu0 0.0
    %5794 = vmatpush2.msra.mxu0 0.0
    %5795 = vmatprep.subr.mxu0 0.0
    %5796 = vmatpush2.msra.mxu0 0.0
    %5797 = vmatprep.subr.mxu0 0.0
    %5798 = vmatpush2.msra.mxu0 0.0
    %5799 = vmatprep.subr.mxu0 0.0
    %5800 = vmatpush2.msra.mxu0 0.0
    %5801 = vmatprep.mubr.f32.mxu0 0.0
    %5802 = vmatmul.mubr.f32.gmra.mxu0 %v5714
    %v5803 = vpop.f32.mrf.mxu0
    %v5804 = vadd.f32 %v5712, %v5803
    %v5805 = vpop.f32.mrf.mxu0
    %5806 = vmatprep.mubr.f32.mxu0 0.0
    %5807 = vmatmul.mubr.f32.gmra.mxu0 %v5717
    %v5808 = vpop.f32.mrf.mxu0
    %v5809 = vadd.f32 %v5712, %v5808
    %v5810 = vpop.f32.mrf.mxu0
    %5811 = vmatprep.mubr.f32.mxu0 0.0
    %5812 = vmatmul.mubr.f32.gmra.mxu0 %v5720
    %v5813 = vpop.f32.mrf.mxu0
    %v5814 = vadd.f32 %v5712, %v5813
    %v5815 = vpop.f32.mrf.mxu0
    %5816 = vmatprep.mubr.f32.mxu0 0.0
    %5817 = vmatmul.mubr.f32.gmra.mxu0 %v5723
    %v5818 = vpop.f32.mrf.mxu0
    %v5819 = vadd.f32 %v5712, %v5818
    %v5820 = vpop.f32.mrf.mxu0
    %5821 = vmatprep.mubr.f32.mxu0 0.0
    %5822 = vmatmul.mubr.f32.gmra.mxu0 %v5726
    %v5823 = vpop.f32.mrf.mxu0
    %v5824 = vadd.f32 %v5712, %v5823
    %v5825 = vpop.f32.mrf.mxu0
    %5826 = vmatprep.mubr.f32.mxu0 0.0
    %5827 = vmatmul.mubr.f32.gmra.mxu0 %v5729
    %v5828 = vpop.f32.mrf.mxu0
    %v5829 = vadd.f32 %v5712, %v5828
    %v5830 = vpop.f32.mrf.mxu0
    %5831 = vmatprep.mubr.f32.mxu0 0.0
    %5832 = vmatmul.mubr.f32.gmra.mxu0 %v5732
    %v5833 = vpop.f32.mrf.mxu0
    %v5834 = vadd.f32 %v5712, %v5833
    %v5835 = vpop.f32.mrf.mxu0
    %5836 = vmatprep.mubr.f32.mxu0 0.0
    %5837 = vmatmul.mubr.f32.gmra.mxu0 %v5735
    %v5838 = vpop.f32.mrf.mxu0
    %v5839 = vadd.f32 %v5712, %v5838
    %v5840 = vpop.f32.mrf.mxu0
    %5841 = vdwg.mxu0
    %v5842 = vadd.f32 %v5804, %v3341
    %v5843 = vadd.f32 %v5809, %v3342
    %v5844 = vadd.f32 %v5814, %v3343
    %v5845 = vadd.f32 %v5819, %v3344
    %v5846 = vadd.f32 %v5824, %v3345
    %v5847 = vadd.f32 %v5829, %v3346
    %v5848 = vadd.f32 %v5834, %v3347
    %v5849 = vadd.f32 %v5839, %v3348
    %v5850 = vld [vmem:[#allocation10 + $0x8] sm:$0x1]
    %v5851 = vld [vmem:[#allocation10 + $0x9] sm:$0x1]
    %v5852 = vsel %vm183, %v5842, 0.0
    %5853 = vadd.xlane.f32.xlu0 %v5852
    %v5854 = vpop.xlane.xlu0 %5853
    %v5855 = vsel %vm183, %v5843, 0.0
    %5856 = vadd.xlane.f32.xlu0 %v5855
    %v5857 = vpop.xlane.xlu0 %5856
    %v5858 = vsel %vm183, %v5844, 0.0
    %5859 = vadd.xlane.f32.xlu0 %v5858
    %v5860 = vpop.xlane.xlu0 %5859
    %v5861 = vsel %vm183, %v5845, 0.0
    %5862 = vadd.xlane.f32.xlu0 %v5861
    %v5863 = vpop.xlane.xlu0 %5862
    %v5864 = vsel %vm183, %v5846, 0.0
    %5865 = vadd.xlane.f32.xlu0 %v5864
    %v5866 = vpop.xlane.xlu0 %5865
    %v5867 = vsel %vm183, %v5847, 0.0
    %5868 = vadd.xlane.f32.xlu0 %v5867
    %v5869 = vpop.xlane.xlu0 %5868
    %v5870 = vsel %vm183, %v5848, 0.0
    %5871 = vadd.xlane.f32.xlu0 %v5870
    %v5872 = vpop.xlane.xlu0 %5871
    %v5873 = vsel %vm183, %v5849, 0.0
    %5874 = vadd.xlane.f32.xlu0 %v5873
    %v5875 = vpop.xlane.xlu0 %5874
    %v5876 = vmul.f32 %v5854, %v1818
    %v5877 = vmul.f32 %v5857, %v1818
    %v5878 = vmul.f32 %v5860, %v1818
    %v5879 = vmul.f32 %v5863, %v1818
    %v5880 = vmul.f32 %v5866, %v1818
    %v5881 = vmul.f32 %v5869, %v1818
    %v5882 = vmul.f32 %v5872, %v1818
    %v5883 = vmul.f32 %v5875, %v1818
    %v5884 = vsub.f32 %v5842, %v5876
    %v5885 = vsub.f32 %v5843, %v5877
    %v5886 = vsub.f32 %v5844, %v5878
    %v5887 = vsub.f32 %v5845, %v5879
    %v5888 = vsub.f32 %v5846, %v5880
    %v5889 = vsub.f32 %v5847, %v5881
    %v5890 = vsub.f32 %v5848, %v5882
    %v5891 = vsub.f32 %v5849, %v5883
    %v5892 = vmul.f32 %v5884, %v5884
    %v5893 = vmul.f32 %v5885, %v5885
    %v5894 = vmul.f32 %v5886, %v5886
    %v5895 = vmul.f32 %v5887, %v5887
    %v5896 = vmul.f32 %v5888, %v5888
    %v5897 = vmul.f32 %v5889, %v5889
    %v5898 = vmul.f32 %v5890, %v5890
    %v5899 = vmul.f32 %v5891, %v5891
    %v5900 = vsel %vm183, %v5892, 0.0
    %5901 = vadd.xlane.f32.xlu0 %v5900
    %v5902 = vpop.xlane.xlu0 %5901
    %v5903 = vsel %vm183, %v5893, 0.0
    %5904 = vadd.xlane.f32.xlu0 %v5903
    %v5905 = vpop.xlane.xlu0 %5904
    %v5906 = vsel %vm183, %v5894, 0.0
    %5907 = vadd.xlane.f32.xlu0 %v5906
    %v5908 = vpop.xlane.xlu0 %5907
    %v5909 = vsel %vm183, %v5895, 0.0
    %5910 = vadd.xlane.f32.xlu0 %v5909
    %v5911 = vpop.xlane.xlu0 %5910
    %v5912 = vsel %vm183, %v5896, 0.0
    %5913 = vadd.xlane.f32.xlu0 %v5912
    %v5914 = vpop.xlane.xlu0 %5913
    %v5915 = vsel %vm183, %v5897, 0.0
    %5916 = vadd.xlane.f32.xlu0 %v5915
    %v5917 = vpop.xlane.xlu0 %5916
    %v5918 = vsel %vm183, %v5898, 0.0
    %5919 = vadd.xlane.f32.xlu0 %v5918
    %v5920 = vpop.xlane.xlu0 %5919
    %v5921 = vsel %vm183, %v5899, 0.0
    %5922 = vadd.xlane.f32.xlu0 %v5921
    %v5923 = vpop.xlane.xlu0 %5922
    %v5924 = vmul.f32 %v5902, %v1818
    %v5925 = vmul.f32 %v5905, %v1818
    %v5926 = vmul.f32 %v5908, %v1818
    %v5927 = vmul.f32 %v5911, %v1818
    %v5928 = vmul.f32 %v5914, %v1818
    %v5929 = vmul.f32 %v5917, %v1818
    %v5930 = vmul.f32 %v5920, %v1818
    %v5931 = vmul.f32 %v5923, %v1818
    %v5932 = vadd.f32 %v5924, 1e-05
    %v5933 = vadd.f32 %v5925, 1e-05
    %v5934 = vadd.f32 %v5926, 1e-05
    %v5935 = vadd.f32 %v5927, 1e-05
    %v5936 = vadd.f32 %v5928, 1e-05
    %v5937 = vadd.f32 %v5929, 1e-05
    %v5938 = vadd.f32 %v5930, 1e-05
    %v5939 = vadd.f32 %v5931, 1e-05
    %v5940 = vrsqrt.pop %v5932
    %v5941 = vrsqrt.pop %v5933
    %v5942 = vrsqrt.pop %v5934
    %v5943 = vrsqrt.pop %v5935
    %v5944 = vrsqrt.pop %v5936
    %v5945 = vrsqrt.pop %v5937
    %v5946 = vrsqrt.pop %v5938
    %v5947 = vrsqrt.pop %v5939
    %v5948 = vmul.f32 %v5884, %v5940
    %v5949 = vmul.f32 %v5885, %v5941
    %v5950 = vmul.f32 %v5886, %v5942
    %v5951 = vmul.f32 %v5887, %v5943
    %v5952 = vmul.f32 %v5888, %v5944
    %v5953 = vmul.f32 %v5889, %v5945
    %v5954 = vmul.f32 %v5890, %v5946
    %v5955 = vmul.f32 %v5891, %v5947
    %v5956 = vlaneseq
    %v5957 = vshrl.u32 %v5956, 7
    %v5958 = vsub.s32 0, %v5957
    %v5959 = vrot.slane %v5850, %v5958
    %v5960 = vmul.f32 %v5948, %v5959
    %v5961 = vmul.f32 %v5949, %v5959
    %v5962 = vmul.f32 %v5950, %v5959
    %v5963 = vmul.f32 %v5951, %v5959
    %v5964 = vmul.f32 %v5952, %v5959
    %v5965 = vmul.f32 %v5953, %v5959
    %v5966 = vmul.f32 %v5954, %v5959
    %v5967 = vmul.f32 %v5955, %v5959
    %v5968 = vlaneseq
    %v5969 = vshrl.u32 %v5968, 7
    %v5970 = vsub.s32 0, %v5969
    %v5971 = vrot.slane %v5851, %v5970
    %v5972 = vadd.f32 %v5960, %v5971
    %v5973 = vadd.f32 %v5961, %v5971
    %v5974 = vadd.f32 %v5962, %v5971
    %v5975 = vadd.f32 %v5963, %v5971
    %v5976 = vadd.f32 %v5964, %v5971
    %v5977 = vadd.f32 %v5965, %v5971
    %v5978 = vadd.f32 %v5966, %v5971
    %v5979 = vadd.f32 %v5967, %v5971
    %5980 = vst.msk [vmem:[#allocation16] sm:$0xff] %vm183, %v5972
    %5981 = vst.msk [vmem:[#allocation16 + $0x8] sm:$0xff] %vm183, %v5973
    %5982 = vst.msk [vmem:[#allocation16 + $0x10] sm:$0xff] %vm183, %v5974
    %5983 = vst.msk [vmem:[#allocation16 + $0x18] sm:$0xff] %vm183, %v5975
    %5984 = vst.msk [vmem:[#allocation16 + $0x20] sm:$0xff] %vm183, %v5976
    %5985 = vst.msk [vmem:[#allocation16 + $0x28] sm:$0xff] %vm183, %v5977
    %5986 = vst.msk [vmem:[#allocation16 + $0x30] sm:$0xff] %vm183, %v5978
    %5987 = vst.msk [vmem:[#allocation16 + $0x38] sm:$0xff] %vm183, %v5979
    // Predicated region
    $region102: #{pid_grounded_reasoning_forward.1} parent=1 // pred_check
      _
    $region103: #{pid_grounded_reasoning_forward.1} parent=1 // pred_check_branch
      %5989 = sbr.rel (0) target = $region105
    $region104: #{pid_grounded_reasoning_forward.1} parent=1 // pred_region
      %s5991 = ssub.s32 1024, 1024
      %5992 = vsyncadd [#allocation4], %s5991
      %s5993 = sshll.u32 [#allocation16], 4
      %s5994 = int_to_ptr.vmem [resolvable:$true] %s5993
      %5999 = dma.vmem_to_hbm [thread:$0]  %s5994, 1024, %s17, [#allocation4], 128, 128, 8
    $region105: #{pid_grounded_reasoning_forward.1} parent=1 // pred_fallthru
      _
    // Predicated region
    $region106: #{pid_grounded_reasoning_forward.1} parent=1 // pred_check
      _
    $region107: #{pid_grounded_reasoning_forward.1} parent=1 // pred_check_branch
      %6001 = sbr.rel (0) target = $region109
    $region108: #{pid_grounded_reasoning_forward.1} parent=1 // pred_region
      _
    $region109: #{pid_grounded_reasoning_forward.1} parent=1 // pred_fallthru
      _
    // Predicated region
    $region110: #{pid_grounded_reasoning_forward.1} parent=1 // pred_check
      _
    $region111: #{pid_grounded_reasoning_forward.1} parent=1 // pred_check_branch
      %6003 = sbr.rel (0) target = $region113
    $region112: #{pid_grounded_reasoning_forward.1} parent=1 // pred_region
      %6004 = dma.done [#allocation4], 1024
    $region113: #{pid_grounded_reasoning_forward.1} parent=1 // pred_fallthru
      _
    // Predicated region
    $region114: #{pid_grounded_reasoning_forward.1} parent=1 // pred_check
      _
    $region115: #{pid_grounded_reasoning_forward.1} parent=1 // pred_check_branch
      %6006 = sbr.rel (0) target = $region117
    $region116: #{pid_grounded_reasoning_forward.1} parent=1 // pred_region
      _
    $region117: #{pid_grounded_reasoning_forward.1} parent=1 // pred_fallthru
      _
    %6007 = vsyncpa [#allocation3], 1
    %6008 = vsyncpa [#allocation6], 1
    %6009 = vsyncpa [#allocation9], 1
    %6010 = vsyncpa [#allocation12], 1
    %6011 = vsyncpa [#allocation15], 1
    %6012 = vsyncpa [#allocation4], 1

</llo_original>
